<compile_context>
chip_gen: v7x
topology: tpu7x:2x2x1
jax: 0.10.0
libtpu: 0.0.40
codegen_flags: <defaults>
</compile_context>

<pallas_src>
import functools

import jax
import jax.numpy as jnp
from jax.experimental import pallas as pl
from jax.experimental.pallas import tpu as pltpu

LANES = 128          # every matmul N dim is zero-padded to this (lane-dense)
CONV_TM = 512        # max patch-row tile for the conv kernels (multiple of 16)
FC_TM = 256          # max batch-row tile for the FC stack (multiple of 16)


def _round_up(x, m):
    return -(-x // m) * m


def _vmem_limit(*tile_bytes):
    """Explicit scoped-VMEM limit: double-buffered tiles + headroom, clamped
    to a range that is safe on v5e (16 MiB default / 128 MiB physical),
    v6e (32 / 128) and v7x (32 / 64)."""
    need = 2 * sum(tile_bytes) + (4 << 20)
    return int(min(max(need, 16 << 20), 32 << 20))


# ----------------------------- Pallas kernels ------------------------------

def _conv_relu_pool_kernel(p_ref, w_ref, b_ref, o_ref):
    """Fused conv (im2col matmul) + bias + ReLU + 2x2/2 max-pool, one M-tile.

    p_ref: (4, TM, K) bf16 patch rows, one slab per pool-window corner
    w_ref: (K, 128)   bf16 weights (N zero-padded to 128 lanes)
    b_ref: (1, 128)   f32 bias     (zero-padded)
    o_ref: (TM, 128)  bf16 pooled output rows, in (b, ph, pw) order
    """
    w = w_ref[...]
    b = b_ref[...]

    def corner(c):
        acc = jnp.dot(p_ref[c], w, preferred_element_type=jnp.float32)
        return jnp.maximum(acc + b, 0.0)            # bias + ReLU in f32

    # Running max over the 4 pool corners: only ~2 f32 (TM,128) tiles live.
    y = corner(0)
    for c in (1, 2, 3):
        y = jnp.maximum(y, corner(c))
    o_ref[...] = y.astype(o_ref.dtype)


def _fc_stack_kernel(x_ref, w1_ref, b1_ref, w2_ref, b2_ref, w3_ref, b3_ref,
                     o_ref):
    """o = relu(relu(x@w1+b1)@w2+b2)@w3+b3 for one tile of batch rows."""
    def dot(a, w_ref):
        return jnp.dot(a.astype(jnp.bfloat16), w_ref[...],
                       preferred_element_type=jnp.float32)

    h = jnp.maximum(dot(x_ref[...], w1_ref) + b1_ref[...], 0.0)
    h = jnp.maximum(dot(h, w2_ref) + b2_ref[...], 0.0)
    o_ref[...] = (dot(h, w3_ref) + b3_ref[...]).astype(o_ref.dtype)


# ----------------------------- Pallas wrappers ------------------------------

def conv_relu_pool(patches, w, b, *, max_tm=CONV_TM):
    """patches: (4, M, K) bf16; w: (K, 128) bf16; b: (1, 128) -> (M, 128) bf16."""
    _, M, K = patches.shape
    N = w.shape[1]
    tm = min(max_tm, _round_up(M, 16))
    mp = _round_up(M, tm)
    if mp != M:
        patches = jnp.pad(patches, ((0, 0), (0, mp - M), (0, 0)))

    out = pl.pallas_call(
        _conv_relu_pool_kernel,
        out_shape=jax.ShapeDtypeStruct((mp, N), jnp.bfloat16),
        grid=(mp // tm,),
        in_specs=[
            pl.BlockSpec((4, tm, K), lambda i: (0, i, 0)),
            pl.BlockSpec((K, N), lambda i: (0, 0)),   # resident across grid
            pl.BlockSpec((1, N), lambda i: (0, 0)),
        ],
        out_specs=pl.BlockSpec((tm, N), lambda i: (i, 0)),
        compiler_params=pltpu.CompilerParams(
            dimension_semantics=("parallel",),
            vmem_limit_bytes=_vmem_limit(
                4 * tm * K * 2,        # patch tile (bf16)
                tm * N * 2,            # output tile (bf16)
                K * N * 2 + N * 4,     # weights + bias
                2 * tm * N * 4,        # f32 running-max temporaries
            ),
        ),
    )(patches, w, b)
    return out[:M]


def fc_stack(x, w1, b1, w2, b2, w3, b3, *, max_tm=FC_TM):
    """x: (B, 400) bf16; weights pre-padded to 128 lanes -> (B, 128) f32."""
    M, K = x.shape
    N = w3.shape[1]
    tm = min(max_tm, _round_up(M, 16))
    mp = _round_up(M, tm)
    if mp != M:
        x = jnp.pad(x, ((0, mp - M), (0, 0)))

    out = pl.pallas_call(
        _fc_stack_kernel,
        out_shape=jax.ShapeDtypeStruct((mp, N), jnp.float32),
        grid=(mp // tm,),
        in_specs=[
            pl.BlockSpec((tm, K), lambda i: (i, 0)),
            pl.BlockSpec(w1.shape, lambda i: (0, 0)),   # weights/bias resident
            pl.BlockSpec(b1.shape, lambda i: (0, 0)),
            pl.BlockSpec(w2.shape, lambda i: (0, 0)),
            pl.BlockSpec(b2.shape, lambda i: (0, 0)),
            pl.BlockSpec(w3.shape, lambda i: (0, 0)),
            pl.BlockSpec(b3.shape, lambda i: (0, 0)),
        ],
        out_specs=pl.BlockSpec((tm, N), lambda i: (i, 0)),
        compiler_params=pltpu.CompilerParams(
            dimension_semantics=("parallel",),
            vmem_limit_bytes=_vmem_limit(
                tm * K * 2,                       # x tile (bf16)
                tm * N * 4,                       # output tile (f32)
                (K * N + 2 * N * N) * 2 + 3 * N * 4,   # weights + biases
                3 * tm * N * 4,                   # f32 intermediates
            ),
        ),
    )(x, w1, b1, w2, b2, w3, b3)
    return out[:M]


# ------------------------- im2col (layout plumbing) --------------------------

def _pool_corner_patches(x, k):
    """NHWC -> (4, B*PH*PW, k*k*C) bf16 patch matrices grouped by pool corner.

    Corner c=(dy,dx) row (b,ph,pw) holds the conv patch for output position
    (2*ph+dy, 2*pw+dx), so the 2x2 max-pool becomes a 4-way elementwise max
    inside the conv kernel.  Done entirely in bf16, slicing each corner's
    columns directly from x with step-2 slices (no full f32 (B,OH,OW,k*k*C)
    intermediate and no second set of strided HBM copies).
    """
    x = x.astype(jnp.bfloat16)
    B, H, W, C = x.shape
    OH, OW = H - k + 1, W - k + 1
    PH, PW = OH // 2, OW // 2
    corners = []
    for dy in (0, 1):
        for dx in (0, 1):
            cols = [
                x[:, dy + i: dy + i + 2 * PH - 1: 2,
                     dx + j: dx + j + 2 * PW - 1: 2, :]
                for i in range(k) for j in range(k)
            ]
            corners.append(
                jnp.concatenate(cols, axis=-1).reshape(B * PH * PW, k * k * C))
    return jnp.stack(corners, axis=0), (B, PH, PW)


# ------------------------------- Full forward -------------------------------

def cnn_cifar_forward(x_nchw, pp, *, num_classes=10):
    """Equivalent of CNNCifar.forward; x_nchw: (B, 3, 32, 32) float32.
    `pp` must come from pack_params() (pre-padded, pre-permuted weights)."""
    B = x_nchw.shape[0]
    x = jnp.transpose(x_nchw, (0, 2, 3, 1))                     # NCHW -> NHWC

    pat1, (_, PH1, PW1) = _pool_corner_patches(x, 5)            # (4,B*196,75)
    y1 = conv_relu_pool(pat1, pp["conv1_w"], pp["conv1_b"])     # (B*196,128)
    y1 = y1.reshape(B, PH1, PW1, LANES)[..., :6]                # (B,14,14,6)

    pat2, (_, PH2, PW2) = _pool_corner_patches(y1, 5)           # (4,B*25,150)
    y2 = conv_relu_pool(pat2, pp["conv2_w"], pp["conv2_b"])     # (B*25,128)

    # NHWC flatten; fc1 weight columns were pre-permuted to match this order.
    x_fc = y2.reshape(B, PH2, PW2, LANES)[..., :16].reshape(B, 16 * 5 * 5)
    out = fc_stack(x_fc.astype(jnp.bfloat16),
                   pp["fc1_w"], pp["fc1_b"], pp["fc2_w"], pp["fc2_b"],
                   pp["fc3_w"], pp["fc3_b"])                    # (B, 128)
    return out[:, :num_classes]


# --------------------------- One-time weight repack --------------------------

def pack_params(p):
    """Fold all layout transforms/padding into the stored weights (runs once,
    outside jit): conv OIHW -> (k*k*cin, 128); fc -> (K, 128) with fc1's
    columns permuted from PyTorch's (C,H,W) flatten to our NHWC flatten."""
    def pad_nk(a, rows, cols):
        return jnp.pad(a, ((0, rows - a.shape[0]), (0, cols - a.shape[1])))

    def pad_bias(b):
        return jnp.pad(b, (0, LANES - b.shape[0])).reshape(1, LANES)

    def conv_w(w):
        cout, cin, k, _ = w.shape
        m = jnp.transpose(w, (2, 3, 1, 0)).reshape(k * k * cin, cout)
        return pad_nk(m, k * k * cin, LANES).astype(jnp.bfloat16)

    f1 = p["fc1_w"].reshape(120, 16, 5, 5).transpose(0, 2, 3, 1)
    f1 = pad_nk(f1.reshape(120, 400).T, 400, LANES).astype(jnp.bfloat16)
    f2 = pad_nk(p["fc2_w"].T, LANES, LANES).astype(jnp.bfloat16)
    f3 = pad_nk(p["fc3_w"].T, LANES, LANES).astype(jnp.bfloat16)

    return {
        "conv1_w": conv_w(p["conv1_w"]), "conv1_b": pad_bias(p["conv1_b"]),
        "conv2_w": conv_w(p["conv2_w"]), "conv2_b": pad_bias(p["conv2_b"]),
        "fc1_w": f1, "fc1_b": pad_bias(p["fc1_b"]),
        "fc2_w": f2, "fc2_b": pad_bias(p["fc2_b"]),
        "fc3_w": f3, "fc3_b": pad_bias(p["fc3_b"]),
    }


# ------------------------------ Param init ----------------------------------

def init_params(key, num_classes=10):
    ks = jax.random.split(key, 10)

    def u(k, shape, fan_in):
        bound = 1.0 / (fan_in ** 0.5)
        return jax.random.uniform(k, shape, jnp.float32, -bound, bound)

    return {
        "conv1_w": u(ks[0], (6, 3, 5, 5), 3 * 5 * 5),
        "conv1_b": u(ks[1], (6,), 3 * 5 * 5),
        "conv2_w": u(ks[2], (16, 6, 5, 5), 6 * 5 * 5),
        "conv2_b": u(ks[3], (16,), 6 * 5 * 5),
        "fc1_w": u(ks[4], (120, 400), 400),
        "fc1_b": u(ks[5], (120,), 400),
        "fc2_w": u(ks[6], (84, 120), 120),
        "fc2_b": u(ks[7], (84,), 120),
        "fc3_w": u(ks[8], (num_classes, 84), 84),
        "fc3_b": u(ks[9], (num_classes,), 84),
    }


# --------------------------- Pure-JAX reference ------------------------------

def reference_forward(x, p):
    def conv(x, w, b):
        dn = jax.lax.conv_dimension_numbers(x.shape, w.shape,
                                            ("NCHW", "OIHW", "NCHW"))
        y = jax.lax.conv_general_dilated(x, w, (1, 1), "VALID",
                                         dimension_numbers=dn)
        return jnp.maximum(y + b[None, :, None, None], 0.0)

    def pool(x):
        return jax.lax.reduce_window(x, -jnp.inf, jax.lax.max,
                                     (1, 1, 2, 2), (1, 1, 2, 2), "VALID")

    y = pool(conv(x, p["conv1_w"], p["conv1_b"]))
    y = pool(conv(y, p["conv2_w"], p["conv2_b"]))
    y = y.reshape(y.shape[0], -1)
    y = jnp.maximum(jnp.dot(y, p["fc1_w"].T) + p["fc1_b"], 0.0)
    y = jnp.maximum(jnp.dot(y, p["fc2_w"].T) + p["fc2_b"], 0.0)
    return jnp.dot(y, p["fc3_w"].T) + p["fc3_b"]


# ---------------------------------- Main -------------------------------------

if __name__ == "__main__":
    key = jax.random.PRNGKey(0)
    kx, kp = jax.random.split(key)
    num_classes = 10

    # CIFAR geometry is required by the 16*5*5 flatten: batch=2, 3x32x32.
    x = jax.random.normal(kx, (2, 3, 32, 32), jnp.float32)
    params = init_params(kp, num_classes)
    packed = pack_params(params)          # one-time repack, outside jit

    fwd = jax.jit(functools.partial(cnn_cifar_forward,
                                    num_classes=num_classes))
    out = jax.block_until_ready(fwd(x, packed))
    assert out.shape == (2, num_classes), out.shape

    ref = reference_forward(x, params)
    err = float(jnp.max(jnp.abs(out - ref)))
    if not jnp.allclose(out, ref, atol=3e-2, rtol=3e-2):
        raise AssertionError(f"mismatch vs reference: max abs err {err}")

    print("KERNEL_OK")
</pallas_src>

<mosaic_0001>
module attributes {stable_mosaic.version = 11 : i64} {
  func.func @_conv_relu_pool_kernel(%arg0: i32, %arg1: memref<4x400x75xbf16, #tpu.memory_space<vmem>>, %arg2: memref<75x128xbf16, #tpu.memory_space<vmem>>, %arg3: memref<1x128xf32, #tpu.memory_space<vmem>>, %arg4: memref<400x128xbf16, #tpu.memory_space<vmem>>) attributes {dimension_semantics = [#tpu.dimension_semantics<parallel>], iteration_bounds = array<i64: 1>, scalar_prefetch = 0 : i64, scratch_operands = 0 : i64, tpu.core_type = #tpu.core_type<tc>, window_params = [{transform_indices = @transform_0, window_bounds = array<i64: 4, 400, 75>}, {pipeline_mode = #tpu.pipeline_mode<synchronous>, transform_indices = @transform_1, window_bounds = array<i64: 75, 128>}, {pipeline_mode = #tpu.pipeline_mode<synchronous>, transform_indices = @transform_2, window_bounds = array<i64: 1, 128>}, {transform_indices = @transform_3, window_bounds = array<i64: 400, 128>}]} {
    %c0 = arith.constant 0 : index
    %c0_0 = arith.constant 0 : index
    %0 = vector.load %arg2[%c0, %c0_0] : memref<75x128xbf16, #tpu.memory_space<vmem>>, vector<75x128xbf16>
    %c0_1 = arith.constant 0 : index
    %c0_2 = arith.constant 0 : index
    %1 = vector.load %arg3[%c0_1, %c0_2] : memref<1x128xf32, #tpu.memory_space<vmem>>, vector<1x128xf32>
    %c0_3 = arith.constant 0 : index
    %c0_4 = arith.constant 0 : index
    %c0_5 = arith.constant 0 : index
    %2 = vector.load %arg1[%c0_3, %c0_4, %c0_5] : memref<4x400x75xbf16, #tpu.memory_space<vmem>>, vector<1x400x75xbf16>
    %3 = vector.shape_cast %2 : vector<1x400x75xbf16> to vector<400x75xbf16>
    %cst = arith.constant dense<0.000000e+00> : vector<400x128xf32>
    %4 = tpu.matmul %3, %0, %cst {dimension_numbers = #tpu.dot_dimension_numbers<[1], [0], [0], [1], [0, 0, 1, 1], [], []>} : vector<400x75xbf16>, vector<75x128xbf16>, vector<400x128xf32> -> vector<400x128xf32>
    %5 = vector.broadcast %1 : vector<1x128xf32> to vector<400x128xf32>
    %6 = arith.addf %4, %5 : vector<400x128xf32>
    %cst_6 = arith.constant 0.000000e+00 : f32
    %7 = vector.broadcast %cst_6 : f32 to vector<400x128xf32>
    %8 = arith.maximumf %6, %7 : vector<400x128xf32>
    %c1 = arith.constant 1 : index
    %c0_7 = arith.constant 0 : index
    %c0_8 = arith.constant 0 : index
    %9 = vector.load %arg1[%c1, %c0_7, %c0_8] : memref<4x400x75xbf16, #tpu.memory_space<vmem>>, vector<1x400x75xbf16>
    %10 = vector.shape_cast %9 : vector<1x400x75xbf16> to vector<400x75xbf16>
    %cst_9 = arith.constant dense<0.000000e+00> : vector<400x128xf32>
    %11 = tpu.matmul %10, %0, %cst_9 {dimension_numbers = #tpu.dot_dimension_numbers<[1], [0], [0], [1], [0, 0, 1, 1], [], []>} : vector<400x75xbf16>, vector<75x128xbf16>, vector<400x128xf32> -> vector<400x128xf32>
    %12 = vector.broadcast %1 : vector<1x128xf32> to vector<400x128xf32>
    %13 = arith.addf %11, %12 : vector<400x128xf32>
    %cst_10 = arith.constant 0.000000e+00 : f32
    %14 = vector.broadcast %cst_10 : f32 to vector<400x128xf32>
    %15 = arith.maximumf %13, %14 : vector<400x128xf32>
    %16 = arith.maximumf %8, %15 : vector<400x128xf32>
    %c2 = arith.constant 2 : index
    %c0_11 = arith.constant 0 : index
    %c0_12 = arith.constant 0 : index
    %17 = vector.load %arg1[%c2, %c0_11, %c0_12] : memref<4x400x75xbf16, #tpu.memory_space<vmem>>, vector<1x400x75xbf16>
    %18 = vector.shape_cast %17 : vector<1x400x75xbf16> to vector<400x75xbf16>
    %cst_13 = arith.constant dense<0.000000e+00> : vector<400x128xf32>
    %19 = tpu.matmul %18, %0, %cst_13 {dimension_numbers = #tpu.dot_dimension_numbers<[1], [0], [0], [1], [0, 0, 1, 1], [], []>} : vector<400x75xbf16>, vector<75x128xbf16>, vector<400x128xf32> -> vector<400x128xf32>
    %20 = vector.broadcast %1 : vector<1x128xf32> to vector<400x128xf32>
    %21 = arith.addf %19, %20 : vector<400x128xf32>
    %cst_14 = arith.constant 0.000000e+00 : f32
    %22 = vector.broadcast %cst_14 : f32 to vector<400x128xf32>
    %23 = arith.maximumf %21, %22 : vector<400x128xf32>
    %24 = arith.maximumf %16, %23 : vector<400x128xf32>
    %c3 = arith.constant 3 : index
    %c0_15 = arith.constant 0 : index
    %c0_16 = arith.constant 0 : index
    %25 = vector.load %arg1[%c3, %c0_15, %c0_16] : memref<4x400x75xbf16, #tpu.memory_space<vmem>>, vector<1x400x75xbf16>
    %26 = vector.shape_cast %25 : vector<1x400x75xbf16> to vector<400x75xbf16>
    %cst_17 = arith.constant dense<0.000000e+00> : vector<400x128xf32>
    %27 = tpu.matmul %26, %0, %cst_17 {dimension_numbers = #tpu.dot_dimension_numbers<[1], [0], [0], [1], [0, 0, 1, 1], [], []>} : vector<400x75xbf16>, vector<75x128xbf16>, vector<400x128xf32> -> vector<400x128xf32>
    %28 = vector.broadcast %1 : vector<1x128xf32> to vector<400x128xf32>
    %29 = arith.addf %27, %28 : vector<400x128xf32>
    %cst_18 = arith.constant 0.000000e+00 : f32
    %30 = vector.broadcast %cst_18 : f32 to vector<400x128xf32>
    %31 = arith.maximumf %29, %30 : vector<400x128xf32>
    %32 = arith.maximumf %24, %31 : vector<400x128xf32>
    %33 = arith.truncf %32 : vector<400x128xf32> to vector<400x128xbf16>
    %c0_19 = arith.constant 0 : index
    %c0_20 = arith.constant 0 : index
    %34 = vector.load %arg4[%c0_19, %c0_20] : memref<400x128xbf16, #tpu.memory_space<vmem>>, vector<400x128xbf16>
    tpu.vector_store %arg4[%c0_19, %c0_20], %33 {strides = array<i32>} : memref<400x128xbf16, #tpu.memory_space<vmem>>, vector<400x128xbf16>,
    return
  }
  func.func @transform_0(%arg0: i32) -> (i32, i32, i32) {
    %c0_i32 = arith.constant 0 : i32
    %c0_i32_0 = arith.constant 0 : i32
    %c0_i32_1 = arith.constant 0 : i32
    return %c0_i32, %arg0, %c0_i32_0 : i32, i32, i32
  }
  func.func @transform_1(%arg0: i32) -> (i32, i32) {
    %c0_i32 = arith.constant 0 : i32
    %c0_i32_0 = arith.constant 0 : i32
    %c0_i32_1 = arith.constant 0 : i32
    return %c0_i32, %c0_i32_0 : i32, i32
  }
  func.func @transform_2(%arg0: i32) -> (i32, i32) {
    %c0_i32 = arith.constant 0 : i32
    %c0_i32_0 = arith.constant 0 : i32
    %c0_i32_1 = arith.constant 0 : i32
    return %c0_i32, %c0_i32_0 : i32, i32
  }
  func.func @transform_3(%arg0: i32) -> (i32, i32) {
    %c0_i32 = arith.constant 0 : i32
    %c0_i32_0 = arith.constant 0 : i32
    return %arg0, %c0_i32 : i32, i32
  }
}

module attributes {stable_mosaic.version = 11 : i64} {
  func.func @_conv_relu_pool_kernel(%arg0: i32, %arg1: memref<4x64x150xbf16, #tpu.memory_space<vmem>>, %arg2: memref<150x128xbf16, #tpu.memory_space<vmem>>, %arg3: memref<1x128xf32, #tpu.memory_space<vmem>>, %arg4: memref<64x128xbf16, #tpu.memory_space<vmem>>) attributes {dimension_semantics = [#tpu.dimension_semantics<parallel>], iteration_bounds = array<i64: 1>, scalar_prefetch = 0 : i64, scratch_operands = 0 : i64, tpu.core_type = #tpu.core_type<tc>, window_params = [{transform_indices = @transform_0, window_bounds = array<i64: 4, 64, 150>}, {pipeline_mode = #tpu.pipeline_mode<synchronous>, transform_indices = @transform_1, window_bounds = array<i64: 150, 128>}, {pipeline_mode = #tpu.pipeline_mode<synchronous>, transform_indices = @transform_2, window_bounds = array<i64: 1, 128>}, {transform_indices = @transform_3, window_bounds = array<i64: 64, 128>}]} {
    %c0 = arith.constant 0 : index
    %c0_0 = arith.constant 0 : index
    %0 = vector.load %arg2[%c0, %c0_0] : memref<150x128xbf16, #tpu.memory_space<vmem>>, vector<150x128xbf16>
    %c0_1 = arith.constant 0 : index
    %c0_2 = arith.constant 0 : index
    %1 = vector.load %arg3[%c0_1, %c0_2] : memref<1x128xf32, #tpu.memory_space<vmem>>, vector<1x128xf32>
    %c0_3 = arith.constant 0 : index
    %c0_4 = arith.constant 0 : index
    %c0_5 = arith.constant 0 : index
    %2 = vector.load %arg1[%c0_3, %c0_4, %c0_5] : memref<4x64x150xbf16, #tpu.memory_space<vmem>>, vector<1x64x150xbf16>
    %3 = vector.shape_cast %2 : vector<1x64x150xbf16> to vector<64x150xbf16>
    %cst = arith.constant dense<0.000000e+00> : vector<64x128xf32>
    %4 = tpu.matmul %3, %0, %cst {dimension_numbers = #tpu.dot_dimension_numbers<[1], [0], [0], [1], [0, 0, 1, 1], [], []>} : vector<64x150xbf16>, vector<150x128xbf16>, vector<64x128xf32> -> vector<64x128xf32>
    %5 = vector.broadcast %1 : vector<1x128xf32> to vector<64x128xf32>
    %6 = arith.addf %4, %5 : vector<64x128xf32>
    %cst_6 = arith.constant 0.000000e+00 : f32
    %7 = vector.broadcast %cst_6 : f32 to vector<64x128xf32>
    %8 = arith.maximumf %6, %7 : vector<64x128xf32>
    %c1 = arith.constant 1 : index
    %c0_7 = arith.constant 0 : index
    %c0_8 = arith.constant 0 : index
    %9 = vector.load %arg1[%c1, %c0_7, %c0_8] : memref<4x64x150xbf16, #tpu.memory_space<vmem>>, vector<1x64x150xbf16>
    %10 = vector.shape_cast %9 : vector<1x64x150xbf16> to vector<64x150xbf16>
    %cst_9 = arith.constant dense<0.000000e+00> : vector<64x128xf32>
    %11 = tpu.matmul %10, %0, %cst_9 {dimension_numbers = #tpu.dot_dimension_numbers<[1], [0], [0], [1], [0, 0, 1, 1], [], []>} : vector<64x150xbf16>, vector<150x128xbf16>, vector<64x128xf32> -> vector<64x128xf32>
    %12 = vector.broadcast %1 : vector<1x128xf32> to vector<64x128xf32>
    %13 = arith.addf %11, %12 : vector<64x128xf32>
    %cst_10 = arith.constant 0.000000e+00 : f32
    %14 = vector.broadcast %cst_10 : f32 to vector<64x128xf32>
    %15 = arith.maximumf %13, %14 : vector<64x128xf32>
    %16 = arith.maximumf %8, %15 : vector<64x128xf32>
    %c2 = arith.constant 2 : index
    %c0_11 = arith.constant 0 : index
    %c0_12 = arith.constant 0 : index
    %17 = vector.load %arg1[%c2, %c0_11, %c0_12] : memref<4x64x150xbf16, #tpu.memory_space<vmem>>, vector<1x64x150xbf16>
    %18 = vector.shape_cast %17 : vector<1x64x150xbf16> to vector<64x150xbf16>
    %cst_13 = arith.constant dense<0.000000e+00> : vector<64x128xf32>
    %19 = tpu.matmul %18, %0, %cst_13 {dimension_numbers = #tpu.dot_dimension_numbers<[1], [0], [0], [1], [0, 0, 1, 1], [], []>} : vector<64x150xbf16>, vector<150x128xbf16>, vector<64x128xf32> -> vector<64x128xf32>
    %20 = vector.broadcast %1 : vector<1x128xf32> to vector<64x128xf32>
    %21 = arith.addf %19, %20 : vector<64x128xf32>
    %cst_14 = arith.constant 0.000000e+00 : f32
    %22 = vector.broadcast %cst_14 : f32 to vector<64x128xf32>
    %23 = arith.maximumf %21, %22 : vector<64x128xf32>
    %24 = arith.maximumf %16, %23 : vector<64x128xf32>
    %c3 = arith.constant 3 : index
    %c0_15 = arith.constant 0 : index
    %c0_16 = arith.constant 0 : index
    %25 = vector.load %arg1[%c3, %c0_15, %c0_16] : memref<4x64x150xbf16, #tpu.memory_space<vmem>>, vector<1x64x150xbf16>
    %26 = vector.shape_cast %25 : vector<1x64x150xbf16> to vector<64x150xbf16>
    %cst_17 = arith.constant dense<0.000000e+00> : vector<64x128xf32>
    %27 = tpu.matmul %26, %0, %cst_17 {dimension_numbers = #tpu.dot_dimension_numbers<[1], [0], [0], [1], [0, 0, 1, 1], [], []>} : vector<64x150xbf16>, vector<150x128xbf16>, vector<64x128xf32> -> vector<64x128xf32>
    %28 = vector.broadcast %1 : vector<1x128xf32> to vector<64x128xf32>
    %29 = arith.addf %27, %28 : vector<64x128xf32>
    %cst_18 = arith.constant 0.000000e+00 : f32
    %30 = vector.broadcast %cst_18 : f32 to vector<64x128xf32>
    %31 = arith.maximumf %29, %30 : vector<64x128xf32>
    %32 = arith.maximumf %24, %31 : vector<64x128xf32>
    %33 = arith.truncf %32 : vector<64x128xf32> to vector<64x128xbf16>
    %c0_19 = arith.constant 0 : index
    %c0_20 = arith.constant 0 : index
    %34 = vector.load %arg4[%c0_19, %c0_20] : memref<64x128xbf16, #tpu.memory_space<vmem>>, vector<64x128xbf16>
    tpu.vector_store %arg4[%c0_19, %c0_20], %33 {strides = array<i32>} : memref<64x128xbf16, #tpu.memory_space<vmem>>, vector<64x128xbf16>,
    return
  }
  func.func @transform_0(%arg0: i32) -> (i32, i32, i32) {
    %c0_i32 = arith.constant 0 : i32
    %c0_i32_0 = arith.constant 0 : i32
    %c0_i32_1 = arith.constant 0 : i32
    return %c0_i32, %arg0, %c0_i32_0 : i32, i32, i32
  }
  func.func @transform_1(%arg0: i32) -> (i32, i32) {
    %c0_i32 = arith.constant 0 : i32
    %c0_i32_0 = arith.constant 0 : i32
    %c0_i32_1 = arith.constant 0 : i32
    return %c0_i32, %c0_i32_0 : i32, i32
  }
  func.func @transform_2(%arg0: i32) -> (i32, i32) {
    %c0_i32 = arith.constant 0 : i32
    %c0_i32_0 = arith.constant 0 : i32
    %c0_i32_1 = arith.constant 0 : i32
    return %c0_i32, %c0_i32_0 : i32, i32
  }
  func.func @transform_3(%arg0: i32) -> (i32, i32) {
    %c0_i32 = arith.constant 0 : i32
    %c0_i32_0 = arith.constant 0 : i32
    return %arg0, %c0_i32 : i32, i32
  }
}

module attributes {stable_mosaic.version = 11 : i64} {
  func.func @_fc_stack_kernel(%arg0: i32, %arg1: memref<16x400xbf16, #tpu.memory_space<vmem>>, %arg2: memref<400x128xbf16, #tpu.memory_space<vmem>>, %arg3: memref<1x128xf32, #tpu.memory_space<vmem>>, %arg4: memref<128x128xbf16, #tpu.memory_space<vmem>>, %arg5: memref<1x128xf32, #tpu.memory_space<vmem>>, %arg6: memref<128x128xbf16, #tpu.memory_space<vmem>>, %arg7: memref<1x128xf32, #tpu.memory_space<vmem>>, %arg8: memref<16x128xf32, #tpu.memory_space<vmem>>) attributes {dimension_semantics = [#tpu.dimension_semantics<parallel>], iteration_bounds = array<i64: 1>, scalar_prefetch = 0 : i64, scratch_operands = 0 : i64, tpu.core_type = #tpu.core_type<tc>, window_params = [{transform_indices = @transform_0, window_bounds = array<i64: 16, 400>}, {pipeline_mode = #tpu.pipeline_mode<synchronous>, transform_indices = @transform_1, window_bounds = array<i64: 400, 128>}, {pipeline_mode = #tpu.pipeline_mode<synchronous>, transform_indices = @transform_2, window_bounds = array<i64: 1, 128>}, {pipeline_mode = #tpu.pipeline_mode<synchronous>, transform_indices = @transform_3, window_bounds = array<i64: 128, 128>}, {pipeline_mode = #tpu.pipeline_mode<synchronous>, transform_indices = @transform_4, window_bounds = array<i64: 1, 128>}, {pipeline_mode = #tpu.pipeline_mode<synchronous>, transform_indices = @transform_5, window_bounds = array<i64: 128, 128>}, {pipeline_mode = #tpu.pipeline_mode<synchronous>, transform_indices = @transform_6, window_bounds = array<i64: 1, 128>}, {transform_indices = @transform_7, window_bounds = array<i64: 16, 128>}]} {
    %c0 = arith.constant 0 : index
    %c0_0 = arith.constant 0 : index
    %0 = vector.load %arg1[%c0, %c0_0] : memref<16x400xbf16, #tpu.memory_space<vmem>>, vector<16x400xbf16>
    %c0_1 = arith.constant 0 : index
    %c0_2 = arith.constant 0 : index
    %1 = vector.load %arg2[%c0_1, %c0_2] : memref<400x128xbf16, #tpu.memory_space<vmem>>, vector<400x128xbf16>
    %cst = arith.constant dense<0.000000e+00> : vector<16x128xf32>
    %2 = tpu.matmul %0, %1, %cst {dimension_numbers = #tpu.dot_dimension_numbers<[1], [0], [0], [1], [0, 0, 1, 1], [], []>} : vector<16x400xbf16>, vector<400x128xbf16>, vector<16x128xf32> -> vector<16x128xf32>
    %c0_3 = arith.constant 0 : index
    %c0_4 = arith.constant 0 : index
    %3 = vector.load %arg3[%c0_3, %c0_4] : memref<1x128xf32, #tpu.memory_space<vmem>>, vector<1x128xf32>
    %4 = vector.broadcast %3 : vector<1x128xf32> to vector<16x128xf32>
    %5 = arith.addf %2, %4 : vector<16x128xf32>
    %cst_5 = arith.constant 0.000000e+00 : f32
    %6 = vector.broadcast %cst_5 : f32 to vector<16x128xf32>
    %7 = arith.maximumf %5, %6 : vector<16x128xf32>
    %8 = arith.truncf %7 : vector<16x128xf32> to vector<16x128xbf16>
    %c0_6 = arith.constant 0 : index
    %c0_7 = arith.constant 0 : index
    %9 = vector.load %arg4[%c0_6, %c0_7] : memref<128x128xbf16, #tpu.memory_space<vmem>>, vector<128x128xbf16>
    %cst_8 = arith.constant dense<0.000000e+00> : vector<16x128xf32>
    %10 = tpu.matmul %8, %9, %cst_8 {dimension_numbers = #tpu.dot_dimension_numbers<[1], [0], [0], [1], [0, 0, 1, 1], [], []>} : vector<16x128xbf16>, vector<128x128xbf16>, vector<16x128xf32> -> vector<16x128xf32>
    %c0_9 = arith.constant 0 : index
    %c0_10 = arith.constant 0 : index
    %11 = vector.load %arg5[%c0_9, %c0_10] : memref<1x128xf32, #tpu.memory_space<vmem>>, vector<1x128xf32>
    %12 = vector.broadcast %11 : vector<1x128xf32> to vector<16x128xf32>
    %13 = arith.addf %10, %12 : vector<16x128xf32>
    %cst_11 = arith.constant 0.000000e+00 : f32
    %14 = vector.broadcast %cst_11 : f32 to vector<16x128xf32>
    %15 = arith.maximumf %13, %14 : vector<16x128xf32>
    %16 = arith.truncf %15 : vector<16x128xf32> to vector<16x128xbf16>
    %c0_12 = arith.constant 0 : index
    %c0_13 = arith.constant 0 : index
    %17 = vector.load %arg6[%c0_12, %c0_13] : memref<128x128xbf16, #tpu.memory_space<vmem>>, vector<128x128xbf16>
    %cst_14 = arith.constant dense<0.000000e+00> : vector<16x128xf32>
    %18 = tpu.matmul %16, %17, %cst_14 {dimension_numbers = #tpu.dot_dimension_numbers<[1], [0], [0], [1], [0, 0, 1, 1], [], []>} : vector<16x128xbf16>, vector<128x128xbf16>, vector<16x128xf32> -> vector<16x128xf32>
    %c0_15 = arith.constant 0 : index
    %c0_16 = arith.constant 0 : index
    %19 = vector.load %arg7[%c0_15, %c0_16] : memref<1x128xf32, #tpu.memory_space<vmem>>, vector<1x128xf32>
    %20 = vector.broadcast %19 : vector<1x128xf32> to vector<16x128xf32>
    %21 = arith.addf %18, %20 : vector<16x128xf32>
    %c0_17 = arith.constant 0 : index
    %c0_18 = arith.constant 0 : index
    %22 = vector.load %arg8[%c0_17, %c0_18] : memref<16x128xf32, #tpu.memory_space<vmem>>, vector<16x128xf32>
    tpu.vector_store %arg8[%c0_17, %c0_18], %21 {strides = array<i32>} : memref<16x128xf32, #tpu.memory_space<vmem>>, vector<16x128xf32>,
    return
  }
  func.func @transform_0(%arg0: i32) -> (i32, i32) {
    %c0_i32 = arith.constant 0 : i32
    %c0_i32_0 = arith.constant 0 : i32
    return %arg0, %c0_i32 : i32, i32
  }
  func.func @transform_1(%arg0: i32) -> (i32, i32) {
    %c0_i32 = arith.constant 0 : i32
    %c0_i32_0 = arith.constant 0 : i32
    %c0_i32_1 = arith.constant 0 : i32
    return %c0_i32, %c0_i32_0 : i32, i32
  }
  func.func @transform_2(%arg0: i32) -> (i32, i32) {
    %c0_i32 = arith.constant 0 : i32
    %c0_i32_0 = arith.constant 0 : i32
    %c0_i32_1 = arith.constant 0 : i32
    return %c0_i32, %c0_i32_0 : i32, i32
  }
  func.func @transform_3(%arg0: i32) -> (i32, i32) {
    %c0_i32 = arith.constant 0 : i32
    %c0_i32_0 = arith.constant 0 : i32
    %c0_i32_1 = arith.constant 0 : i32
    return %c0_i32, %c0_i32_0 : i32, i32
  }
  func.func @transform_4(%arg0: i32) -> (i32, i32) {
    %c0_i32 = arith.constant 0 : i32
    %c0_i32_0 = arith.constant 0 : i32
    %c0_i32_1 = arith.constant 0 : i32
    return %c0_i32, %c0_i32_0 : i32, i32
  }
  func.func @transform_5(%arg0: i32) -> (i32, i32) {
    %c0_i32 = arith.constant 0 : i32
    %c0_i32_0 = arith.constant 0 : i32
    %c0_i32_1 = arith.constant 0 : i32
    return %c0_i32, %c0_i32_0 : i32, i32
  }
  func.func @transform_6(%arg0: i32) -> (i32, i32) {
    %c0_i32 = arith.constant 0 : i32
    %c0_i32_0 = arith.constant 0 : i32
    %c0_i32_1 = arith.constant 0 : i32
    return %c0_i32, %c0_i32_0 : i32, i32
  }
  func.func @transform_7(%arg0: i32) -> (i32, i32) {
    %c0_i32 = arith.constant 0 : i32
    %c0_i32_0 = arith.constant 0 : i32
    return %arg0, %c0_i32 : i32, i32
  }
}

</mosaic_0001>

<llo_original>
// kernel: cnn_cifar_forward.3
$region0: #{cnn_cifar_forward.3}
  #allocation0 [shape = 'u32[]', space=smem, size = 0x4, offset = 0x4, fixed_abs, tag = 'smem constant byte address 0x4 - core index']
  #allocation1 [shape = 'u32[144,128]{1,0:T(1,128)}', space=vmem, size = 0x12000, scoped, tag = 'internal scratch']
  %s0 = inlined_call_operand.vmem [shape: bf16[4,400,75], index: 0, kind: input, shape index: {}]
  %s1 = inlined_call_operand.vmem [shape: bf16[75,128], index: 1, kind: input, shape index: {}]
  %s2 = inlined_call_operand.vmem [shape: f32[1,128], index: 2, kind: input, shape index: {}]
  %s3 = inlined_call_operand.vmem [shape: bf16[400,128], index: 3, kind: output, shape index: {}]
  %s4 = sld [smem:[#allocation0]]
  $region22: #{cnn_cifar_forward.3} parent=0
    _
  %s6 = ssub.s32 1, %s4
  %s7 = scalar_select 0, %s6, %s4
  // Predicated region
  $region2: #{cnn_cifar_forward.3} parent=0 // pred_check
    _
  $region3: #{cnn_cifar_forward.3} parent=0 // pred_check_branch
    %9 = sbr.rel (0) target = $region5
  $region4: #{cnn_cifar_forward.3} parent=0 // pred_region
    _
  $region5: #{cnn_cifar_forward.3} parent=0 // pred_fallthru
    _
  // Predicated region
  $region6: #{cnn_cifar_forward.3} parent=0 // pred_check
    _
  $region7: #{cnn_cifar_forward.3} parent=0 // pred_check_branch
    %11 = sbr.rel (0) target = $region9
  $region8: #{cnn_cifar_forward.3} parent=0 // pred_region
    _
  $region9: #{cnn_cifar_forward.3} parent=0 // pred_fallthru
    _
  // Predicated region
  $region10: #{cnn_cifar_forward.3} parent=0 // pred_check
    _
  $region11: #{cnn_cifar_forward.3} parent=0 // pred_check_branch
    %13 = sbr.rel (0) target = $region13
  $region12: #{cnn_cifar_forward.3} parent=0 // pred_region
    _
  $region13: #{cnn_cifar_forward.3} parent=0 // pred_fallthru
    _
  %v15 = vld [vmem:[%s1] sm:$0xf]
  %v16 = vld [vmem:[%s1 + $0x4] sm:$0xf]
  %v17 = vld [vmem:[%s1 + $0x8] sm:$0xf]
  %v18 = vld [vmem:[%s1 + $0xc] sm:$0xf]
  %v19 = vld [vmem:[%s1 + $0x10] sm:$0xf]
  %v20 = vld [vmem:[%s1 + $0x14] sm:$0xf]
  %v21 = vld [vmem:[%s1 + $0x18] sm:$0xf]
  %v22 = vld [vmem:[%s1 + $0x1c] sm:$0xf]
  %v23 = vld [vmem:[%s1 + $0x20] sm:$0xf]
  %v24 = vld [vmem:[%s1 + $0x24] sm:$0x3]
  %v25 = vld [vmem:[%s2] sm:$0x1]
  %v26 = vld [vmem:[%s0] sm:$0xf]
  %v27 = vld [vmem:[%s0 + $0x4] sm:$0xf]
  %v28 = vld [vmem:[%s0 + $0x8] sm:$0xf]
  %v29 = vld [vmem:[%s0 + $0xc] sm:$0xf]
  %v30 = vld [vmem:[%s0 + $0x10] sm:$0xf]
  %v31 = vld [vmem:[%s0 + $0x14] sm:$0xf]
  %v32 = vld [vmem:[%s0 + $0x18] sm:$0xf]
  %v33 = vld [vmem:[%s0 + $0x1c] sm:$0xf]
  %v34 = vld [vmem:[%s0 + $0x20] sm:$0xf]
  %v35 = vld [vmem:[%s0 + $0x24] sm:$0xf]
  %v36 = vld [vmem:[%s0 + $0x28] sm:$0xf]
  %v37 = vld [vmem:[%s0 + $0x2c] sm:$0xf]
  %v38 = vld [vmem:[%s0 + $0x30] sm:$0xf]
  %v39 = vld [vmem:[%s0 + $0x34] sm:$0xf]
  %v40 = vld [vmem:[%s0 + $0x38] sm:$0xf]
  %v41 = vld [vmem:[%s0 + $0x3c] sm:$0xf]
  %v42 = vld [vmem:[%s0 + $0x40] sm:$0xf]
  %v43 = vld [vmem:[%s0 + $0x44] sm:$0xf]
  %v44 = vld [vmem:[%s0 + $0x48] sm:$0xf]
  %v45 = vld [vmem:[%s0 + $0x4c] sm:$0xf]
  %v46 = vld [vmem:[%s0 + $0x50] sm:$0xf]
  %v47 = vld [vmem:[%s0 + $0x54] sm:$0xf]
  %v48 = vld [vmem:[%s0 + $0x58] sm:$0xf]
  %v49 = vld [vmem:[%s0 + $0x5c] sm:$0xf]
  %v50 = vld [vmem:[%s0 + $0x60] sm:$0xf]
  %v51 = vld [vmem:[%s0 + $0x64] sm:$0xf]
  %v52 = vld [vmem:[%s0 + $0x68] sm:$0xf]
  %v53 = vld [vmem:[%s0 + $0x6c] sm:$0xf]
  %v54 = vld [vmem:[%s0 + $0x70] sm:$0xf]
  %v55 = vld [vmem:[%s0 + $0x74] sm:$0xf]
  %v56 = vld [vmem:[%s0 + $0x78] sm:$0xf]
  %v57 = vld [vmem:[%s0 + $0x7c] sm:$0xf]
  %v58 = vld [vmem:[%s0 + $0x80] sm:$0xf]
  %v59 = vld [vmem:[%s0 + $0x84] sm:$0xf]
  %v60 = vld [vmem:[%s0 + $0x88] sm:$0xf]
  %v61 = vld [vmem:[%s0 + $0x8c] sm:$0xf]
  %v62 = vld [vmem:[%s0 + $0x90] sm:$0xf]
  %v63 = vld [vmem:[%s0 + $0x94] sm:$0xf]
  %v64 = vld [vmem:[%s0 + $0x98] sm:$0xf]
  %v65 = vld [vmem:[%s0 + $0x9c] sm:$0xf]
  %v66 = vld [vmem:[%s0 + $0xa0] sm:$0xf]
  %v67 = vld [vmem:[%s0 + $0xa4] sm:$0xf]
  %v68 = vld [vmem:[%s0 + $0xa8] sm:$0xf]
  %v69 = vld [vmem:[%s0 + $0xac] sm:$0xf]
  %v70 = vld [vmem:[%s0 + $0xb0] sm:$0xf]
  %v71 = vld [vmem:[%s0 + $0xb4] sm:$0xf]
  %v72 = vld [vmem:[%s0 + $0xb8] sm:$0xf]
  %v73 = vld [vmem:[%s0 + $0xbc] sm:$0xf]
  %v74 = vld [vmem:[%s0 + $0xc0] sm:$0xf]
  %v75 = vld [vmem:[%s0 + $0xc4] sm:$0xf]
  %v77 = vlaneseq
  %v78 = vshrl.u32 %v77, 7
  %v79 = vsub.s32 0, %v78
  %v80 = vrot.slane %v25, %v79
  %v132 = vunpack.c.l.b16 %v26
  %v133 = vunpack.c.l.b16 %v27
  %v134 = vunpack.c.l.b16 %v28
  %v135 = vunpack.c.l.b16 %v29
  %v136 = vunpack.c.l.b16 %v30
  %v137 = vunpack.c.l.b16 %v31
  %v138 = vunpack.c.l.b16 %v32
  %v139 = vunpack.c.l.b16 %v33
  %v140 = vunpack.c.l.b16 %v34
  %v141 = vunpack.c.l.b16 %v35
  %v142 = vunpack.c.l.b16 %v36
  %v143 = vunpack.c.l.b16 %v37
  %v144 = vunpack.c.l.b16 %v38
  %v145 = vunpack.c.l.b16 %v39
  %v146 = vunpack.c.l.b16 %v40
  %v147 = vunpack.c.l.b16 %v41
  %v148 = vunpack.c.l.b16 %v42
  %v149 = vunpack.c.l.b16 %v43
  %v150 = vunpack.c.l.b16 %v44
  %v151 = vunpack.c.l.b16 %v45
  %v152 = vunpack.c.l.b16 %v46
  %v153 = vunpack.c.l.b16 %v47
  %v154 = vunpack.c.l.b16 %v48
  %v155 = vunpack.c.l.b16 %v49
  %v156 = vunpack.c.l.b16 %v50
  %v157 = vunpack.c.l.b16 %v51
  %v158 = vunpack.c.l.b16 %v52
  %v159 = vunpack.c.l.b16 %v53
  %v160 = vunpack.c.l.b16 %v54
  %v161 = vunpack.c.l.b16 %v55
  %v162 = vunpack.c.l.b16 %v56
  %v163 = vunpack.c.l.b16 %v57
  %v164 = vunpack.c.l.b16 %v58
  %v165 = vunpack.c.l.b16 %v59
  %v166 = vunpack.c.l.b16 %v60
  %v167 = vunpack.c.l.b16 %v61
  %v168 = vunpack.c.l.b16 %v62
  %v169 = vunpack.c.l.b16 %v63
  %v170 = vunpack.c.l.b16 %v64
  %v171 = vunpack.c.l.b16 %v65
  %v172 = vunpack.c.l.b16 %v66
  %v173 = vunpack.c.l.b16 %v67
  %v174 = vunpack.c.l.b16 %v68
  %v175 = vunpack.c.l.b16 %v69
  %v176 = vunpack.c.l.b16 %v70
  %v177 = vunpack.c.l.b16 %v71
  %v178 = vunpack.c.l.b16 %v72
  %v179 = vunpack.c.l.b16 %v73
  %v180 = vunpack.c.l.b16 %v74
  %v181 = vunpack.c.l.b16 %v75
  %v182 = vpack.c.b16 %v133, %v132
  %v183 = vpack.c.b16 %v135, %v134
  %v184 = vpack.c.b16 %v137, %v136
  %v185 = vpack.c.b16 %v139, %v138
  %v186 = vpack.c.b16 %v141, %v140
  %v187 = vpack.c.b16 %v143, %v142
  %v188 = vpack.c.b16 %v145, %v144
  %v189 = vpack.c.b16 %v147, %v146
  %v190 = vpack.c.b16 %v149, %v148
  %v191 = vpack.c.b16 %v151, %v150
  %v192 = vpack.c.b16 %v153, %v152
  %v193 = vpack.c.b16 %v155, %v154
  %v194 = vpack.c.b16 %v157, %v156
  %v195 = vpack.c.b16 %v159, %v158
  %v196 = vpack.c.b16 %v161, %v160
  %v197 = vpack.c.b16 %v163, %v162
  %v198 = vpack.c.b16 %v165, %v164
  %v199 = vpack.c.b16 %v167, %v166
  %v200 = vpack.c.b16 %v169, %v168
  %v201 = vpack.c.b16 %v171, %v170
  %v202 = vpack.c.b16 %v173, %v172
  %v203 = vpack.c.b16 %v175, %v174
  %v204 = vpack.c.b16 %v177, %v176
  %v205 = vpack.c.b16 %v179, %v178
  %v206 = vpack.c.b16 %v181, %v180
  %v217 = vunpack.c.l.b16 %v15
  %v218 = vunpack.c.l.b16 %v16
  %v219 = vunpack.c.l.b16 %v17
  %v220 = vunpack.c.l.b16 %v18
  %v221 = vunpack.c.l.b16 %v19
  %v222 = vunpack.c.l.b16 %v20
  %v223 = vunpack.c.l.b16 %v21
  %v224 = vunpack.c.l.b16 %v22
  %v225 = vunpack.c.l.b16 %v23
  %v226 = vunpack.c.l.b16 %v24
  %v227 = vpack.c.b16 %v218, %v217
  %v228 = vpack.c.b16 %v220, %v219
  %v229 = vpack.c.b16 %v222, %v221
  %v230 = vpack.c.b16 %v224, %v223
  %v231 = vpack.c.b16 %v226, %v225
  %vm236 = vcmask 613376
  %v238 = vsel %vm236, %v182, 0
  %v241 = vsel %vm236, %v183, 0
  %v244 = vsel %vm236, %v184, 0
  %v247 = vsel %vm236, %v185, 0
  %v250 = vsel %vm236, %v186, 0
  %v253 = vsel %vm236, %v187, 0
  %v256 = vsel %vm236, %v188, 0
  %v259 = vsel %vm236, %v189, 0
  %v262 = vsel %vm236, %v190, 0
  %v265 = vsel %vm236, %v191, 0
  %v268 = vsel %vm236, %v192, 0
  %v271 = vsel %vm236, %v193, 0
  %v274 = vsel %vm236, %v194, 0
  %v277 = vsel %vm236, %v195, 0
  %v280 = vsel %vm236, %v196, 0
  %v283 = vsel %vm236, %v197, 0
  %v286 = vsel %vm236, %v198, 0
  %v289 = vsel %vm236, %v199, 0
  %v292 = vsel %vm236, %v200, 0
  %v295 = vsel %vm236, %v201, 0
  %v298 = vsel %vm236, %v202, 0
  %v301 = vsel %vm236, %v203, 0
  %v304 = vsel %vm236, %v204, 0
  %v307 = vsel %vm236, %v205, 0
  %v310 = vsel %vm236, %v206, 0
  %vm312 = vcmask 1044480
  %vm313 = vcmask 1045504
  %v314 = vsel %vm312, 4294967295, 65535
  %v315 = vsel %vm313, %v314, 0
  %v317 = vand.u32 %v231, %v315
  %319 = vmatprep.subr.bf16.mxu0 0
  %320 = vmatpush1.bf16.msra.mxu0 %v227
  %321 = vmatprep.subr.bf16.mxu0 0
  %322 = vmatpush1.bf16.msra.mxu0 %v228
  %323 = vmatprep.subr.bf16.mxu0 0
  %324 = vmatpush1.bf16.msra.mxu0 %v229
  %325 = vmatprep.subr.bf16.mxu0 0
  %326 = vmatpush1.bf16.msra.mxu0 %v230
  %327 = vmatprep.subr.bf16.mxu0 0
  %328 = vmatpush1.bf16.msra.mxu0 %v317
  %329 = vmatprep.subr.bf16.mxu0 0
  %330 = vmatpush1.bf16.msra.mxu0 0
  %331 = vmatprep.subr.bf16.mxu0 0
  %332 = vmatpush1.bf16.msra.mxu0 0
  %333 = vmatprep.subr.bf16.mxu0 0
  %334 = vmatpush1.bf16.msra.mxu0 0
  %335 = vmatprep.subr.bf16.mxu0 0
  %336 = vmatpush1.bf16.msra.mxu0 0
  %337 = vmatprep.subr.bf16.mxu0 0
  %338 = vmatpush1.bf16.msra.mxu0 0
  %339 = vmatprep.subr.bf16.mxu0 0
  %340 = vmatpush1.bf16.msra.mxu0 0
  %341 = vmatprep.subr.bf16.mxu0 0
  %342 = vmatpush1.bf16.msra.mxu0 0
  %343 = vmatprep.subr.bf16.mxu0 0
  %344 = vmatpush1.bf16.msra.mxu0 0
  %345 = vmatprep.subr.bf16.mxu0 0
  %346 = vmatpush1.bf16.msra.mxu0 0
  %347 = vmatprep.subr.bf16.mxu0 0
  %348 = vmatpush1.bf16.msra.mxu0 0
  %349 = vmatprep.subr.bf16.mxu0 0
  %350 = vmatpush1.bf16.msra.mxu0 0
  %351 = vmatprep.mubr.bf16.mxu0 0
  %352 = vmatmul.mubr.bf16.gmra.mrb[0].mxu0 %v238
  %v353 = vpop.f32.mrb[0].mxu0
  %v354 = vadd.f32 %v80, %v353
  %v355 = vpop.f32.mrb[0].mxu0
  %v356 = vpop.f32.mrb[0].mxu0
  %v357 = vadd.f32 %v80, %v356
  %v358 = vpop.f32.mrb[0].mxu0
  %359 = vmatprep.mubr.bf16.mxu0 0
  %360 = vmatmul.mubr.bf16.gmra.mrb[0].mxu0 %v241
  %v361 = vpop.f32.mrb[0].mxu0
  %v362 = vadd.f32 %v80, %v361
  %v363 = vpop.f32.mrb[0].mxu0
  %v364 = vpop.f32.mrb[0].mxu0
  %v365 = vadd.f32 %v80, %v364
  %v366 = vpop.f32.mrb[0].mxu0
  %367 = vmatprep.mubr.bf16.mxu0 0
  %368 = vmatmul.mubr.bf16.gmra.mrb[0].mxu0 %v244
  %v369 = vpop.f32.mrb[0].mxu0
  %v370 = vadd.f32 %v80, %v369
  %v371 = vpop.f32.mrb[0].mxu0
  %v372 = vpop.f32.mrb[0].mxu0
  %v373 = vadd.f32 %v80, %v372
  %v374 = vpop.f32.mrb[0].mxu0
  %375 = vmatprep.mubr.bf16.mxu0 0
  %376 = vmatmul.mubr.bf16.gmra.mrb[0].mxu0 %v247
  %v377 = vpop.f32.mrb[0].mxu0
  %v378 = vadd.f32 %v80, %v377
  %v379 = vpop.f32.mrb[0].mxu0
  %v380 = vpop.f32.mrb[0].mxu0
  %v381 = vadd.f32 %v80, %v380
  %v382 = vpop.f32.mrb[0].mxu0
  %383 = vmatprep.mubr.bf16.mxu0 0
  %384 = vmatmul.mubr.bf16.gmra.mrb[0].mxu0 %v250
  %v385 = vpop.f32.mrb[0].mxu0
  %v386 = vadd.f32 %v80, %v385
  %v387 = vpop.f32.mrb[0].mxu0
  %v388 = vpop.f32.mrb[0].mxu0
  %v389 = vadd.f32 %v80, %v388
  %v390 = vpop.f32.mrb[0].mxu0
  %391 = vmatprep.mubr.bf16.mxu0 0
  %392 = vmatmul.mubr.bf16.gmra.mrb[0].mxu0 %v253
  %v393 = vpop.f32.mrb[0].mxu0
  %v394 = vadd.f32 %v80, %v393
  %v395 = vpop.f32.mrb[0].mxu0
  %v396 = vpop.f32.mrb[0].mxu0
  %v397 = vadd.f32 %v80, %v396
  %v398 = vpop.f32.mrb[0].mxu0
  %399 = vmatprep.mubr.bf16.mxu0 0
  %400 = vmatmul.mubr.bf16.gmra.mrb[0].mxu0 %v256
  %v401 = vpop.f32.mrb[0].mxu0
  %v402 = vadd.f32 %v80, %v401
  %v403 = vpop.f32.mrb[0].mxu0
  %v404 = vpop.f32.mrb[0].mxu0
  %v405 = vadd.f32 %v80, %v404
  %v406 = vpop.f32.mrb[0].mxu0
  %407 = vmatprep.mubr.bf16.mxu0 0
  %408 = vmatmul.mubr.bf16.gmra.mrb[0].mxu0 %v259
  %v409 = vpop.f32.mrb[0].mxu0
  %v410 = vadd.f32 %v80, %v409
  %v411 = vpop.f32.mrb[0].mxu0
  %v412 = vpop.f32.mrb[0].mxu0
  %v413 = vadd.f32 %v80, %v412
  %v414 = vpop.f32.mrb[0].mxu0
  %415 = vmatprep.mubr.bf16.mxu0 0
  %416 = vmatmul.mubr.bf16.gmra.mrb[0].mxu0 %v262
  %v417 = vpop.f32.mrb[0].mxu0
  %v418 = vadd.f32 %v80, %v417
  %v419 = vpop.f32.mrb[0].mxu0
  %v420 = vpop.f32.mrb[0].mxu0
  %v421 = vadd.f32 %v80, %v420
  %v422 = vpop.f32.mrb[0].mxu0
  %423 = vmatprep.mubr.bf16.mxu0 0
  %424 = vmatmul.mubr.bf16.gmra.mrb[0].mxu0 %v265
  %v425 = vpop.f32.mrb[0].mxu0
  %v426 = vadd.f32 %v80, %v425
  %v427 = vpop.f32.mrb[0].mxu0
  %v428 = vpop.f32.mrb[0].mxu0
  %v429 = vadd.f32 %v80, %v428
  %v430 = vpop.f32.mrb[0].mxu0
  %431 = vmatprep.mubr.bf16.mxu0 0
  %432 = vmatmul.mubr.bf16.gmra.mrb[0].mxu0 %v268
  %v433 = vpop.f32.mrb[0].mxu0
  %v434 = vadd.f32 %v80, %v433
  %v435 = vpop.f32.mrb[0].mxu0
  %v436 = vpop.f32.mrb[0].mxu0
  %v437 = vadd.f32 %v80, %v436
  %v438 = vpop.f32.mrb[0].mxu0
  %439 = vmatprep.mubr.bf16.mxu0 0
  %440 = vmatmul.mubr.bf16.gmra.mrb[0].mxu0 %v271
  %v441 = vpop.f32.mrb[0].mxu0
  %v442 = vadd.f32 %v80, %v441
  %v443 = vpop.f32.mrb[0].mxu0
  %v444 = vpop.f32.mrb[0].mxu0
  %v445 = vadd.f32 %v80, %v444
  %v446 = vpop.f32.mrb[0].mxu0
  %447 = vmatprep.mubr.bf16.mxu0 0
  %448 = vmatmul.mubr.bf16.gmra.mrb[0].mxu0 %v274
  %v449 = vpop.f32.mrb[0].mxu0
  %v450 = vadd.f32 %v80, %v449
  %v451 = vpop.f32.mrb[0].mxu0
  %v452 = vpop.f32.mrb[0].mxu0
  %v453 = vadd.f32 %v80, %v452
  %v454 = vpop.f32.mrb[0].mxu0
  %455 = vmatprep.mubr.bf16.mxu0 0
  %456 = vmatmul.mubr.bf16.gmra.mrb[0].mxu0 %v277
  %v457 = vpop.f32.mrb[0].mxu0
  %v458 = vadd.f32 %v80, %v457
  %v459 = vpop.f32.mrb[0].mxu0
  %v460 = vpop.f32.mrb[0].mxu0
  %v461 = vadd.f32 %v80, %v460
  %v462 = vpop.f32.mrb[0].mxu0
  %463 = vmatprep.mubr.bf16.mxu0 0
  %464 = vmatmul.mubr.bf16.gmra.mrb[0].mxu0 %v280
  %v465 = vpop.f32.mrb[0].mxu0
  %v466 = vadd.f32 %v80, %v465
  %v467 = vpop.f32.mrb[0].mxu0
  %v468 = vpop.f32.mrb[0].mxu0
  %v469 = vadd.f32 %v80, %v468
  %v470 = vpop.f32.mrb[0].mxu0
  %471 = vmatprep.mubr.bf16.mxu0 0
  %472 = vmatmul.mubr.bf16.gmra.mrb[0].mxu0 %v283
  %v473 = vpop.f32.mrb[0].mxu0
  %v474 = vadd.f32 %v80, %v473
  %v475 = vpop.f32.mrb[0].mxu0
  %v476 = vpop.f32.mrb[0].mxu0
  %v477 = vadd.f32 %v80, %v476
  %v478 = vpop.f32.mrb[0].mxu0
  %479 = vmatprep.mubr.bf16.mxu0 0
  %480 = vmatmul.mubr.bf16.gmra.mrb[0].mxu0 %v286
  %v481 = vpop.f32.mrb[0].mxu0
  %v482 = vadd.f32 %v80, %v481
  %v483 = vpop.f32.mrb[0].mxu0
  %v484 = vpop.f32.mrb[0].mxu0
  %v485 = vadd.f32 %v80, %v484
  %v486 = vpop.f32.mrb[0].mxu0
  %487 = vmatprep.mubr.bf16.mxu0 0
  %488 = vmatmul.mubr.bf16.gmra.mrb[0].mxu0 %v289
  %v489 = vpop.f32.mrb[0].mxu0
  %v490 = vadd.f32 %v80, %v489
  %v491 = vpop.f32.mrb[0].mxu0
  %v492 = vpop.f32.mrb[0].mxu0
  %v493 = vadd.f32 %v80, %v492
  %v494 = vpop.f32.mrb[0].mxu0
  %495 = vmatprep.mubr.bf16.mxu0 0
  %496 = vmatmul.mubr.bf16.gmra.mrb[0].mxu0 %v292
  %v497 = vpop.f32.mrb[0].mxu0
  %v498 = vadd.f32 %v80, %v497
  %v499 = vpop.f32.mrb[0].mxu0
  %v500 = vpop.f32.mrb[0].mxu0
  %v501 = vadd.f32 %v80, %v500
  %v502 = vpop.f32.mrb[0].mxu0
  %503 = vmatprep.mubr.bf16.mxu0 0
  %504 = vmatmul.mubr.bf16.gmra.mrb[0].mxu0 %v295
  %v505 = vpop.f32.mrb[0].mxu0
  %v506 = vadd.f32 %v80, %v505
  %v507 = vpop.f32.mrb[0].mxu0
  %v508 = vpop.f32.mrb[0].mxu0
  %v509 = vadd.f32 %v80, %v508
  %v510 = vpop.f32.mrb[0].mxu0
  %511 = vmatprep.mubr.bf16.mxu0 0
  %512 = vmatmul.mubr.bf16.gmra.mrb[0].mxu0 %v298
  %v513 = vpop.f32.mrb[0].mxu0
  %v514 = vadd.f32 %v80, %v513
  %v515 = vpop.f32.mrb[0].mxu0
  %v516 = vpop.f32.mrb[0].mxu0
  %v517 = vadd.f32 %v80, %v516
  %v518 = vpop.f32.mrb[0].mxu0
  %519 = vmatprep.mubr.bf16.mxu0 0
  %520 = vmatmul.mubr.bf16.gmra.mrb[0].mxu0 %v301
  %v521 = vpop.f32.mrb[0].mxu0
  %v522 = vadd.f32 %v80, %v521
  %v523 = vpop.f32.mrb[0].mxu0
  %v524 = vpop.f32.mrb[0].mxu0
  %v525 = vadd.f32 %v80, %v524
  %v526 = vpop.f32.mrb[0].mxu0
  %527 = vmatprep.mubr.bf16.mxu0 0
  %528 = vmatmul.mubr.bf16.gmra.mrb[0].mxu0 %v304
  %v529 = vpop.f32.mrb[0].mxu0
  %v530 = vadd.f32 %v80, %v529
  %v531 = vpop.f32.mrb[0].mxu0
  %v532 = vpop.f32.mrb[0].mxu0
  %v533 = vadd.f32 %v80, %v532
  %v534 = vpop.f32.mrb[0].mxu0
  %535 = vmatprep.mubr.bf16.mxu0 0
  %536 = vmatmul.mubr.bf16.gmra.mrb[0].mxu0 %v307
  %v537 = vpop.f32.mrb[0].mxu0
  %v538 = vadd.f32 %v80, %v537
  %v539 = vpop.f32.mrb[0].mxu0
  %v540 = vpop.f32.mrb[0].mxu0
  %v541 = vadd.f32 %v80, %v540
  %v542 = vpop.f32.mrb[0].mxu0
  %543 = vmatprep.mubr.bf16.mxu0 0
  %544 = vmatmul.mubr.bf16.gmra.mrb[0].mxu0 %v310
  %v545 = vpop.f32.mrb[0].mxu0
  %v546 = vadd.f32 %v80, %v545
  %v547 = vpop.f32.mrb[0].mxu0
  %v548 = vpop.f32.mrb[0].mxu0
  %v549 = vadd.f32 %v80, %v548
  %v550 = vpop.f32.mrb[0].mxu0
  %551 = vdwg.mxu0
  %v552 = vmax.f32 %v354, 0.0
  %v553 = vmax.f32 %v357, 0.0
  %v554 = vmax.f32 %v362, 0.0
  %v555 = vmax.f32 %v365, 0.0
  %v556 = vmax.f32 %v370, 0.0
  %v557 = vmax.f32 %v373, 0.0
  %v558 = vmax.f32 %v378, 0.0
  %v559 = vmax.f32 %v381, 0.0
  %v560 = vmax.f32 %v386, 0.0
  %v561 = vmax.f32 %v389, 0.0
  %v562 = vmax.f32 %v394, 0.0
  %v563 = vmax.f32 %v397, 0.0
  %v564 = vmax.f32 %v402, 0.0
  %v565 = vmax.f32 %v405, 0.0
  %v566 = vmax.f32 %v410, 0.0
  %v567 = vmax.f32 %v413, 0.0
  %v568 = vmax.f32 %v418, 0.0
  %v569 = vmax.f32 %v421, 0.0
  %v570 = vmax.f32 %v426, 0.0
  %v571 = vmax.f32 %v429, 0.0
  %v572 = vmax.f32 %v434, 0.0
  %v573 = vmax.f32 %v437, 0.0
  %v574 = vmax.f32 %v442, 0.0
  %v575 = vmax.f32 %v445, 0.0
  %v576 = vmax.f32 %v450, 0.0
  %v577 = vmax.f32 %v453, 0.0
  %v578 = vmax.f32 %v458, 0.0
  %v579 = vmax.f32 %v461, 0.0
  %v580 = vmax.f32 %v466, 0.0
  %v581 = vmax.f32 %v469, 0.0
  %v582 = vmax.f32 %v474, 0.0
  %v583 = vmax.f32 %v477, 0.0
  %v584 = vmax.f32 %v482, 0.0
  %v585 = vmax.f32 %v485, 0.0
  %v586 = vmax.f32 %v490, 0.0
  %v587 = vmax.f32 %v493, 0.0
  %v588 = vmax.f32 %v498, 0.0
  %v589 = vmax.f32 %v501, 0.0
  %v590 = vmax.f32 %v506, 0.0
  %v591 = vmax.f32 %v509, 0.0
  %v592 = vmax.f32 %v514, 0.0
  %v593 = vmax.f32 %v517, 0.0
  %v594 = vmax.f32 %v522, 0.0
  %v595 = vmax.f32 %v525, 0.0
  %v596 = vmax.f32 %v530, 0.0
  %v597 = vmax.f32 %v533, 0.0
  %v598 = vmax.f32 %v538, 0.0
  %v599 = vmax.f32 %v541, 0.0
  %v600 = vmax.f32 %v546, 0.0
  %v601 = vmax.f32 %v549, 0.0
  %s602 = scalar_lea.vmem %s0, 200
  %v603 = vld [vmem:[%s602] sm:$0xf]
  %v604 = vld [vmem:[%s602 + $0x4] sm:$0xf]
  %v605 = vld [vmem:[%s602 + $0x8] sm:$0xf]
  %v606 = vld [vmem:[%s602 + $0xc] sm:$0xf]
  %v607 = vld [vmem:[%s602 + $0x10] sm:$0xf]
  %v608 = vld [vmem:[%s602 + $0x14] sm:$0xf]
  %v609 = vld [vmem:[%s602 + $0x18] sm:$0xf]
  %v610 = vld [vmem:[%s602 + $0x1c] sm:$0xf]
  %v611 = vld [vmem:[%s602 + $0x20] sm:$0xf]
  %v612 = vld [vmem:[%s602 + $0x24] sm:$0xf]
  %v613 = vld [vmem:[%s602 + $0x28] sm:$0xf]
  %v614 = vld [vmem:[%s602 + $0x2c] sm:$0xf]
  %v615 = vld [vmem:[%s602 + $0x30] sm:$0xf]
  %v616 = vld [vmem:[%s602 + $0x34] sm:$0xf]
  %v617 = vld [vmem:[%s602 + $0x38] sm:$0xf]
  %v618 = vld [vmem:[%s602 + $0x3c] sm:$0xf]
  %v619 = vld [vmem:[%s602 + $0x40] sm:$0xf]
  %v620 = vld [vmem:[%s602 + $0x44] sm:$0xf]
  %v621 = vld [vmem:[%s602 + $0x48] sm:$0xf]
  %v622 = vld [vmem:[%s602 + $0x4c] sm:$0xf]
  %v623 = vld [vmem:[%s602 + $0x50] sm:$0xf]
  %v624 = vld [vmem:[%s602 + $0x54] sm:$0xf]
  %v625 = vld [vmem:[%s602 + $0x58] sm:$0xf]
  %v626 = vld [vmem:[%s602 + $0x5c] sm:$0xf]
  %v627 = vld [vmem:[%s602 + $0x60] sm:$0xf]
  %v628 = vld [vmem:[%s602 + $0x64] sm:$0xf]
  %v629 = vld [vmem:[%s602 + $0x68] sm:$0xf]
  %v630 = vld [vmem:[%s602 + $0x6c] sm:$0xf]
  %v631 = vld [vmem:[%s602 + $0x70] sm:$0xf]
  %v632 = vld [vmem:[%s602 + $0x74] sm:$0xf]
  %v633 = vld [vmem:[%s602 + $0x78] sm:$0xf]
  %v634 = vld [vmem:[%s602 + $0x7c] sm:$0xf]
  %v635 = vld [vmem:[%s602 + $0x80] sm:$0xf]
  %v636 = vld [vmem:[%s602 + $0x84] sm:$0xf]
  %v637 = vld [vmem:[%s602 + $0x88] sm:$0xf]
  %v638 = vld [vmem:[%s602 + $0x8c] sm:$0xf]
  %v639 = vld [vmem:[%s602 + $0x90] sm:$0xf]
  %v640 = vld [vmem:[%s602 + $0x94] sm:$0xf]
  %v641 = vld [vmem:[%s602 + $0x98] sm:$0xf]
  %v642 = vld [vmem:[%s602 + $0x9c] sm:$0xf]
  %v643 = vld [vmem:[%s602 + $0xa0] sm:$0xf]
  %v644 = vld [vmem:[%s602 + $0xa4] sm:$0xf]
  %v645 = vld [vmem:[%s602 + $0xa8] sm:$0xf]
  %v646 = vld [vmem:[%s602 + $0xac] sm:$0xf]
  %v647 = vld [vmem:[%s602 + $0xb0] sm:$0xf]
  %v648 = vld [vmem:[%s602 + $0xb4] sm:$0xf]
  %v649 = vld [vmem:[%s602 + $0xb8] sm:$0xf]
  %v650 = vld [vmem:[%s602 + $0xbc] sm:$0xf]
  %v651 = vld [vmem:[%s602 + $0xc0] sm:$0xf]
  %v652 = vld [vmem:[%s602 + $0xc4] sm:$0xf]
  %v703 = vunpack.c.l.b16 %v603
  %v704 = vunpack.c.l.b16 %v604
  %v705 = vunpack.c.l.b16 %v605
  %v706 = vunpack.c.l.b16 %v606
  %v707 = vunpack.c.l.b16 %v607
  %v708 = vunpack.c.l.b16 %v608
  %v709 = vunpack.c.l.b16 %v609
  %v710 = vunpack.c.l.b16 %v610
  %v711 = vunpack.c.l.b16 %v611
  %v712 = vunpack.c.l.b16 %v612
  %v713 = vunpack.c.l.b16 %v613
  %v714 = vunpack.c.l.b16 %v614
  %v715 = vunpack.c.l.b16 %v615
  %v716 = vunpack.c.l.b16 %v616
  %v717 = vunpack.c.l.b16 %v617
  %v718 = vunpack.c.l.b16 %v618
  %v719 = vunpack.c.l.b16 %v619
  %v720 = vunpack.c.l.b16 %v620
  %v721 = vunpack.c.l.b16 %v621
  %v722 = vunpack.c.l.b16 %v622
  %v723 = vunpack.c.l.b16 %v623
  %v724 = vunpack.c.l.b16 %v624
  %v725 = vunpack.c.l.b16 %v625
  %v726 = vunpack.c.l.b16 %v626
  %v727 = vunpack.c.l.b16 %v627
  %v728 = vunpack.c.l.b16 %v628
  %v729 = vunpack.c.l.b16 %v629
  %v730 = vunpack.c.l.b16 %v630
  %v731 = vunpack.c.l.b16 %v631
  %v732 = vunpack.c.l.b16 %v632
  %v733 = vunpack.c.l.b16 %v633
  %v734 = vunpack.c.l.b16 %v634
  %v735 = vunpack.c.l.b16 %v635
  %v736 = vunpack.c.l.b16 %v636
  %v737 = vunpack.c.l.b16 %v637
  %v738 = vunpack.c.l.b16 %v638
  %v739 = vunpack.c.l.b16 %v639
  %v740 = vunpack.c.l.b16 %v640
  %v741 = vunpack.c.l.b16 %v641
  %v742 = vunpack.c.l.b16 %v642
  %v743 = vunpack.c.l.b16 %v643
  %v744 = vunpack.c.l.b16 %v644
  %v745 = vunpack.c.l.b16 %v645
  %v746 = vunpack.c.l.b16 %v646
  %v747 = vunpack.c.l.b16 %v647
  %v748 = vunpack.c.l.b16 %v648
  %v749 = vunpack.c.l.b16 %v649
  %v750 = vunpack.c.l.b16 %v650
  %v751 = vunpack.c.l.b16 %v651
  %v752 = vunpack.c.l.b16 %v652
  %v753 = vpack.c.b16 %v704, %v703
  %v754 = vpack.c.b16 %v706, %v705
  %v755 = vpack.c.b16 %v708, %v707
  %v756 = vpack.c.b16 %v710, %v709
  %v757 = vpack.c.b16 %v712, %v711
  %v758 = vpack.c.b16 %v714, %v713
  %v759 = vpack.c.b16 %v716, %v715
  %v760 = vpack.c.b16 %v718, %v717
  %v761 = vpack.c.b16 %v720, %v719
  %v762 = vpack.c.b16 %v722, %v721
  %v763 = vpack.c.b16 %v724, %v723
  %v764 = vpack.c.b16 %v726, %v725
  %v765 = vpack.c.b16 %v728, %v727
  %v766 = vpack.c.b16 %v730, %v729
  %v767 = vpack.c.b16 %v732, %v731
  %v768 = vpack.c.b16 %v734, %v733
  %v769 = vpack.c.b16 %v736, %v735
  %v770 = vpack.c.b16 %v738, %v737
  %v771 = vpack.c.b16 %v740, %v739
  %v772 = vpack.c.b16 %v742, %v741
  %v773 = vpack.c.b16 %v744, %v743
  %v774 = vpack.c.b16 %v746, %v745
  %v775 = vpack.c.b16 %v748, %v747
  %v776 = vpack.c.b16 %v750, %v749
  %v777 = vpack.c.b16 %v752, %v751
  %v779 = vsel %vm236, %v753, 0
  %v782 = vsel %vm236, %v754, 0
  %v785 = vsel %vm236, %v755, 0
  %v788 = vsel %vm236, %v756, 0
  %v791 = vsel %vm236, %v757, 0
  %v794 = vsel %vm236, %v758, 0
  %v797 = vsel %vm236, %v759, 0
  %v800 = vsel %vm236, %v760, 0
  %v803 = vsel %vm236, %v761, 0
  %v806 = vsel %vm236, %v762, 0
  %v809 = vsel %vm236, %v763, 0
  %v812 = vsel %vm236, %v764, 0
  %v815 = vsel %vm236, %v765, 0
  %v818 = vsel %vm236, %v766, 0
  %v821 = vsel %vm236, %v767, 0
  %v824 = vsel %vm236, %v768, 0
  %v827 = vsel %vm236, %v769, 0
  %v830 = vsel %vm236, %v770, 0
  %v833 = vsel %vm236, %v771, 0
  %v836 = vsel %vm236, %v772, 0
  %v839 = vsel %vm236, %v773, 0
  %v842 = vsel %vm236, %v774, 0
  %v845 = vsel %vm236, %v775, 0
  %v848 = vsel %vm236, %v776, 0
  %v851 = vsel %vm236, %v777, 0
  %853 = vmatprep.subr.bf16.mxu0 0
  %854 = vmatpush1.bf16.msra.mxu0 %v227
  %855 = vmatprep.subr.bf16.mxu0 0
  %856 = vmatpush1.bf16.msra.mxu0 %v228
  %857 = vmatprep.subr.bf16.mxu0 0
  %858 = vmatpush1.bf16.msra.mxu0 %v229
  %859 = vmatprep.subr.bf16.mxu0 0
  %860 = vmatpush1.bf16.msra.mxu0 %v230
  %861 = vmatprep.subr.bf16.mxu0 0
  %862 = vmatpush1.bf16.msra.mxu0 %v317
  %863 = vmatprep.subr.bf16.mxu0 0
  %864 = vmatpush1.bf16.msra.mxu0 0
  %865 = vmatprep.subr.bf16.mxu0 0
  %866 = vmatpush1.bf16.msra.mxu0 0
  %867 = vmatprep.subr.bf16.mxu0 0
  %868 = vmatpush1.bf16.msra.mxu0 0
  %869 = vmatprep.subr.bf16.mxu0 0
  %870 = vmatpush1.bf16.msra.mxu0 0
  %871 = vmatprep.subr.bf16.mxu0 0
  %872 = vmatpush1.bf16.msra.mxu0 0
  %873 = vmatprep.subr.bf16.mxu0 0
  %874 = vmatpush1.bf16.msra.mxu0 0
  %875 = vmatprep.subr.bf16.mxu0 0
  %876 = vmatpush1.bf16.msra.mxu0 0
  %877 = vmatprep.subr.bf16.mxu0 0
  %878 = vmatpush1.bf16.msra.mxu0 0
  %879 = vmatprep.subr.bf16.mxu0 0
  %880 = vmatpush1.bf16.msra.mxu0 0
  %881 = vmatprep.subr.bf16.mxu0 0
  %882 = vmatpush1.bf16.msra.mxu0 0
  %883 = vmatprep.subr.bf16.mxu0 0
  %884 = vmatpush1.bf16.msra.mxu0 0
  %885 = vmatprep.mubr.bf16.mxu0 0
  %886 = vmatmul.mubr.bf16.gmra.mrb[0].mxu0 %v779
  %v887 = vpop.f32.mrb[0].mxu0
  %v888 = vadd.f32 %v80, %v887
  %v889 = vpop.f32.mrb[0].mxu0
  %v890 = vpop.f32.mrb[0].mxu0
  %v891 = vadd.f32 %v80, %v890
  %v892 = vpop.f32.mrb[0].mxu0
  %893 = vmatprep.mubr.bf16.mxu0 0
  %894 = vmatmul.mubr.bf16.gmra.mrb[0].mxu0 %v782
  %v895 = vpop.f32.mrb[0].mxu0
  %v896 = vadd.f32 %v80, %v895
  %v897 = vpop.f32.mrb[0].mxu0
  %v898 = vpop.f32.mrb[0].mxu0
  %v899 = vadd.f32 %v80, %v898
  %v900 = vpop.f32.mrb[0].mxu0
  %901 = vmatprep.mubr.bf16.mxu0 0
  %902 = vmatmul.mubr.bf16.gmra.mrb[0].mxu0 %v785
  %v903 = vpop.f32.mrb[0].mxu0
  %v904 = vadd.f32 %v80, %v903
  %v905 = vpop.f32.mrb[0].mxu0
  %v906 = vpop.f32.mrb[0].mxu0
  %v907 = vadd.f32 %v80, %v906
  %v908 = vpop.f32.mrb[0].mxu0
  %909 = vmatprep.mubr.bf16.mxu0 0
  %910 = vmatmul.mubr.bf16.gmra.mrb[0].mxu0 %v788
  %v911 = vpop.f32.mrb[0].mxu0
  %v912 = vadd.f32 %v80, %v911
  %v913 = vpop.f32.mrb[0].mxu0
  %v914 = vpop.f32.mrb[0].mxu0
  %v915 = vadd.f32 %v80, %v914
  %v916 = vpop.f32.mrb[0].mxu0
  %917 = vmatprep.mubr.bf16.mxu0 0
  %918 = vmatmul.mubr.bf16.gmra.mrb[0].mxu0 %v791
  %v919 = vpop.f32.mrb[0].mxu0
  %v920 = vadd.f32 %v80, %v919
  %v921 = vpop.f32.mrb[0].mxu0
  %v922 = vpop.f32.mrb[0].mxu0
  %v923 = vadd.f32 %v80, %v922
  %v924 = vpop.f32.mrb[0].mxu0
  %925 = vmatprep.mubr.bf16.mxu0 0
  %926 = vmatmul.mubr.bf16.gmra.mrb[0].mxu0 %v794
  %v927 = vpop.f32.mrb[0].mxu0
  %v928 = vadd.f32 %v80, %v927
  %v929 = vpop.f32.mrb[0].mxu0
  %v930 = vpop.f32.mrb[0].mxu0
  %v931 = vadd.f32 %v80, %v930
  %v932 = vpop.f32.mrb[0].mxu0
  %933 = vmatprep.mubr.bf16.mxu0 0
  %934 = vmatmul.mubr.bf16.gmra.mrb[0].mxu0 %v797
  %v935 = vpop.f32.mrb[0].mxu0
  %v936 = vadd.f32 %v80, %v935
  %v937 = vpop.f32.mrb[0].mxu0
  %v938 = vpop.f32.mrb[0].mxu0
  %v939 = vadd.f32 %v80, %v938
  %v940 = vpop.f32.mrb[0].mxu0
  %941 = vmatprep.mubr.bf16.mxu0 0
  %942 = vmatmul.mubr.bf16.gmra.mrb[0].mxu0 %v800
  %v943 = vpop.f32.mrb[0].mxu0
  %v944 = vadd.f32 %v80, %v943
  %v945 = vpop.f32.mrb[0].mxu0
  %v946 = vpop.f32.mrb[0].mxu0
  %v947 = vadd.f32 %v80, %v946
  %v948 = vpop.f32.mrb[0].mxu0
  %949 = vmatprep.mubr.bf16.mxu0 0
  %950 = vmatmul.mubr.bf16.gmra.mrb[0].mxu0 %v803
  %v951 = vpop.f32.mrb[0].mxu0
  %v952 = vadd.f32 %v80, %v951
  %v953 = vpop.f32.mrb[0].mxu0
  %v954 = vpop.f32.mrb[0].mxu0
  %v955 = vadd.f32 %v80, %v954
  %v956 = vpop.f32.mrb[0].mxu0
  %957 = vmatprep.mubr.bf16.mxu0 0
  %958 = vmatmul.mubr.bf16.gmra.mrb[0].mxu0 %v806
  %v959 = vpop.f32.mrb[0].mxu0
  %v960 = vadd.f32 %v80, %v959
  %v961 = vpop.f32.mrb[0].mxu0
  %v962 = vpop.f32.mrb[0].mxu0
  %v963 = vadd.f32 %v80, %v962
  %v964 = vpop.f32.mrb[0].mxu0
  %965 = vmatprep.mubr.bf16.mxu0 0
  %966 = vmatmul.mubr.bf16.gmra.mrb[0].mxu0 %v809
  %v967 = vpop.f32.mrb[0].mxu0
  %v968 = vadd.f32 %v80, %v967
  %v969 = vpop.f32.mrb[0].mxu0
  %v970 = vpop.f32.mrb[0].mxu0
  %v971 = vadd.f32 %v80, %v970
  %v972 = vpop.f32.mrb[0].mxu0
  %973 = vmatprep.mubr.bf16.mxu0 0
  %974 = vmatmul.mubr.bf16.gmra.mrb[0].mxu0 %v812
  %v975 = vpop.f32.mrb[0].mxu0
  %v976 = vadd.f32 %v80, %v975
  %v977 = vpop.f32.mrb[0].mxu0
  %v978 = vpop.f32.mrb[0].mxu0
  %v979 = vadd.f32 %v80, %v978
  %v980 = vpop.f32.mrb[0].mxu0
  %981 = vmatprep.mubr.bf16.mxu0 0
  %982 = vmatmul.mubr.bf16.gmra.mrb[0].mxu0 %v815
  %v983 = vpop.f32.mrb[0].mxu0
  %v984 = vadd.f32 %v80, %v983
  %v985 = vpop.f32.mrb[0].mxu0
  %v986 = vpop.f32.mrb[0].mxu0
  %v987 = vadd.f32 %v80, %v986
  %v988 = vpop.f32.mrb[0].mxu0
  %989 = vmatprep.mubr.bf16.mxu0 0
  %990 = vmatmul.mubr.bf16.gmra.mrb[0].mxu0 %v818
  %v991 = vpop.f32.mrb[0].mxu0
  %v992 = vadd.f32 %v80, %v991
  %v993 = vpop.f32.mrb[0].mxu0
  %v994 = vpop.f32.mrb[0].mxu0
  %v995 = vadd.f32 %v80, %v994
  %v996 = vpop.f32.mrb[0].mxu0
  %997 = vmatprep.mubr.bf16.mxu0 0
  %998 = vmatmul.mubr.bf16.gmra.mrb[0].mxu0 %v821
  %v999 = vpop.f32.mrb[0].mxu0
  %v1000 = vadd.f32 %v80, %v999
  %v1001 = vpop.f32.mrb[0].mxu0
  %v1002 = vpop.f32.mrb[0].mxu0
  %v1003 = vadd.f32 %v80, %v1002
  %v1004 = vpop.f32.mrb[0].mxu0
  %1005 = vmatprep.mubr.bf16.mxu0 0
  %1006 = vmatmul.mubr.bf16.gmra.mrb[0].mxu0 %v824
  %v1007 = vpop.f32.mrb[0].mxu0
  %v1008 = vadd.f32 %v80, %v1007
  %v1009 = vpop.f32.mrb[0].mxu0
  %v1010 = vpop.f32.mrb[0].mxu0
  %v1011 = vadd.f32 %v80, %v1010
  %v1012 = vpop.f32.mrb[0].mxu0
  %1013 = vmatprep.mubr.bf16.mxu0 0
  %1014 = vmatmul.mubr.bf16.gmra.mrb[0].mxu0 %v827
  %v1015 = vpop.f32.mrb[0].mxu0
  %v1016 = vadd.f32 %v80, %v1015
  %v1017 = vpop.f32.mrb[0].mxu0
  %v1018 = vpop.f32.mrb[0].mxu0
  %v1019 = vadd.f32 %v80, %v1018
  %v1020 = vpop.f32.mrb[0].mxu0
  %1021 = vmatprep.mubr.bf16.mxu0 0
  %1022 = vmatmul.mubr.bf16.gmra.mrb[0].mxu0 %v830
  %v1023 = vpop.f32.mrb[0].mxu0
  %v1024 = vadd.f32 %v80, %v1023
  %v1025 = vpop.f32.mrb[0].mxu0
  %v1026 = vpop.f32.mrb[0].mxu0
  %v1027 = vadd.f32 %v80, %v1026
  %v1028 = vpop.f32.mrb[0].mxu0
  %1029 = vmatprep.mubr.bf16.mxu0 0
  %1030 = vmatmul.mubr.bf16.gmra.mrb[0].mxu0 %v833
  %v1031 = vpop.f32.mrb[0].mxu0
  %v1032 = vadd.f32 %v80, %v1031
  %v1033 = vpop.f32.mrb[0].mxu0
  %v1034 = vpop.f32.mrb[0].mxu0
  %v1035 = vadd.f32 %v80, %v1034
  %v1036 = vpop.f32.mrb[0].mxu0
  %1037 = vmatprep.mubr.bf16.mxu0 0
  %1038 = vmatmul.mubr.bf16.gmra.mrb[0].mxu0 %v836
  %v1039 = vpop.f32.mrb[0].mxu0
  %v1040 = vadd.f32 %v80, %v1039
  %v1041 = vpop.f32.mrb[0].mxu0
  %v1042 = vpop.f32.mrb[0].mxu0
  %v1043 = vadd.f32 %v80, %v1042
  %v1044 = vpop.f32.mrb[0].mxu0
  %1045 = vmatprep.mubr.bf16.mxu0 0
  %1046 = vmatmul.mubr.bf16.gmra.mrb[0].mxu0 %v839
  %v1047 = vpop.f32.mrb[0].mxu0
  %v1048 = vadd.f32 %v80, %v1047
  %v1049 = vpop.f32.mrb[0].mxu0
  %v1050 = vpop.f32.mrb[0].mxu0
  %v1051 = vadd.f32 %v80, %v1050
  %v1052 = vpop.f32.mrb[0].mxu0
  %1053 = vmatprep.mubr.bf16.mxu0 0
  %1054 = vmatmul.mubr.bf16.gmra.mrb[0].mxu0 %v842
  %v1055 = vpop.f32.mrb[0].mxu0
  %v1056 = vadd.f32 %v80, %v1055
  %v1057 = vpop.f32.mrb[0].mxu0
  %v1058 = vpop.f32.mrb[0].mxu0
  %v1059 = vadd.f32 %v80, %v1058
  %v1060 = vpop.f32.mrb[0].mxu0
  %1061 = vmatprep.mubr.bf16.mxu0 0
  %1062 = vmatmul.mubr.bf16.gmra.mrb[0].mxu0 %v845
  %v1063 = vpop.f32.mrb[0].mxu0
  %v1064 = vadd.f32 %v80, %v1063
  %v1065 = vpop.f32.mrb[0].mxu0
  %v1066 = vpop.f32.mrb[0].mxu0
  %v1067 = vadd.f32 %v80, %v1066
  %v1068 = vpop.f32.mrb[0].mxu0
  %1069 = vmatprep.mubr.bf16.mxu0 0
  %1070 = vmatmul.mubr.bf16.gmra.mrb[0].mxu0 %v848
  %v1071 = vpop.f32.mrb[0].mxu0
  %v1072 = vadd.f32 %v80, %v1071
  %v1073 = vpop.f32.mrb[0].mxu0
  %v1074 = vpop.f32.mrb[0].mxu0
  %v1075 = vadd.f32 %v80, %v1074
  %v1076 = vpop.f32.mrb[0].mxu0
  %1077 = vmatprep.mubr.bf16.mxu0 0
  %1078 = vmatmul.mubr.bf16.gmra.mrb[0].mxu0 %v851
  %v1079 = vpop.f32.mrb[0].mxu0
  %v1080 = vadd.f32 %v80, %v1079
  %v1081 = vpop.f32.mrb[0].mxu0
  %v1082 = vpop.f32.mrb[0].mxu0
  %v1083 = vadd.f32 %v80, %v1082
  %v1084 = vpop.f32.mrb[0].mxu0
  %1085 = vdwg.mxu0
  %v1086 = vmax.f32 %v888, 0.0
  %v1087 = vmax.f32 %v891, 0.0
  %v1088 = vmax.f32 %v896, 0.0
  %v1089 = vmax.f32 %v899, 0.0
  %v1090 = vmax.f32 %v904, 0.0
  %v1091 = vmax.f32 %v907, 0.0
  %v1092 = vmax.f32 %v912, 0.0
  %v1093 = vmax.f32 %v915, 0.0
  %v1094 = vmax.f32 %v920, 0.0
  %v1095 = vmax.f32 %v923, 0.0
  %v1096 = vmax.f32 %v928, 0.0
  %v1097 = vmax.f32 %v931, 0.0
  %v1098 = vmax.f32 %v936, 0.0
  %v1099 = vmax.f32 %v939, 0.0
  %v1100 = vmax.f32 %v944, 0.0
  %v1101 = vmax.f32 %v947, 0.0
  %v1102 = vmax.f32 %v952, 0.0
  %v1103 = vmax.f32 %v955, 0.0
  %v1104 = vmax.f32 %v960, 0.0
  %v1105 = vmax.f32 %v963, 0.0
  %v1106 = vmax.f32 %v968, 0.0
  %v1107 = vmax.f32 %v971, 0.0
  %v1108 = vmax.f32 %v976, 0.0
  %v1109 = vmax.f32 %v979, 0.0
  %v1110 = vmax.f32 %v984, 0.0
  %v1111 = vmax.f32 %v987, 0.0
  %v1112 = vmax.f32 %v992, 0.0
  %v1113 = vmax.f32 %v995, 0.0
  %v1114 = vmax.f32 %v1000, 0.0
  %v1115 = vmax.f32 %v1003, 0.0
  %v1116 = vmax.f32 %v1008, 0.0
  %v1117 = vmax.f32 %v1011, 0.0
  %v1118 = vmax.f32 %v1016, 0.0
  %v1119 = vmax.f32 %v1019, 0.0
  %v1120 = vmax.f32 %v1024, 0.0
  %v1121 = vmax.f32 %v1027, 0.0
  %v1122 = vmax.f32 %v1032, 0.0
  %v1123 = vmax.f32 %v1035, 0.0
  %v1124 = vmax.f32 %v1040, 0.0
  %v1125 = vmax.f32 %v1043, 0.0
  %v1126 = vmax.f32 %v1048, 0.0
  %v1127 = vmax.f32 %v1051, 0.0
  %v1128 = vmax.f32 %v1056, 0.0
  %v1129 = vmax.f32 %v1059, 0.0
  %v1130 = vmax.f32 %v1064, 0.0
  %v1131 = vmax.f32 %v1067, 0.0
  %v1132 = vmax.f32 %v1072, 0.0
  %v1133 = vmax.f32 %v1075, 0.0
  %v1134 = vmax.f32 %v1080, 0.0
  %v1135 = vmax.f32 %v1083, 0.0
  %v1136 = vmax.f32 %v552, %v1086
  %v1137 = vmax.f32 %v553, %v1087
  %v1138 = vmax.f32 %v554, %v1088
  %v1139 = vmax.f32 %v555, %v1089
  %v1140 = vmax.f32 %v556, %v1090
  %v1141 = vmax.f32 %v557, %v1091
  %v1142 = vmax.f32 %v558, %v1092
  %v1143 = vmax.f32 %v559, %v1093
  %v1144 = vmax.f32 %v560, %v1094
  %v1145 = vmax.f32 %v561, %v1095
  %v1146 = vmax.f32 %v562, %v1096
  %v1147 = vmax.f32 %v563, %v1097
  %v1148 = vmax.f32 %v564, %v1098
  %v1149 = vmax.f32 %v565, %v1099
  %v1150 = vmax.f32 %v566, %v1100
  %v1151 = vmax.f32 %v567, %v1101
  %v1152 = vmax.f32 %v568, %v1102
  %v1153 = vmax.f32 %v569, %v1103
  %v1154 = vmax.f32 %v570, %v1104
  %v1155 = vmax.f32 %v571, %v1105
  %v1156 = vmax.f32 %v572, %v1106
  %v1157 = vmax.f32 %v573, %v1107
  %v1158 = vmax.f32 %v574, %v1108
  %v1159 = vmax.f32 %v575, %v1109
  %v1160 = vmax.f32 %v576, %v1110
  %v1161 = vmax.f32 %v577, %v1111
  %v1162 = vmax.f32 %v578, %v1112
  %v1163 = vmax.f32 %v579, %v1113
  %v1164 = vmax.f32 %v580, %v1114
  %v1165 = vmax.f32 %v581, %v1115
  %v1166 = vmax.f32 %v582, %v1116
  %v1167 = vmax.f32 %v583, %v1117
  %v1168 = vmax.f32 %v584, %v1118
  %v1169 = vmax.f32 %v585, %v1119
  %v1170 = vmax.f32 %v586, %v1120
  %v1171 = vmax.f32 %v587, %v1121
  %v1172 = vmax.f32 %v588, %v1122
  %v1173 = vmax.f32 %v589, %v1123
  %v1174 = vmax.f32 %v590, %v1124
  %v1175 = vmax.f32 %v591, %v1125
  %v1176 = vmax.f32 %v592, %v1126
  %v1177 = vmax.f32 %v593, %v1127
  %v1178 = vmax.f32 %v594, %v1128
  %v1179 = vmax.f32 %v595, %v1129
  %v1180 = vmax.f32 %v596, %v1130
  %v1181 = vmax.f32 %v597, %v1131
  %v1182 = vmax.f32 %v598, %v1132
  %v1183 = vmax.f32 %v599, %v1133
  %v1184 = vmax.f32 %v600, %v1134
  %v1185 = vmax.f32 %v601, %v1135
  %s1186 = scalar_lea.vmem %s0, 400
  %v1187 = vld [vmem:[%s1186] sm:$0xf]
  %v1188 = vld [vmem:[%s1186 + $0x4] sm:$0xf]
  %v1189 = vld [vmem:[%s1186 + $0x8] sm:$0xf]
  %v1190 = vld [vmem:[%s1186 + $0xc] sm:$0xf]
  %v1191 = vld [vmem:[%s1186 + $0x10] sm:$0xf]
  %v1192 = vld [vmem:[%s1186 + $0x14] sm:$0xf]
  %v1193 = vld [vmem:[%s1186 + $0x18] sm:$0xf]
  %v1194 = vld [vmem:[%s1186 + $0x1c] sm:$0xf]
  %v1195 = vld [vmem:[%s1186 + $0x20] sm:$0xf]
  %v1196 = vld [vmem:[%s1186 + $0x24] sm:$0xf]
  %v1197 = vld [vmem:[%s1186 + $0x28] sm:$0xf]
  %v1198 = vld [vmem:[%s1186 + $0x2c] sm:$0xf]
  %v1199 = vld [vmem:[%s1186 + $0x30] sm:$0xf]
  %v1200 = vld [vmem:[%s1186 + $0x34] sm:$0xf]
  %v1201 = vld [vmem:[%s1186 + $0x38] sm:$0xf]
  %v1202 = vld [vmem:[%s1186 + $0x3c] sm:$0xf]
  %v1203 = vld [vmem:[%s1186 + $0x40] sm:$0xf]
  %v1204 = vld [vmem:[%s1186 + $0x44] sm:$0xf]
  %v1205 = vld [vmem:[%s1186 + $0x48] sm:$0xf]
  %v1206 = vld [vmem:[%s1186 + $0x4c] sm:$0xf]
  %v1207 = vld [vmem:[%s1186 + $0x50] sm:$0xf]
  %v1208 = vld [vmem:[%s1186 + $0x54] sm:$0xf]
  %v1209 = vld [vmem:[%s1186 + $0x58] sm:$0xf]
  %v1210 = vld [vmem:[%s1186 + $0x5c] sm:$0xf]
  %v1211 = vld [vmem:[%s1186 + $0x60] sm:$0xf]
  %v1212 = vld [vmem:[%s1186 + $0x64] sm:$0xf]
  %v1213 = vld [vmem:[%s1186 + $0x68] sm:$0xf]
  %v1214 = vld [vmem:[%s1186 + $0x6c] sm:$0xf]
  %v1215 = vld [vmem:[%s1186 + $0x70] sm:$0xf]
  %v1216 = vld [vmem:[%s1186 + $0x74] sm:$0xf]
  %v1217 = vld [vmem:[%s1186 + $0x78] sm:$0xf]
  %v1218 = vld [vmem:[%s1186 + $0x7c] sm:$0xf]
  %v1219 = vld [vmem:[%s1186 + $0x80] sm:$0xf]
  %v1220 = vld [vmem:[%s1186 + $0x84] sm:$0xf]
  %v1221 = vld [vmem:[%s1186 + $0x88] sm:$0xf]
  %v1222 = vld [vmem:[%s1186 + $0x8c] sm:$0xf]
  %v1223 = vld [vmem:[%s1186 + $0x90] sm:$0xf]
  %v1224 = vld [vmem:[%s1186 + $0x94] sm:$0xf]
  %v1225 = vld [vmem:[%s1186 + $0x98] sm:$0xf]
  %v1226 = vld [vmem:[%s1186 + $0x9c] sm:$0xf]
  %v1227 = vld [vmem:[%s1186 + $0xa0] sm:$0xf]
  %v1228 = vld [vmem:[%s1186 + $0xa4] sm:$0xf]
  %v1229 = vld [vmem:[%s1186 + $0xa8] sm:$0xf]
  %v1230 = vld [vmem:[%s1186 + $0xac] sm:$0xf]
  %v1231 = vld [vmem:[%s1186 + $0xb0] sm:$0xf]
  %v1232 = vld [vmem:[%s1186 + $0xb4] sm:$0xf]
  %v1233 = vld [vmem:[%s1186 + $0xb8] sm:$0xf]
  %v1234 = vld [vmem:[%s1186 + $0xbc] sm:$0xf]
  %v1235 = vld [vmem:[%s1186 + $0xc0] sm:$0xf]
  %v1236 = vld [vmem:[%s1186 + $0xc4] sm:$0xf]
  %v1287 = vunpack.c.l.b16 %v1187
  %v1288 = vunpack.c.l.b16 %v1188
  %v1289 = vunpack.c.l.b16 %v1189
  %v1290 = vunpack.c.l.b16 %v1190
  %v1291 = vunpack.c.l.b16 %v1191
  %v1292 = vunpack.c.l.b16 %v1192
  %v1293 = vunpack.c.l.b16 %v1193
  %v1294 = vunpack.c.l.b16 %v1194
  %v1295 = vunpack.c.l.b16 %v1195
  %v1296 = vunpack.c.l.b16 %v1196
  %v1297 = vunpack.c.l.b16 %v1197
  %v1298 = vunpack.c.l.b16 %v1198
  %v1299 = vunpack.c.l.b16 %v1199
  %v1300 = vunpack.c.l.b16 %v1200
  %v1301 = vunpack.c.l.b16 %v1201
  %v1302 = vunpack.c.l.b16 %v1202
  %v1303 = vunpack.c.l.b16 %v1203
  %v1304 = vunpack.c.l.b16 %v1204
  %v1305 = vunpack.c.l.b16 %v1205
  %v1306 = vunpack.c.l.b16 %v1206
  %v1307 = vunpack.c.l.b16 %v1207
  %v1308 = vunpack.c.l.b16 %v1208
  %v1309 = vunpack.c.l.b16 %v1209
  %v1310 = vunpack.c.l.b16 %v1210
  %v1311 = vunpack.c.l.b16 %v1211
  %v1312 = vunpack.c.l.b16 %v1212
  %v1313 = vunpack.c.l.b16 %v1213
  %v1314 = vunpack.c.l.b16 %v1214
  %v1315 = vunpack.c.l.b16 %v1215
  %v1316 = vunpack.c.l.b16 %v1216
  %v1317 = vunpack.c.l.b16 %v1217
  %v1318 = vunpack.c.l.b16 %v1218
  %v1319 = vunpack.c.l.b16 %v1219
  %v1320 = vunpack.c.l.b16 %v1220
  %v1321 = vunpack.c.l.b16 %v1221
  %v1322 = vunpack.c.l.b16 %v1222
  %v1323 = vunpack.c.l.b16 %v1223
  %v1324 = vunpack.c.l.b16 %v1224
  %v1325 = vunpack.c.l.b16 %v1225
  %v1326 = vunpack.c.l.b16 %v1226
  %v1327 = vunpack.c.l.b16 %v1227
  %v1328 = vunpack.c.l.b16 %v1228
  %v1329 = vunpack.c.l.b16 %v1229
  %v1330 = vunpack.c.l.b16 %v1230
  %v1331 = vunpack.c.l.b16 %v1231
  %v1332 = vunpack.c.l.b16 %v1232
  %v1333 = vunpack.c.l.b16 %v1233
  %v1334 = vunpack.c.l.b16 %v1234
  %v1335 = vunpack.c.l.b16 %v1235
  %v1336 = vunpack.c.l.b16 %v1236
  %v1337 = vpack.c.b16 %v1288, %v1287
  %v1338 = vpack.c.b16 %v1290, %v1289
  %v1339 = vpack.c.b16 %v1292, %v1291
  %v1340 = vpack.c.b16 %v1294, %v1293
  %v1341 = vpack.c.b16 %v1296, %v1295
  %v1342 = vpack.c.b16 %v1298, %v1297
  %v1343 = vpack.c.b16 %v1300, %v1299
  %v1344 = vpack.c.b16 %v1302, %v1301
  %v1345 = vpack.c.b16 %v1304, %v1303
  %v1346 = vpack.c.b16 %v1306, %v1305
  %v1347 = vpack.c.b16 %v1308, %v1307
  %v1348 = vpack.c.b16 %v1310, %v1309
  %v1349 = vpack.c.b16 %v1312, %v1311
  %v1350 = vpack.c.b16 %v1314, %v1313
  %v1351 = vpack.c.b16 %v1316, %v1315
  %v1352 = vpack.c.b16 %v1318, %v1317
  %v1353 = vpack.c.b16 %v1320, %v1319
  %v1354 = vpack.c.b16 %v1322, %v1321
  %v1355 = vpack.c.b16 %v1324, %v1323
  %v1356 = vpack.c.b16 %v1326, %v1325
  %v1357 = vpack.c.b16 %v1328, %v1327
  %v1358 = vpack.c.b16 %v1330, %v1329
  %v1359 = vpack.c.b16 %v1332, %v1331
  %v1360 = vpack.c.b16 %v1334, %v1333
  %v1361 = vpack.c.b16 %v1336, %v1335
  %v1363 = vsel %vm236, %v1337, 0
  %v1366 = vsel %vm236, %v1338, 0
  %v1369 = vsel %vm236, %v1339, 0
  %v1372 = vsel %vm236, %v1340, 0
  %v1375 = vsel %vm236, %v1341, 0
  %v1378 = vsel %vm236, %v1342, 0
  %v1381 = vsel %vm236, %v1343, 0
  %v1384 = vsel %vm236, %v1344, 0
  %v1387 = vsel %vm236, %v1345, 0
  %v1390 = vsel %vm236, %v1346, 0
  %v1393 = vsel %vm236, %v1347, 0
  %v1396 = vsel %vm236, %v1348, 0
  %v1399 = vsel %vm236, %v1349, 0
  %v1402 = vsel %vm236, %v1350, 0
  %v1405 = vsel %vm236, %v1351, 0
  %v1408 = vsel %vm236, %v1352, 0
  %v1411 = vsel %vm236, %v1353, 0
  %v1414 = vsel %vm236, %v1354, 0
  %v1417 = vsel %vm236, %v1355, 0
  %v1420 = vsel %vm236, %v1356, 0
  %v1423 = vsel %vm236, %v1357, 0
  %v1426 = vsel %vm236, %v1358, 0
  %v1429 = vsel %vm236, %v1359, 0
  %v1432 = vsel %vm236, %v1360, 0
  %v1435 = vsel %vm236, %v1361, 0
  %1437 = vmatprep.subr.bf16.mxu0 0
  %1438 = vmatpush1.bf16.msra.mxu0 %v227
  %1439 = vmatprep.subr.bf16.mxu0 0
  %1440 = vmatpush1.bf16.msra.mxu0 %v228
  %1441 = vmatprep.subr.bf16.mxu0 0
  %1442 = vmatpush1.bf16.msra.mxu0 %v229
  %1443 = vmatprep.subr.bf16.mxu0 0
  %1444 = vmatpush1.bf16.msra.mxu0 %v230
  %1445 = vmatprep.subr.bf16.mxu0 0
  %1446 = vmatpush1.bf16.msra.mxu0 %v317
  %1447 = vmatprep.subr.bf16.mxu0 0
  %1448 = vmatpush1.bf16.msra.mxu0 0
  %1449 = vmatprep.subr.bf16.mxu0 0
  %1450 = vmatpush1.bf16.msra.mxu0 0
  %1451 = vmatprep.subr.bf16.mxu0 0
  %1452 = vmatpush1.bf16.msra.mxu0 0
  %1453 = vmatprep.subr.bf16.mxu0 0
  %1454 = vmatpush1.bf16.msra.mxu0 0
  %1455 = vmatprep.subr.bf16.mxu0 0
  %1456 = vmatpush1.bf16.msra.mxu0 0
  %1457 = vmatprep.subr.bf16.mxu0 0
  %1458 = vmatpush1.bf16.msra.mxu0 0
  %1459 = vmatprep.subr.bf16.mxu0 0
  %1460 = vmatpush1.bf16.msra.mxu0 0
  %1461 = vmatprep.subr.bf16.mxu0 0
  %1462 = vmatpush1.bf16.msra.mxu0 0
  %1463 = vmatprep.subr.bf16.mxu0 0
  %1464 = vmatpush1.bf16.msra.mxu0 0
  %1465 = vmatprep.subr.bf16.mxu0 0
  %1466 = vmatpush1.bf16.msra.mxu0 0
  %1467 = vmatprep.subr.bf16.mxu0 0
  %1468 = vmatpush1.bf16.msra.mxu0 0
  %1469 = vmatprep.mubr.bf16.mxu0 0
  %1470 = vmatmul.mubr.bf16.gmra.mrb[0].mxu0 %v1363
  %v1471 = vpop.f32.mrb[0].mxu0
  %v1472 = vadd.f32 %v80, %v1471
  %v1473 = vpop.f32.mrb[0].mxu0
  %v1474 = vpop.f32.mrb[0].mxu0
  %v1475 = vadd.f32 %v80, %v1474
  %v1476 = vpop.f32.mrb[0].mxu0
  %1477 = vmatprep.mubr.bf16.mxu0 0
  %1478 = vmatmul.mubr.bf16.gmra.mrb[0].mxu0 %v1366
  %v1479 = vpop.f32.mrb[0].mxu0
  %v1480 = vadd.f32 %v80, %v1479
  %v1481 = vpop.f32.mrb[0].mxu0
  %v1482 = vpop.f32.mrb[0].mxu0
  %v1483 = vadd.f32 %v80, %v1482
  %v1484 = vpop.f32.mrb[0].mxu0
  %1485 = vmatprep.mubr.bf16.mxu0 0
  %1486 = vmatmul.mubr.bf16.gmra.mrb[0].mxu0 %v1369
  %v1487 = vpop.f32.mrb[0].mxu0
  %v1488 = vadd.f32 %v80, %v1487
  %v1489 = vpop.f32.mrb[0].mxu0
  %v1490 = vpop.f32.mrb[0].mxu0
  %v1491 = vadd.f32 %v80, %v1490
  %v1492 = vpop.f32.mrb[0].mxu0
  %1493 = vmatprep.mubr.bf16.mxu0 0
  %1494 = vmatmul.mubr.bf16.gmra.mrb[0].mxu0 %v1372
  %v1495 = vpop.f32.mrb[0].mxu0
  %v1496 = vadd.f32 %v80, %v1495
  %v1497 = vpop.f32.mrb[0].mxu0
  %v1498 = vpop.f32.mrb[0].mxu0
  %v1499 = vadd.f32 %v80, %v1498
  %v1500 = vpop.f32.mrb[0].mxu0
  %1501 = vmatprep.mubr.bf16.mxu0 0
  %1502 = vmatmul.mubr.bf16.gmra.mrb[0].mxu0 %v1375
  %v1503 = vpop.f32.mrb[0].mxu0
  %v1504 = vadd.f32 %v80, %v1503
  %v1505 = vpop.f32.mrb[0].mxu0
  %v1506 = vpop.f32.mrb[0].mxu0
  %v1507 = vadd.f32 %v80, %v1506
  %v1508 = vpop.f32.mrb[0].mxu0
  %1509 = vmatprep.mubr.bf16.mxu0 0
  %1510 = vmatmul.mubr.bf16.gmra.mrb[0].mxu0 %v1378
  %v1511 = vpop.f32.mrb[0].mxu0
  %v1512 = vadd.f32 %v80, %v1511
  %v1513 = vpop.f32.mrb[0].mxu0
  %v1514 = vpop.f32.mrb[0].mxu0
  %v1515 = vadd.f32 %v80, %v1514
  %v1516 = vpop.f32.mrb[0].mxu0
  %1517 = vmatprep.mubr.bf16.mxu0 0
  %1518 = vmatmul.mubr.bf16.gmra.mrb[0].mxu0 %v1381
  %v1519 = vpop.f32.mrb[0].mxu0
  %v1520 = vadd.f32 %v80, %v1519
  %v1521 = vpop.f32.mrb[0].mxu0
  %v1522 = vpop.f32.mrb[0].mxu0
  %v1523 = vadd.f32 %v80, %v1522
  %v1524 = vpop.f32.mrb[0].mxu0
  %1525 = vmatprep.mubr.bf16.mxu0 0
  %1526 = vmatmul.mubr.bf16.gmra.mrb[0].mxu0 %v1384
  %v1527 = vpop.f32.mrb[0].mxu0
  %v1528 = vadd.f32 %v80, %v1527
  %v1529 = vpop.f32.mrb[0].mxu0
  %v1530 = vpop.f32.mrb[0].mxu0
  %v1531 = vadd.f32 %v80, %v1530
  %v1532 = vpop.f32.mrb[0].mxu0
  %1533 = vmatprep.mubr.bf16.mxu0 0
  %1534 = vmatmul.mubr.bf16.gmra.mrb[0].mxu0 %v1387
  %v1535 = vpop.f32.mrb[0].mxu0
  %v1536 = vadd.f32 %v80, %v1535
  %v1537 = vpop.f32.mrb[0].mxu0
  %v1538 = vpop.f32.mrb[0].mxu0
  %v1539 = vadd.f32 %v80, %v1538
  %v1540 = vpop.f32.mrb[0].mxu0
  %1541 = vmatprep.mubr.bf16.mxu0 0
  %1542 = vmatmul.mubr.bf16.gmra.mrb[0].mxu0 %v1390
  %v1543 = vpop.f32.mrb[0].mxu0
  %v1544 = vadd.f32 %v80, %v1543
  %v1545 = vpop.f32.mrb[0].mxu0
  %v1546 = vpop.f32.mrb[0].mxu0
  %v1547 = vadd.f32 %v80, %v1546
  %v1548 = vpop.f32.mrb[0].mxu0
  %1549 = vmatprep.mubr.bf16.mxu0 0
  %1550 = vmatmul.mubr.bf16.gmra.mrb[0].mxu0 %v1393
  %v1551 = vpop.f32.mrb[0].mxu0
  %v1552 = vadd.f32 %v80, %v1551
  %v1553 = vpop.f32.mrb[0].mxu0
  %v1554 = vpop.f32.mrb[0].mxu0
  %v1555 = vadd.f32 %v80, %v1554
  %v1556 = vpop.f32.mrb[0].mxu0
  %1557 = vmatprep.mubr.bf16.mxu0 0
  %1558 = vmatmul.mubr.bf16.gmra.mrb[0].mxu0 %v1396
  %v1559 = vpop.f32.mrb[0].mxu0
  %v1560 = vadd.f32 %v80, %v1559
  %v1561 = vpop.f32.mrb[0].mxu0
  %v1562 = vpop.f32.mrb[0].mxu0
  %v1563 = vadd.f32 %v80, %v1562
  %v1564 = vpop.f32.mrb[0].mxu0
  %1565 = vmatprep.mubr.bf16.mxu0 0
  %1566 = vmatmul.mubr.bf16.gmra.mrb[0].mxu0 %v1399
  %v1567 = vpop.f32.mrb[0].mxu0
  %v1568 = vadd.f32 %v80, %v1567
  %v1569 = vpop.f32.mrb[0].mxu0
  %v1570 = vpop.f32.mrb[0].mxu0
  %v1571 = vadd.f32 %v80, %v1570
  %v1572 = vpop.f32.mrb[0].mxu0
  %1573 = vmatprep.mubr.bf16.mxu0 0
  %1574 = vmatmul.mubr.bf16.gmra.mrb[0].mxu0 %v1402
  %v1575 = vpop.f32.mrb[0].mxu0
  %v1576 = vadd.f32 %v80, %v1575
  %v1577 = vpop.f32.mrb[0].mxu0
  %v1578 = vpop.f32.mrb[0].mxu0
  %v1579 = vadd.f32 %v80, %v1578
  %v1580 = vpop.f32.mrb[0].mxu0
  %1581 = vmatprep.mubr.bf16.mxu0 0
  %1582 = vmatmul.mubr.bf16.gmra.mrb[0].mxu0 %v1405
  %v1583 = vpop.f32.mrb[0].mxu0
  %v1584 = vadd.f32 %v80, %v1583
  %v1585 = vpop.f32.mrb[0].mxu0
  %v1586 = vpop.f32.mrb[0].mxu0
  %v1587 = vadd.f32 %v80, %v1586
  %v1588 = vpop.f32.mrb[0].mxu0
  %1589 = vmatprep.mubr.bf16.mxu0 0
  %1590 = vmatmul.mubr.bf16.gmra.mrb[0].mxu0 %v1408
  %v1591 = vpop.f32.mrb[0].mxu0
  %v1592 = vadd.f32 %v80, %v1591
  %v1593 = vpop.f32.mrb[0].mxu0
  %v1594 = vpop.f32.mrb[0].mxu0
  %v1595 = vadd.f32 %v80, %v1594
  %v1596 = vpop.f32.mrb[0].mxu0
  %1597 = vmatprep.mubr.bf16.mxu0 0
  %1598 = vmatmul.mubr.bf16.gmra.mrb[0].mxu0 %v1411
  %v1599 = vpop.f32.mrb[0].mxu0
  %v1600 = vadd.f32 %v80, %v1599
  %v1601 = vpop.f32.mrb[0].mxu0
  %v1602 = vpop.f32.mrb[0].mxu0
  %v1603 = vadd.f32 %v80, %v1602
  %v1604 = vpop.f32.mrb[0].mxu0
  %1605 = vmatprep.mubr.bf16.mxu0 0
  %1606 = vmatmul.mubr.bf16.gmra.mrb[0].mxu0 %v1414
  %v1607 = vpop.f32.mrb[0].mxu0
  %v1608 = vadd.f32 %v80, %v1607
  %v1609 = vpop.f32.mrb[0].mxu0
  %v1610 = vpop.f32.mrb[0].mxu0
  %v1611 = vadd.f32 %v80, %v1610
  %v1612 = vpop.f32.mrb[0].mxu0
  %1613 = vmatprep.mubr.bf16.mxu0 0
  %1614 = vmatmul.mubr.bf16.gmra.mrb[0].mxu0 %v1417
  %v1615 = vpop.f32.mrb[0].mxu0
  %v1616 = vadd.f32 %v80, %v1615
  %v1617 = vpop.f32.mrb[0].mxu0
  %v1618 = vpop.f32.mrb[0].mxu0
  %v1619 = vadd.f32 %v80, %v1618
  %v1620 = vpop.f32.mrb[0].mxu0
  %1621 = vmatprep.mubr.bf16.mxu0 0
  %1622 = vmatmul.mubr.bf16.gmra.mrb[0].mxu0 %v1420
  %v1623 = vpop.f32.mrb[0].mxu0
  %v1624 = vadd.f32 %v80, %v1623
  %v1625 = vpop.f32.mrb[0].mxu0
  %v1626 = vpop.f32.mrb[0].mxu0
  %v1627 = vadd.f32 %v80, %v1626
  %v1628 = vpop.f32.mrb[0].mxu0
  %1629 = vmatprep.mubr.bf16.mxu0 0
  %1630 = vmatmul.mubr.bf16.gmra.mrb[0].mxu0 %v1423
  %v1631 = vpop.f32.mrb[0].mxu0
  %v1632 = vadd.f32 %v80, %v1631
  %v1633 = vpop.f32.mrb[0].mxu0
  %v1634 = vpop.f32.mrb[0].mxu0
  %v1635 = vadd.f32 %v80, %v1634
  %v1636 = vpop.f32.mrb[0].mxu0
  %1637 = vmatprep.mubr.bf16.mxu0 0
  %1638 = vmatmul.mubr.bf16.gmra.mrb[0].mxu0 %v1426
  %v1639 = vpop.f32.mrb[0].mxu0
  %v1640 = vadd.f32 %v80, %v1639
  %v1641 = vpop.f32.mrb[0].mxu0
  %v1642 = vpop.f32.mrb[0].mxu0
  %v1643 = vadd.f32 %v80, %v1642
  %v1644 = vpop.f32.mrb[0].mxu0
  %1645 = vmatprep.mubr.bf16.mxu0 0
  %1646 = vmatmul.mubr.bf16.gmra.mrb[0].mxu0 %v1429
  %v1647 = vpop.f32.mrb[0].mxu0
  %v1648 = vadd.f32 %v80, %v1647
  %v1649 = vpop.f32.mrb[0].mxu0
  %v1650 = vpop.f32.mrb[0].mxu0
  %v1651 = vadd.f32 %v80, %v1650
  %v1652 = vpop.f32.mrb[0].mxu0
  %1653 = vmatprep.mubr.bf16.mxu0 0
  %1654 = vmatmul.mubr.bf16.gmra.mrb[0].mxu0 %v1432
  %v1655 = vpop.f32.mrb[0].mxu0
  %v1656 = vadd.f32 %v80, %v1655
  %v1657 = vpop.f32.mrb[0].mxu0
  %v1658 = vpop.f32.mrb[0].mxu0
  %v1659 = vadd.f32 %v80, %v1658
  %v1660 = vpop.f32.mrb[0].mxu0
  %1661 = vmatprep.mubr.bf16.mxu0 0
  %1662 = vmatmul.mubr.bf16.gmra.mrb[0].mxu0 %v1435
  %v1663 = vpop.f32.mrb[0].mxu0
  %v1664 = vadd.f32 %v80, %v1663
  %v1665 = vpop.f32.mrb[0].mxu0
  %v1666 = vpop.f32.mrb[0].mxu0
  %v1667 = vadd.f32 %v80, %v1666
  %v1668 = vpop.f32.mrb[0].mxu0
  %1669 = vdwg.mxu0
  %v1670 = vmax.f32 %v1472, 0.0
  %v1671 = vmax.f32 %v1475, 0.0
  %v1672 = vmax.f32 %v1480, 0.0
  %v1673 = vmax.f32 %v1483, 0.0
  %v1674 = vmax.f32 %v1488, 0.0
  %v1675 = vmax.f32 %v1491, 0.0
  %v1676 = vmax.f32 %v1496, 0.0
  %v1677 = vmax.f32 %v1499, 0.0
  %v1678 = vmax.f32 %v1504, 0.0
  %v1679 = vmax.f32 %v1507, 0.0
  %v1680 = vmax.f32 %v1512, 0.0
  %v1681 = vmax.f32 %v1515, 0.0
  %v1682 = vmax.f32 %v1520, 0.0
  %v1683 = vmax.f32 %v1523, 0.0
  %v1684 = vmax.f32 %v1528, 0.0
  %v1685 = vmax.f32 %v1531, 0.0
  %v1686 = vmax.f32 %v1536, 0.0
  %v1687 = vmax.f32 %v1539, 0.0
  %v1688 = vmax.f32 %v1544, 0.0
  %v1689 = vmax.f32 %v1547, 0.0
  %v1690 = vmax.f32 %v1552, 0.0
  %v1691 = vmax.f32 %v1555, 0.0
  %v1692 = vmax.f32 %v1560, 0.0
  %v1693 = vmax.f32 %v1563, 0.0
  %v1694 = vmax.f32 %v1568, 0.0
  %v1695 = vmax.f32 %v1571, 0.0
  %v1696 = vmax.f32 %v1576, 0.0
  %v1697 = vmax.f32 %v1579, 0.0
  %v1698 = vmax.f32 %v1584, 0.0
  %v1699 = vmax.f32 %v1587, 0.0
  %v1700 = vmax.f32 %v1592, 0.0
  %v1701 = vmax.f32 %v1595, 0.0
  %v1702 = vmax.f32 %v1600, 0.0
  %v1703 = vmax.f32 %v1603, 0.0
  %v1704 = vmax.f32 %v1608, 0.0
  %v1705 = vmax.f32 %v1611, 0.0
  %v1706 = vmax.f32 %v1616, 0.0
  %v1707 = vmax.f32 %v1619, 0.0
  %v1708 = vmax.f32 %v1624, 0.0
  %v1709 = vmax.f32 %v1627, 0.0
  %v1710 = vmax.f32 %v1632, 0.0
  %v1711 = vmax.f32 %v1635, 0.0
  %v1712 = vmax.f32 %v1640, 0.0
  %v1713 = vmax.f32 %v1643, 0.0
  %v1714 = vmax.f32 %v1648, 0.0
  %v1715 = vmax.f32 %v1651, 0.0
  %v1716 = vmax.f32 %v1656, 0.0
  %v1717 = vmax.f32 %v1659, 0.0
  %v1718 = vmax.f32 %v1664, 0.0
  %v1719 = vmax.f32 %v1667, 0.0
  %v1720 = vmax.f32 %v1136, %v1670
  %v1721 = vmax.f32 %v1137, %v1671
  %v1722 = vmax.f32 %v1138, %v1672
  %v1723 = vmax.f32 %v1139, %v1673
  %v1724 = vmax.f32 %v1140, %v1674
  %v1725 = vmax.f32 %v1141, %v1675
  %v1726 = vmax.f32 %v1142, %v1676
  %v1727 = vmax.f32 %v1143, %v1677
  %v1728 = vmax.f32 %v1144, %v1678
  %v1729 = vmax.f32 %v1145, %v1679
  %v1730 = vmax.f32 %v1146, %v1680
  %v1731 = vmax.f32 %v1147, %v1681
  %v1732 = vmax.f32 %v1148, %v1682
  %v1733 = vmax.f32 %v1149, %v1683
  %v1734 = vmax.f32 %v1150, %v1684
  %v1735 = vmax.f32 %v1151, %v1685
  %v1736 = vmax.f32 %v1152, %v1686
  %v1737 = vmax.f32 %v1153, %v1687
  %v1738 = vmax.f32 %v1154, %v1688
  %v1739 = vmax.f32 %v1155, %v1689
  %v1740 = vmax.f32 %v1156, %v1690
  %v1741 = vmax.f32 %v1157, %v1691
  %v1742 = vmax.f32 %v1158, %v1692
  %v1743 = vmax.f32 %v1159, %v1693
  %v1744 = vmax.f32 %v1160, %v1694
  %v1745 = vmax.f32 %v1161, %v1695
  %v1746 = vmax.f32 %v1162, %v1696
  %v1747 = vmax.f32 %v1163, %v1697
  %v1748 = vmax.f32 %v1164, %v1698
  %v1749 = vmax.f32 %v1165, %v1699
  %v1750 = vmax.f32 %v1166, %v1700
  %v1751 = vmax.f32 %v1167, %v1701
  %v1752 = vmax.f32 %v1168, %v1702
  %v1753 = vmax.f32 %v1169, %v1703
  %v1754 = vmax.f32 %v1170, %v1704
  %v1755 = vmax.f32 %v1171, %v1705
  %v1756 = vmax.f32 %v1172, %v1706
  %v1757 = vmax.f32 %v1173, %v1707
  %v1758 = vmax.f32 %v1174, %v1708
  %v1759 = vmax.f32 %v1175, %v1709
  %v1760 = vmax.f32 %v1176, %v1710
  %v1761 = vmax.f32 %v1177, %v1711
  %v1762 = vmax.f32 %v1178, %v1712
  %v1763 = vmax.f32 %v1179, %v1713
  %v1764 = vmax.f32 %v1180, %v1714
  %v1765 = vmax.f32 %v1181, %v1715
  %v1766 = vmax.f32 %v1182, %v1716
  %v1767 = vmax.f32 %v1183, %v1717
  %v1768 = vmax.f32 %v1184, %v1718
  %v1769 = vmax.f32 %v1185, %v1719
  %s1770 = scalar_lea.vmem %s0, 600
  %v1771 = vld [vmem:[%s1770] sm:$0xf]
  %v1772 = vld [vmem:[%s1770 + $0x4] sm:$0xf]
  %v1773 = vld [vmem:[%s1770 + $0x8] sm:$0xf]
  %v1774 = vld [vmem:[%s1770 + $0xc] sm:$0xf]
  %v1775 = vld [vmem:[%s1770 + $0x10] sm:$0xf]
  %v1776 = vld [vmem:[%s1770 + $0x14] sm:$0xf]
  %v1777 = vld [vmem:[%s1770 + $0x18] sm:$0xf]
  %v1778 = vld [vmem:[%s1770 + $0x1c] sm:$0xf]
  %v1779 = vld [vmem:[%s1770 + $0x20] sm:$0xf]
  %v1780 = vld [vmem:[%s1770 + $0x24] sm:$0xf]
  %v1781 = vld [vmem:[%s1770 + $0x28] sm:$0xf]
  %v1782 = vld [vmem:[%s1770 + $0x2c] sm:$0xf]
  %v1783 = vld [vmem:[%s1770 + $0x30] sm:$0xf]
  %v1784 = vld [vmem:[%s1770 + $0x34] sm:$0xf]
  %v1785 = vld [vmem:[%s1770 + $0x38] sm:$0xf]
  %v1786 = vld [vmem:[%s1770 + $0x3c] sm:$0xf]
  %v1787 = vld [vmem:[%s1770 + $0x40] sm:$0xf]
  %v1788 = vld [vmem:[%s1770 + $0x44] sm:$0xf]
  %v1789 = vld [vmem:[%s1770 + $0x48] sm:$0xf]
  %v1790 = vld [vmem:[%s1770 + $0x4c] sm:$0xf]
  %v1791 = vld [vmem:[%s1770 + $0x50] sm:$0xf]
  %v1792 = vld [vmem:[%s1770 + $0x54] sm:$0xf]
  %v1793 = vld [vmem:[%s1770 + $0x58] sm:$0xf]
  %v1794 = vld [vmem:[%s1770 + $0x5c] sm:$0xf]
  %v1795 = vld [vmem:[%s1770 + $0x60] sm:$0xf]
  %v1796 = vld [vmem:[%s1770 + $0x64] sm:$0xf]
  %v1797 = vld [vmem:[%s1770 + $0x68] sm:$0xf]
  %v1798 = vld [vmem:[%s1770 + $0x6c] sm:$0xf]
  %v1799 = vld [vmem:[%s1770 + $0x70] sm:$0xf]
  %v1800 = vld [vmem:[%s1770 + $0x74] sm:$0xf]
  %v1801 = vld [vmem:[%s1770 + $0x78] sm:$0xf]
  %v1802 = vld [vmem:[%s1770 + $0x7c] sm:$0xf]
  %v1803 = vld [vmem:[%s1770 + $0x80] sm:$0xf]
  %v1804 = vld [vmem:[%s1770 + $0x84] sm:$0xf]
  %v1805 = vld [vmem:[%s1770 + $0x88] sm:$0xf]
  %v1806 = vld [vmem:[%s1770 + $0x8c] sm:$0xf]
  %v1807 = vld [vmem:[%s1770 + $0x90] sm:$0xf]
  %v1808 = vld [vmem:[%s1770 + $0x94] sm:$0xf]
  %v1809 = vld [vmem:[%s1770 + $0x98] sm:$0xf]
  %v1810 = vld [vmem:[%s1770 + $0x9c] sm:$0xf]
  %v1811 = vld [vmem:[%s1770 + $0xa0] sm:$0xf]
  %v1812 = vld [vmem:[%s1770 + $0xa4] sm:$0xf]
  %v1813 = vld [vmem:[%s1770 + $0xa8] sm:$0xf]
  %v1814 = vld [vmem:[%s1770 + $0xac] sm:$0xf]
  %v1815 = vld [vmem:[%s1770 + $0xb0] sm:$0xf]
  %v1816 = vld [vmem:[%s1770 + $0xb4] sm:$0xf]
  %v1817 = vld [vmem:[%s1770 + $0xb8] sm:$0xf]
  %v1818 = vld [vmem:[%s1770 + $0xbc] sm:$0xf]
  %v1819 = vld [vmem:[%s1770 + $0xc0] sm:$0xf]
  %v1820 = vld [vmem:[%s1770 + $0xc4] sm:$0xf]
  %v1871 = vunpack.c.l.b16 %v1771
  %v1872 = vunpack.c.l.b16 %v1772
  %v1873 = vunpack.c.l.b16 %v1773
  %v1874 = vunpack.c.l.b16 %v1774
  %v1875 = vunpack.c.l.b16 %v1775
  %v1876 = vunpack.c.l.b16 %v1776
  %v1877 = vunpack.c.l.b16 %v1777
  %v1878 = vunpack.c.l.b16 %v1778
  %v1879 = vunpack.c.l.b16 %v1779
  %v1880 = vunpack.c.l.b16 %v1780
  %v1881 = vunpack.c.l.b16 %v1781
  %v1882 = vunpack.c.l.b16 %v1782
  %v1883 = vunpack.c.l.b16 %v1783
  %v1884 = vunpack.c.l.b16 %v1784
  %v1885 = vunpack.c.l.b16 %v1785
  %v1886 = vunpack.c.l.b16 %v1786
  %v1887 = vunpack.c.l.b16 %v1787
  %v1888 = vunpack.c.l.b16 %v1788
  %v1889 = vunpack.c.l.b16 %v1789
  %v1890 = vunpack.c.l.b16 %v1790
  %v1891 = vunpack.c.l.b16 %v1791
  %v1892 = vunpack.c.l.b16 %v1792
  %v1893 = vunpack.c.l.b16 %v1793
  %v1894 = vunpack.c.l.b16 %v1794
  %v1895 = vunpack.c.l.b16 %v1795
  %v1896 = vunpack.c.l.b16 %v1796
  %v1897 = vunpack.c.l.b16 %v1797
  %v1898 = vunpack.c.l.b16 %v1798
  %v1899 = vunpack.c.l.b16 %v1799
  %v1900 = vunpack.c.l.b16 %v1800
  %v1901 = vunpack.c.l.b16 %v1801
  %v1902 = vunpack.c.l.b16 %v1802
  %v1903 = vunpack.c.l.b16 %v1803
  %v1904 = vunpack.c.l.b16 %v1804
  %v1905 = vunpack.c.l.b16 %v1805
  %v1906 = vunpack.c.l.b16 %v1806
  %v1907 = vunpack.c.l.b16 %v1807
  %v1908 = vunpack.c.l.b16 %v1808
  %v1909 = vunpack.c.l.b16 %v1809
  %v1910 = vunpack.c.l.b16 %v1810
  %v1911 = vunpack.c.l.b16 %v1811
  %v1912 = vunpack.c.l.b16 %v1812
  %v1913 = vunpack.c.l.b16 %v1813
  %v1914 = vunpack.c.l.b16 %v1814
  %v1915 = vunpack.c.l.b16 %v1815
  %v1916 = vunpack.c.l.b16 %v1816
  %v1917 = vunpack.c.l.b16 %v1817
  %v1918 = vunpack.c.l.b16 %v1818
  %v1919 = vunpack.c.l.b16 %v1819
  %v1920 = vunpack.c.l.b16 %v1820
  %v1921 = vpack.c.b16 %v1872, %v1871
  %v1922 = vpack.c.b16 %v1874, %v1873
  %v1923 = vpack.c.b16 %v1876, %v1875
  %v1924 = vpack.c.b16 %v1878, %v1877
  %v1925 = vpack.c.b16 %v1880, %v1879
  %v1926 = vpack.c.b16 %v1882, %v1881
  %v1927 = vpack.c.b16 %v1884, %v1883
  %v1928 = vpack.c.b16 %v1886, %v1885
  %v1929 = vpack.c.b16 %v1888, %v1887
  %v1930 = vpack.c.b16 %v1890, %v1889
  %v1931 = vpack.c.b16 %v1892, %v1891
  %v1932 = vpack.c.b16 %v1894, %v1893
  %v1933 = vpack.c.b16 %v1896, %v1895
  %v1934 = vpack.c.b16 %v1898, %v1897
  %v1935 = vpack.c.b16 %v1900, %v1899
  %v1936 = vpack.c.b16 %v1902, %v1901
  %v1937 = vpack.c.b16 %v1904, %v1903
  %v1938 = vpack.c.b16 %v1906, %v1905
  %v1939 = vpack.c.b16 %v1908, %v1907
  %v1940 = vpack.c.b16 %v1910, %v1909
  %v1941 = vpack.c.b16 %v1912, %v1911
  %v1942 = vpack.c.b16 %v1914, %v1913
  %v1943 = vpack.c.b16 %v1916, %v1915
  %v1944 = vpack.c.b16 %v1918, %v1917
  %v1945 = vpack.c.b16 %v1920, %v1919
  %v1947 = vsel %vm236, %v1921, 0
  %v1950 = vsel %vm236, %v1922, 0
  %v1953 = vsel %vm236, %v1923, 0
  %v1956 = vsel %vm236, %v1924, 0
  %v1959 = vsel %vm236, %v1925, 0
  %v1962 = vsel %vm236, %v1926, 0
  %v1965 = vsel %vm236, %v1927, 0
  %v1968 = vsel %vm236, %v1928, 0
  %v1971 = vsel %vm236, %v1929, 0
  %v1974 = vsel %vm236, %v1930, 0
  %v1977 = vsel %vm236, %v1931, 0
  %v1980 = vsel %vm236, %v1932, 0
  %v1983 = vsel %vm236, %v1933, 0
  %v1986 = vsel %vm236, %v1934, 0
  %v1989 = vsel %vm236, %v1935, 0
  %v1992 = vsel %vm236, %v1936, 0
  %v1995 = vsel %vm236, %v1937, 0
  %v1998 = vsel %vm236, %v1938, 0
  %v2001 = vsel %vm236, %v1939, 0
  %v2004 = vsel %vm236, %v1940, 0
  %v2007 = vsel %vm236, %v1941, 0
  %v2010 = vsel %vm236, %v1942, 0
  %v2013 = vsel %vm236, %v1943, 0
  %v2016 = vsel %vm236, %v1944, 0
  %v2019 = vsel %vm236, %v1945, 0
  %2021 = vmatprep.subr.bf16.mxu0 0
  %2022 = vmatpush1.bf16.msra.mxu0 %v227
  %2023 = vmatprep.subr.bf16.mxu0 0
  %2024 = vmatpush1.bf16.msra.mxu0 %v228
  %2025 = vmatprep.subr.bf16.mxu0 0
  %2026 = vmatpush1.bf16.msra.mxu0 %v229
  %2027 = vmatprep.subr.bf16.mxu0 0
  %2028 = vmatpush1.bf16.msra.mxu0 %v230
  %2029 = vmatprep.subr.bf16.mxu0 0
  %2030 = vmatpush1.bf16.msra.mxu0 %v317
  %2031 = vmatprep.subr.bf16.mxu0 0
  %2032 = vmatpush1.bf16.msra.mxu0 0
  %2033 = vmatprep.subr.bf16.mxu0 0
  %2034 = vmatpush1.bf16.msra.mxu0 0
  %2035 = vmatprep.subr.bf16.mxu0 0
  %2036 = vmatpush1.bf16.msra.mxu0 0
  %2037 = vmatprep.subr.bf16.mxu0 0
  %2038 = vmatpush1.bf16.msra.mxu0 0
  %2039 = vmatprep.subr.bf16.mxu0 0
  %2040 = vmatpush1.bf16.msra.mxu0 0
  %2041 = vmatprep.subr.bf16.mxu0 0
  %2042 = vmatpush1.bf16.msra.mxu0 0
  %2043 = vmatprep.subr.bf16.mxu0 0
  %2044 = vmatpush1.bf16.msra.mxu0 0
  %2045 = vmatprep.subr.bf16.mxu0 0
  %2046 = vmatpush1.bf16.msra.mxu0 0
  %2047 = vmatprep.subr.bf16.mxu0 0
  %2048 = vmatpush1.bf16.msra.mxu0 0
  %2049 = vmatprep.subr.bf16.mxu0 0
  %2050 = vmatpush1.bf16.msra.mxu0 0
  %2051 = vmatprep.subr.bf16.mxu0 0
  %2052 = vmatpush1.bf16.msra.mxu0 0
  %2053 = vmatprep.mubr.bf16.mxu0 0
  %2054 = vmatmul.mubr.bf16.gmra.mrb[0].mxu0 %v1947
  %v2055 = vpop.f32.mrb[0].mxu0
  %v2056 = vadd.f32 %v80, %v2055
  %v2057 = vpop.f32.mrb[0].mxu0
  %v2058 = vpop.f32.mrb[0].mxu0
  %v2059 = vadd.f32 %v80, %v2058
  %v2060 = vpop.f32.mrb[0].mxu0
  %2061 = vmatprep.mubr.bf16.mxu0 0
  %2062 = vmatmul.mubr.bf16.gmra.mrb[0].mxu0 %v1950
  %v2063 = vpop.f32.mrb[0].mxu0
  %v2064 = vadd.f32 %v80, %v2063
  %v2065 = vpop.f32.mrb[0].mxu0
  %v2066 = vpop.f32.mrb[0].mxu0
  %v2067 = vadd.f32 %v80, %v2066
  %v2068 = vpop.f32.mrb[0].mxu0
  %2069 = vmatprep.mubr.bf16.mxu0 0
  %2070 = vmatmul.mubr.bf16.gmra.mrb[0].mxu0 %v1953
  %v2071 = vpop.f32.mrb[0].mxu0
  %v2072 = vadd.f32 %v80, %v2071
  %v2073 = vpop.f32.mrb[0].mxu0
  %v2074 = vpop.f32.mrb[0].mxu0
  %v2075 = vadd.f32 %v80, %v2074
  %v2076 = vpop.f32.mrb[0].mxu0
  %2077 = vmatprep.mubr.bf16.mxu0 0
  %2078 = vmatmul.mubr.bf16.gmra.mrb[0].mxu0 %v1956
  %v2079 = vpop.f32.mrb[0].mxu0
  %v2080 = vadd.f32 %v80, %v2079
  %v2081 = vpop.f32.mrb[0].mxu0
  %v2082 = vpop.f32.mrb[0].mxu0
  %v2083 = vadd.f32 %v80, %v2082
  %v2084 = vpop.f32.mrb[0].mxu0
  %2085 = vmatprep.mubr.bf16.mxu0 0
  %2086 = vmatmul.mubr.bf16.gmra.mrb[0].mxu0 %v1959
  %v2087 = vpop.f32.mrb[0].mxu0
  %v2088 = vadd.f32 %v80, %v2087
  %v2089 = vpop.f32.mrb[0].mxu0
  %v2090 = vpop.f32.mrb[0].mxu0
  %v2091 = vadd.f32 %v80, %v2090
  %v2092 = vpop.f32.mrb[0].mxu0
  %2093 = vmatprep.mubr.bf16.mxu0 0
  %2094 = vmatmul.mubr.bf16.gmra.mrb[0].mxu0 %v1962
  %v2095 = vpop.f32.mrb[0].mxu0
  %v2096 = vadd.f32 %v80, %v2095
  %v2097 = vpop.f32.mrb[0].mxu0
  %v2098 = vpop.f32.mrb[0].mxu0
  %v2099 = vadd.f32 %v80, %v2098
  %v2100 = vpop.f32.mrb[0].mxu0
  %2101 = vmatprep.mubr.bf16.mxu0 0
  %2102 = vmatmul.mubr.bf16.gmra.mrb[0].mxu0 %v1965
  %v2103 = vpop.f32.mrb[0].mxu0
  %v2104 = vadd.f32 %v80, %v2103
  %v2105 = vpop.f32.mrb[0].mxu0
  %v2106 = vpop.f32.mrb[0].mxu0
  %v2107 = vadd.f32 %v80, %v2106
  %v2108 = vpop.f32.mrb[0].mxu0
  %2109 = vmatprep.mubr.bf16.mxu0 0
  %2110 = vmatmul.mubr.bf16.gmra.mrb[0].mxu0 %v1968
  %v2111 = vpop.f32.mrb[0].mxu0
  %v2112 = vadd.f32 %v80, %v2111
  %v2113 = vpop.f32.mrb[0].mxu0
  %v2114 = vpop.f32.mrb[0].mxu0
  %v2115 = vadd.f32 %v80, %v2114
  %v2116 = vpop.f32.mrb[0].mxu0
  %2117 = vmatprep.mubr.bf16.mxu0 0
  %2118 = vmatmul.mubr.bf16.gmra.mrb[0].mxu0 %v1971
  %v2119 = vpop.f32.mrb[0].mxu0
  %v2120 = vadd.f32 %v80, %v2119
  %v2121 = vpop.f32.mrb[0].mxu0
  %v2122 = vpop.f32.mrb[0].mxu0
  %v2123 = vadd.f32 %v80, %v2122
  %v2124 = vpop.f32.mrb[0].mxu0
  %2125 = vmatprep.mubr.bf16.mxu0 0
  %2126 = vmatmul.mubr.bf16.gmra.mrb[0].mxu0 %v1974
  %v2127 = vpop.f32.mrb[0].mxu0
  %v2128 = vadd.f32 %v80, %v2127
  %v2129 = vpop.f32.mrb[0].mxu0
  %v2130 = vpop.f32.mrb[0].mxu0
  %v2131 = vadd.f32 %v80, %v2130
  %v2132 = vpop.f32.mrb[0].mxu0
  %2133 = vmatprep.mubr.bf16.mxu0 0
  %2134 = vmatmul.mubr.bf16.gmra.mrb[0].mxu0 %v1977
  %v2135 = vpop.f32.mrb[0].mxu0
  %v2136 = vadd.f32 %v80, %v2135
  %v2137 = vpop.f32.mrb[0].mxu0
  %v2138 = vpop.f32.mrb[0].mxu0
  %v2139 = vadd.f32 %v80, %v2138
  %v2140 = vpop.f32.mrb[0].mxu0
  %2141 = vmatprep.mubr.bf16.mxu0 0
  %2142 = vmatmul.mubr.bf16.gmra.mrb[0].mxu0 %v1980
  %v2143 = vpop.f32.mrb[0].mxu0
  %v2144 = vadd.f32 %v80, %v2143
  %v2145 = vpop.f32.mrb[0].mxu0
  %v2146 = vpop.f32.mrb[0].mxu0
  %v2147 = vadd.f32 %v80, %v2146
  %v2148 = vpop.f32.mrb[0].mxu0
  %2149 = vmatprep.mubr.bf16.mxu0 0
  %2150 = vmatmul.mubr.bf16.gmra.mrb[0].mxu0 %v1983
  %v2151 = vpop.f32.mrb[0].mxu0
  %v2152 = vadd.f32 %v80, %v2151
  %v2153 = vpop.f32.mrb[0].mxu0
  %v2154 = vpop.f32.mrb[0].mxu0
  %v2155 = vadd.f32 %v80, %v2154
  %v2156 = vpop.f32.mrb[0].mxu0
  %2157 = vmatprep.mubr.bf16.mxu0 0
  %2158 = vmatmul.mubr.bf16.gmra.mrb[0].mxu0 %v1986
  %v2159 = vpop.f32.mrb[0].mxu0
  %v2160 = vadd.f32 %v80, %v2159
  %v2161 = vpop.f32.mrb[0].mxu0
  %v2162 = vpop.f32.mrb[0].mxu0
  %v2163 = vadd.f32 %v80, %v2162
  %v2164 = vpop.f32.mrb[0].mxu0
  %2165 = vmatprep.mubr.bf16.mxu0 0
  %2166 = vmatmul.mubr.bf16.gmra.mrb[0].mxu0 %v1989
  %v2167 = vpop.f32.mrb[0].mxu0
  %v2168 = vadd.f32 %v80, %v2167
  %v2169 = vpop.f32.mrb[0].mxu0
  %v2170 = vpop.f32.mrb[0].mxu0
  %v2171 = vadd.f32 %v80, %v2170
  %v2172 = vpop.f32.mrb[0].mxu0
  %2173 = vmatprep.mubr.bf16.mxu0 0
  %2174 = vmatmul.mubr.bf16.gmra.mrb[0].mxu0 %v1992
  %v2175 = vpop.f32.mrb[0].mxu0
  %v2176 = vadd.f32 %v80, %v2175
  %v2177 = vpop.f32.mrb[0].mxu0
  %v2178 = vpop.f32.mrb[0].mxu0
  %v2179 = vadd.f32 %v80, %v2178
  %v2180 = vpop.f32.mrb[0].mxu0
  %2181 = vmatprep.mubr.bf16.mxu0 0
  %2182 = vmatmul.mubr.bf16.gmra.mrb[0].mxu0 %v1995
  %v2183 = vpop.f32.mrb[0].mxu0
  %v2184 = vadd.f32 %v80, %v2183
  %v2185 = vpop.f32.mrb[0].mxu0
  %v2186 = vpop.f32.mrb[0].mxu0
  %v2187 = vadd.f32 %v80, %v2186
  %v2188 = vpop.f32.mrb[0].mxu0
  %2189 = vmatprep.mubr.bf16.mxu0 0
  %2190 = vmatmul.mubr.bf16.gmra.mrb[0].mxu0 %v1998
  %v2191 = vpop.f32.mrb[0].mxu0
  %v2192 = vadd.f32 %v80, %v2191
  %v2193 = vpop.f32.mrb[0].mxu0
  %v2194 = vpop.f32.mrb[0].mxu0
  %v2195 = vadd.f32 %v80, %v2194
  %v2196 = vpop.f32.mrb[0].mxu0
  %2197 = vmatprep.mubr.bf16.mxu0 0
  %2198 = vmatmul.mubr.bf16.gmra.mrb[0].mxu0 %v2001
  %v2199 = vpop.f32.mrb[0].mxu0
  %v2200 = vadd.f32 %v80, %v2199
  %v2201 = vpop.f32.mrb[0].mxu0
  %v2202 = vpop.f32.mrb[0].mxu0
  %v2203 = vadd.f32 %v80, %v2202
  %v2204 = vpop.f32.mrb[0].mxu0
  %2205 = vmatprep.mubr.bf16.mxu0 0
  %2206 = vmatmul.mubr.bf16.gmra.mrb[0].mxu0 %v2004
  %v2207 = vpop.f32.mrb[0].mxu0
  %v2208 = vadd.f32 %v80, %v2207
  %v2209 = vpop.f32.mrb[0].mxu0
  %v2210 = vpop.f32.mrb[0].mxu0
  %v2211 = vadd.f32 %v80, %v2210
  %v2212 = vpop.f32.mrb[0].mxu0
  %2213 = vmatprep.mubr.bf16.mxu0 0
  %2214 = vmatmul.mubr.bf16.gmra.mrb[0].mxu0 %v2007
  %v2215 = vpop.f32.mrb[0].mxu0
  %v2216 = vadd.f32 %v80, %v2215
  %v2217 = vpop.f32.mrb[0].mxu0
  %v2218 = vpop.f32.mrb[0].mxu0
  %v2219 = vadd.f32 %v80, %v2218
  %v2220 = vpop.f32.mrb[0].mxu0
  %2221 = vmatprep.mubr.bf16.mxu0 0
  %2222 = vmatmul.mubr.bf16.gmra.mrb[0].mxu0 %v2010
  %v2223 = vpop.f32.mrb[0].mxu0
  %v2224 = vadd.f32 %v80, %v2223
  %v2225 = vpop.f32.mrb[0].mxu0
  %v2226 = vpop.f32.mrb[0].mxu0
  %v2227 = vadd.f32 %v80, %v2226
  %v2228 = vpop.f32.mrb[0].mxu0
  %2229 = vmatprep.mubr.bf16.mxu0 0
  %2230 = vmatmul.mubr.bf16.gmra.mrb[0].mxu0 %v2013
  %v2231 = vpop.f32.mrb[0].mxu0
  %v2232 = vadd.f32 %v80, %v2231
  %v2233 = vpop.f32.mrb[0].mxu0
  %v2234 = vpop.f32.mrb[0].mxu0
  %v2235 = vadd.f32 %v80, %v2234
  %v2236 = vpop.f32.mrb[0].mxu0
  %2237 = vmatprep.mubr.bf16.mxu0 0
  %2238 = vmatmul.mubr.bf16.gmra.mrb[0].mxu0 %v2016
  %v2239 = vpop.f32.mrb[0].mxu0
  %v2240 = vadd.f32 %v80, %v2239
  %v2241 = vpop.f32.mrb[0].mxu0
  %v2242 = vpop.f32.mrb[0].mxu0
  %v2243 = vadd.f32 %v80, %v2242
  %v2244 = vpop.f32.mrb[0].mxu0
  %2245 = vmatprep.mubr.bf16.mxu0 0
  %2246 = vmatmul.mubr.bf16.gmra.mrb[0].mxu0 %v2019
  %v2247 = vpop.f32.mrb[0].mxu0
  %v2248 = vadd.f32 %v80, %v2247
  %v2249 = vpop.f32.mrb[0].mxu0
  %v2250 = vpop.f32.mrb[0].mxu0
  %v2251 = vadd.f32 %v80, %v2250
  %v2252 = vpop.f32.mrb[0].mxu0
  %2253 = vdwg.mxu0
  %v2254 = vmax.f32 %v2056, 0.0
  %v2255 = vmax.f32 %v2059, 0.0
  %v2256 = vmax.f32 %v2064, 0.0
  %v2257 = vmax.f32 %v2067, 0.0
  %v2258 = vmax.f32 %v2072, 0.0
  %v2259 = vmax.f32 %v2075, 0.0
  %v2260 = vmax.f32 %v2080, 0.0
  %v2261 = vmax.f32 %v2083, 0.0
  %v2262 = vmax.f32 %v2088, 0.0
  %v2263 = vmax.f32 %v2091, 0.0
  %v2264 = vmax.f32 %v2096, 0.0
  %v2265 = vmax.f32 %v2099, 0.0
  %v2266 = vmax.f32 %v2104, 0.0
  %v2267 = vmax.f32 %v2107, 0.0
  %v2268 = vmax.f32 %v2112, 0.0
  %v2269 = vmax.f32 %v2115, 0.0
  %v2270 = vmax.f32 %v2120, 0.0
  %v2271 = vmax.f32 %v2123, 0.0
  %v2272 = vmax.f32 %v2128, 0.0
  %v2273 = vmax.f32 %v2131, 0.0
  %v2274 = vmax.f32 %v2136, 0.0
  %v2275 = vmax.f32 %v2139, 0.0
  %v2276 = vmax.f32 %v2144, 0.0
  %v2277 = vmax.f32 %v2147, 0.0
  %v2278 = vmax.f32 %v2152, 0.0
  %v2279 = vmax.f32 %v2155, 0.0
  %v2280 = vmax.f32 %v2160, 0.0
  %v2281 = vmax.f32 %v2163, 0.0
  %v2282 = vmax.f32 %v2168, 0.0
  %v2283 = vmax.f32 %v2171, 0.0
  %v2284 = vmax.f32 %v2176, 0.0
  %v2285 = vmax.f32 %v2179, 0.0
  %v2286 = vmax.f32 %v2184, 0.0
  %v2287 = vmax.f32 %v2187, 0.0
  %v2288 = vmax.f32 %v2192, 0.0
  %v2289 = vmax.f32 %v2195, 0.0
  %v2290 = vmax.f32 %v2200, 0.0
  %v2291 = vmax.f32 %v2203, 0.0
  %v2292 = vmax.f32 %v2208, 0.0
  %v2293 = vmax.f32 %v2211, 0.0
  %v2294 = vmax.f32 %v2216, 0.0
  %v2295 = vmax.f32 %v2219, 0.0
  %v2296 = vmax.f32 %v2224, 0.0
  %v2297 = vmax.f32 %v2227, 0.0
  %v2298 = vmax.f32 %v2232, 0.0
  %v2299 = vmax.f32 %v2235, 0.0
  %v2300 = vmax.f32 %v2240, 0.0
  %v2301 = vmax.f32 %v2243, 0.0
  %v2302 = vmax.f32 %v2248, 0.0
  %v2303 = vmax.f32 %v2251, 0.0
  %v2304 = vmax.f32 %v1720, %v2254
  %v2305 = vmax.f32 %v1721, %v2255
  %v2306 = vmax.f32 %v1722, %v2256
  %v2307 = vmax.f32 %v1723, %v2257
  %v2308 = vmax.f32 %v1724, %v2258
  %v2309 = vmax.f32 %v1725, %v2259
  %v2310 = vmax.f32 %v1726, %v2260
  %v2311 = vmax.f32 %v1727, %v2261
  %v2312 = vmax.f32 %v1728, %v2262
  %v2313 = vmax.f32 %v1729, %v2263
  %v2314 = vmax.f32 %v1730, %v2264
  %v2315 = vmax.f32 %v1731, %v2265
  %v2316 = vmax.f32 %v1732, %v2266
  %v2317 = vmax.f32 %v1733, %v2267
  %v2318 = vmax.f32 %v1734, %v2268
  %v2319 = vmax.f32 %v1735, %v2269
  %v2320 = vmax.f32 %v1736, %v2270
  %v2321 = vmax.f32 %v1737, %v2271
  %v2322 = vmax.f32 %v1738, %v2272
  %v2323 = vmax.f32 %v1739, %v2273
  %v2324 = vmax.f32 %v1740, %v2274
  %v2325 = vmax.f32 %v1741, %v2275
  %v2326 = vmax.f32 %v1742, %v2276
  %v2327 = vmax.f32 %v1743, %v2277
  %v2328 = vmax.f32 %v1744, %v2278
  %v2329 = vmax.f32 %v1745, %v2279
  %v2330 = vmax.f32 %v1746, %v2280
  %v2331 = vmax.f32 %v1747, %v2281
  %v2332 = vmax.f32 %v1748, %v2282
  %v2333 = vmax.f32 %v1749, %v2283
  %v2334 = vmax.f32 %v1750, %v2284
  %v2335 = vmax.f32 %v1751, %v2285
  %v2336 = vmax.f32 %v1752, %v2286
  %v2337 = vmax.f32 %v1753, %v2287
  %v2338 = vmax.f32 %v1754, %v2288
  %v2339 = vmax.f32 %v1755, %v2289
  %v2340 = vmax.f32 %v1756, %v2290
  %v2341 = vmax.f32 %v1757, %v2291
  %v2342 = vmax.f32 %v1758, %v2292
  %v2343 = vmax.f32 %v1759, %v2293
  %v2344 = vmax.f32 %v1760, %v2294
  %v2345 = vmax.f32 %v1761, %v2295
  %v2346 = vmax.f32 %v1762, %v2296
  %v2347 = vmax.f32 %v1763, %v2297
  %v2348 = vmax.f32 %v1764, %v2298
  %v2349 = vmax.f32 %v1765, %v2299
  %v2350 = vmax.f32 %v1766, %v2300
  %v2351 = vmax.f32 %v1767, %v2301
  %v2352 = vmax.f32 %v1768, %v2302
  %v2353 = vmax.f32 %v1769, %v2303
  %v2354 = vpack.c.bf16 %v2305, %v2304
  %v2355 = vpack.c.bf16 %v2307, %v2306
  %v2356 = vpack.c.bf16 %v2309, %v2308
  %v2357 = vpack.c.bf16 %v2311, %v2310
  %v2358 = vpack.c.bf16 %v2313, %v2312
  %v2359 = vpack.c.bf16 %v2315, %v2314
  %v2360 = vpack.c.bf16 %v2317, %v2316
  %v2361 = vpack.c.bf16 %v2319, %v2318
  %v2362 = vpack.c.bf16 %v2321, %v2320
  %v2363 = vpack.c.bf16 %v2323, %v2322
  %v2364 = vpack.c.bf16 %v2325, %v2324
  %v2365 = vpack.c.bf16 %v2327, %v2326
  %v2366 = vpack.c.bf16 %v2329, %v2328
  %v2367 = vpack.c.bf16 %v2331, %v2330
  %v2368 = vpack.c.bf16 %v2333, %v2332
  %v2369 = vpack.c.bf16 %v2335, %v2334
  %v2370 = vpack.c.bf16 %v2337, %v2336
  %v2371 = vpack.c.bf16 %v2339, %v2338
  %v2372 = vpack.c.bf16 %v2341, %v2340
  %v2373 = vpack.c.bf16 %v2343, %v2342
  %v2374 = vpack.c.bf16 %v2345, %v2344
  %v2375 = vpack.c.bf16 %v2347, %v2346
  %v2376 = vpack.c.bf16 %v2349, %v2348
  %v2377 = vpack.c.bf16 %v2351, %v2350
  %v2378 = vpack.c.bf16 %v2353, %v2352
  %v2404 = vunpack.c.l.b16 %v2354
  %v2405 = vunpack.c.h.b16 %v2354
  %v2406 = vunpack.c.l.b16 %v2355
  %v2407 = vunpack.c.h.b16 %v2355
  %v2408 = vunpack.c.l.b16 %v2356
  %v2409 = vunpack.c.h.b16 %v2356
  %v2410 = vunpack.c.l.b16 %v2357
  %v2411 = vunpack.c.h.b16 %v2357
  %v2412 = vunpack.c.l.b16 %v2358
  %v2413 = vunpack.c.h.b16 %v2358
  %v2414 = vunpack.c.l.b16 %v2359
  %v2415 = vunpack.c.h.b16 %v2359
  %v2416 = vunpack.c.l.b16 %v2360
  %v2417 = vunpack.c.h.b16 %v2360
  %v2418 = vunpack.c.l.b16 %v2361
  %v2419 = vunpack.c.h.b16 %v2361
  %v2420 = vunpack.c.l.b16 %v2362
  %v2421 = vunpack.c.h.b16 %v2362
  %v2422 = vunpack.c.l.b16 %v2363
  %v2423 = vunpack.c.h.b16 %v2363
  %v2424 = vunpack.c.l.b16 %v2364
  %v2425 = vunpack.c.h.b16 %v2364
  %v2426 = vunpack.c.l.b16 %v2365
  %v2427 = vunpack.c.h.b16 %v2365
  %v2428 = vunpack.c.l.b16 %v2366
  %v2429 = vunpack.c.h.b16 %v2366
  %v2430 = vunpack.c.l.b16 %v2367
  %v2431 = vunpack.c.h.b16 %v2367
  %v2432 = vunpack.c.l.b16 %v2368
  %v2433 = vunpack.c.h.b16 %v2368
  %v2434 = vunpack.c.l.b16 %v2369
  %v2435 = vunpack.c.h.b16 %v2369
  %v2436 = vunpack.c.l.b16 %v2370
  %v2437 = vunpack.c.h.b16 %v2370
  %v2438 = vunpack.c.l.b16 %v2371
  %v2439 = vunpack.c.h.b16 %v2371
  %v2440 = vunpack.c.l.b16 %v2372
  %v2441 = vunpack.c.h.b16 %v2372
  %v2442 = vunpack.c.l.b16 %v2373
  %v2443 = vunpack.c.h.b16 %v2373
  %v2444 = vunpack.c.l.b16 %v2374
  %v2445 = vunpack.c.h.b16 %v2374
  %v2446 = vunpack.c.l.b16 %v2375
  %v2447 = vunpack.c.h.b16 %v2375
  %v2448 = vunpack.c.l.b16 %v2376
  %v2449 = vunpack.c.h.b16 %v2376
  %v2450 = vunpack.c.l.b16 %v2377
  %v2451 = vunpack.c.h.b16 %v2377
  %v2452 = vunpack.c.l.b16 %v2378
  %v2453 = vunpack.c.h.b16 %v2378
  %v2454 = vpack.c.b16 %v2404, %v2404
  %v2455 = vpack.c.b16 %v2405, %v2405
  %v2456 = vpack.c.b16 %v2406, %v2406
  %v2457 = vpack.c.b16 %v2407, %v2407
  %v2458 = vpack.c.b16 %v2408, %v2408
  %v2459 = vpack.c.b16 %v2409, %v2409
  %v2460 = vpack.c.b16 %v2410, %v2410
  %v2461 = vpack.c.b16 %v2411, %v2411
  %v2462 = vpack.c.b16 %v2412, %v2412
  %v2463 = vpack.c.b16 %v2413, %v2413
  %v2464 = vpack.c.b16 %v2414, %v2414
  %v2465 = vpack.c.b16 %v2415, %v2415
  %v2466 = vpack.c.b16 %v2416, %v2416
  %v2467 = vpack.c.b16 %v2417, %v2417
  %v2468 = vpack.c.b16 %v2418, %v2418
  %v2469 = vpack.c.b16 %v2419, %v2419
  %v2470 = vpack.c.b16 %v2420, %v2420
  %v2471 = vpack.c.b16 %v2421, %v2421
  %v2472 = vpack.c.b16 %v2422, %v2422
  %v2473 = vpack.c.b16 %v2423, %v2423
  %v2474 = vpack.c.b16 %v2424, %v2424
  %v2475 = vpack.c.b16 %v2425, %v2425
  %v2476 = vpack.c.b16 %v2426, %v2426
  %v2477 = vpack.c.b16 %v2427, %v2427
  %v2478 = vpack.c.b16 %v2428, %v2428
  %v2479 = vpack.c.b16 %v2429, %v2429
  %v2480 = vpack.c.b16 %v2430, %v2430
  %v2481 = vpack.c.b16 %v2431, %v2431
  %v2482 = vpack.c.b16 %v2432, %v2432
  %v2483 = vpack.c.b16 %v2433, %v2433
  %v2484 = vpack.c.b16 %v2434, %v2434
  %v2485 = vpack.c.b16 %v2435, %v2435
  %v2486 = vpack.c.b16 %v2436, %v2436
  %v2487 = vpack.c.b16 %v2437, %v2437
  %v2488 = vpack.c.b16 %v2438, %v2438
  %v2489 = vpack.c.b16 %v2439, %v2439
  %v2490 = vpack.c.b16 %v2440, %v2440
  %v2491 = vpack.c.b16 %v2441, %v2441
  %v2492 = vpack.c.b16 %v2442, %v2442
  %v2493 = vpack.c.b16 %v2443, %v2443
  %v2494 = vpack.c.b16 %v2444, %v2444
  %v2495 = vpack.c.b16 %v2445, %v2445
  %v2496 = vpack.c.b16 %v2446, %v2446
  %v2497 = vpack.c.b16 %v2447, %v2447
  %v2498 = vpack.c.b16 %v2448, %v2448
  %v2499 = vpack.c.b16 %v2449, %v2449
  %v2500 = vpack.c.b16 %v2450, %v2450
  %v2501 = vpack.c.b16 %v2451, %v2451
  %v2502 = vpack.c.b16 %v2452, %v2452
  %v2503 = vpack.c.b16 %v2453, %v2453
  %2554 = vst [vmem:[%s3] sm:$0xf] %v2454
  %2555 = vst [vmem:[%s3 + $0x4] sm:$0xf] %v2455
  %2556 = vst [vmem:[%s3 + $0x8] sm:$0xf] %v2456
  %2557 = vst [vmem:[%s3 + $0xc] sm:$0xf] %v2457
  %2558 = vst [vmem:[%s3 + $0x10] sm:$0xf] %v2458
  %2559 = vst [vmem:[%s3 + $0x14] sm:$0xf] %v2459
  %2560 = vst [vmem:[%s3 + $0x18] sm:$0xf] %v2460
  %2561 = vst [vmem:[%s3 + $0x1c] sm:$0xf] %v2461
  %2562 = vst [vmem:[%s3 + $0x20] sm:$0xf] %v2462
  %2563 = vst [vmem:[%s3 + $0x24] sm:$0xf] %v2463
  %2564 = vst [vmem:[%s3 + $0x28] sm:$0xf] %v2464
  %2565 = vst [vmem:[%s3 + $0x2c] sm:$0xf] %v2465
  %2566 = vst [vmem:[%s3 + $0x30] sm:$0xf] %v2466
  %2567 = vst [vmem:[%s3 + $0x34] sm:$0xf] %v2467
  %2568 = vst [vmem:[%s3 + $0x38] sm:$0xf] %v2468
  %2569 = vst [vmem:[%s3 + $0x3c] sm:$0xf] %v2469
  %2570 = vst [vmem:[%s3 + $0x40] sm:$0xf] %v2470
  %2571 = vst [vmem:[%s3 + $0x44] sm:$0xf] %v2471
  %2572 = vst [vmem:[%s3 + $0x48] sm:$0xf] %v2472
  %2573 = vst [vmem:[%s3 + $0x4c] sm:$0xf] %v2473
  %2574 = vst [vmem:[%s3 + $0x50] sm:$0xf] %v2474
  %2575 = vst [vmem:[%s3 + $0x54] sm:$0xf] %v2475
  %2576 = vst [vmem:[%s3 + $0x58] sm:$0xf] %v2476
  %2577 = vst [vmem:[%s3 + $0x5c] sm:$0xf] %v2477
  %2578 = vst [vmem:[%s3 + $0x60] sm:$0xf] %v2478
  %2579 = vst [vmem:[%s3 + $0x64] sm:$0xf] %v2479
  %2580 = vst [vmem:[%s3 + $0x68] sm:$0xf] %v2480
  %2581 = vst [vmem:[%s3 + $0x6c] sm:$0xf] %v2481
  %2582 = vst [vmem:[%s3 + $0x70] sm:$0xf] %v2482
  %2583 = vst [vmem:[%s3 + $0x74] sm:$0xf] %v2483
  %2584 = vst [vmem:[%s3 + $0x78] sm:$0xf] %v2484
  %2585 = vst [vmem:[%s3 + $0x7c] sm:$0xf] %v2485
  %2586 = vst [vmem:[%s3 + $0x80] sm:$0xf] %v2486
  %2587 = vst [vmem:[%s3 + $0x84] sm:$0xf] %v2487
  %2588 = vst [vmem:[%s3 + $0x88] sm:$0xf] %v2488
  %2589 = vst [vmem:[%s3 + $0x8c] sm:$0xf] %v2489
  %2590 = vst [vmem:[%s3 + $0x90] sm:$0xf] %v2490
  %2591 = vst [vmem:[%s3 + $0x94] sm:$0xf] %v2491
  %2592 = vst [vmem:[%s3 + $0x98] sm:$0xf] %v2492
  %2593 = vst [vmem:[%s3 + $0x9c] sm:$0xf] %v2493
  %2594 = vst [vmem:[%s3 + $0xa0] sm:$0xf] %v2494
  %2595 = vst [vmem:[%s3 + $0xa4] sm:$0xf] %v2495
  %2596 = vst [vmem:[%s3 + $0xa8] sm:$0xf] %v2496
  %2597 = vst [vmem:[%s3 + $0xac] sm:$0xf] %v2497
  %2598 = vst [vmem:[%s3 + $0xb0] sm:$0xf] %v2498
  %2599 = vst [vmem:[%s3 + $0xb4] sm:$0xf] %v2499
  %2600 = vst [vmem:[%s3 + $0xb8] sm:$0xf] %v2500
  %2601 = vst [vmem:[%s3 + $0xbc] sm:$0xf] %v2501
  %2602 = vst [vmem:[%s3 + $0xc0] sm:$0xf] %v2502
  %2603 = vst [vmem:[%s3 + $0xc4] sm:$0xf] %v2503
  // Predicated region
  $region14: #{cnn_cifar_forward.3} parent=0 // pred_check
    _
  $region15: #{cnn_cifar_forward.3} parent=0 // pred_check_branch
    %2605 = sbr.rel (0) target = $region17
  $region16: #{cnn_cifar_forward.3} parent=0 // pred_region
    _
  $region17: #{cnn_cifar_forward.3} parent=0 // pred_fallthru
    _
  // Predicated region
  $region18: #{cnn_cifar_forward.3} parent=0 // pred_check
    _
  $region19: #{cnn_cifar_forward.3} parent=0 // pred_check_branch
    %2607 = sbr.rel (0) target = $region21
  $region20: #{cnn_cifar_forward.3} parent=0 // pred_region
    _
  $region21: #{cnn_cifar_forward.3} parent=0 // pred_fallthru
    _

// kernel: cnn_cifar_forward.4
$region0: #{cnn_cifar_forward.4}
  #allocation0 [shape = 'u32[]', space=smem, size = 0x4, offset = 0x4, fixed_abs, tag = 'smem constant byte address 0x4 - core index']
  #allocation1 [shape = 'u32[144,128]{1,0:T(1,128)}', space=vmem, size = 0x12000, scoped, tag = 'internal scratch']
  %s0 = inlined_call_operand.vmem [shape: bf16[4,64,150], index: 0, kind: input, shape index: {}]
  %s1 = inlined_call_operand.vmem [shape: bf16[150,128], index: 1, kind: input, shape index: {}]
  %s2 = inlined_call_operand.vmem [shape: f32[1,128], index: 2, kind: input, shape index: {}]
  %s3 = inlined_call_operand.vmem [shape: bf16[64,128], index: 3, kind: output, shape index: {}]
  %s4 = sld [smem:[#allocation0]]
  $region22: #{cnn_cifar_forward.4} parent=0
    _
  %s6 = ssub.s32 1, %s4
  %s7 = scalar_select 0, %s6, %s4
  // Predicated region
  $region2: #{cnn_cifar_forward.4} parent=0 // pred_check
    _
  $region3: #{cnn_cifar_forward.4} parent=0 // pred_check_branch
    %9 = sbr.rel (0) target = $region5
  $region4: #{cnn_cifar_forward.4} parent=0 // pred_region
    _
  $region5: #{cnn_cifar_forward.4} parent=0 // pred_fallthru
    _
  // Predicated region
  $region6: #{cnn_cifar_forward.4} parent=0 // pred_check
    _
  $region7: #{cnn_cifar_forward.4} parent=0 // pred_check_branch
    %11 = sbr.rel (0) target = $region9
  $region8: #{cnn_cifar_forward.4} parent=0 // pred_region
    _
  $region9: #{cnn_cifar_forward.4} parent=0 // pred_fallthru
    _
  // Predicated region
  $region10: #{cnn_cifar_forward.4} parent=0 // pred_check
    _
  $region11: #{cnn_cifar_forward.4} parent=0 // pred_check_branch
    %13 = sbr.rel (0) target = $region13
  $region12: #{cnn_cifar_forward.4} parent=0 // pred_region
    _
  $region13: #{cnn_cifar_forward.4} parent=0 // pred_fallthru
    _
  %v15 = vld [vmem:[%s1] sm:$0xf]
  %v16 = vld [vmem:[%s1 + $0x4] sm:$0xf]
  %v17 = vld [vmem:[%s1 + $0x8] sm:$0xf]
  %v18 = vld [vmem:[%s1 + $0xc] sm:$0xf]
  %v19 = vld [vmem:[%s1 + $0x10] sm:$0xf]
  %v20 = vld [vmem:[%s1 + $0x14] sm:$0xf]
  %v21 = vld [vmem:[%s1 + $0x18] sm:$0xf]
  %v22 = vld [vmem:[%s1 + $0x1c] sm:$0xf]
  %v23 = vld [vmem:[%s1 + $0x20] sm:$0xf]
  %v24 = vld [vmem:[%s1 + $0x24] sm:$0xf]
  %v25 = vld [vmem:[%s1 + $0x28] sm:$0xf]
  %v26 = vld [vmem:[%s1 + $0x2c] sm:$0xf]
  %v27 = vld [vmem:[%s1 + $0x30] sm:$0xf]
  %v28 = vld [vmem:[%s1 + $0x34] sm:$0xf]
  %v29 = vld [vmem:[%s1 + $0x38] sm:$0xf]
  %v30 = vld [vmem:[%s1 + $0x3c] sm:$0xf]
  %v31 = vld [vmem:[%s1 + $0x40] sm:$0xf]
  %v32 = vld [vmem:[%s1 + $0x44] sm:$0xf]
  %v33 = vld [vmem:[%s1 + $0x48] sm:$0x7]
  %v34 = vld [vmem:[%s2] sm:$0x1]
  %v35 = vld [vmem:[%s0] sm:$0xff]
  %v36 = vld [vmem:[%s0 + $0x8] sm:$0xff]
  %v37 = vld [vmem:[%s0 + $0x10] sm:$0xff]
  %v38 = vld [vmem:[%s0 + $0x18] sm:$0xff]
  %v39 = vld [vmem:[%s0 + $0x20] sm:$0xff]
  %v40 = vld [vmem:[%s0 + $0x28] sm:$0xff]
  %v41 = vld [vmem:[%s0 + $0x30] sm:$0xff]
  %v42 = vld [vmem:[%s0 + $0x38] sm:$0xff]
  %v44 = vlaneseq
  %v45 = vshrl.u32 %v44, 7
  %v46 = vsub.s32 0, %v45
  %v47 = vrot.slane %v34, %v46
  %v57 = vunpack.c.l.b16 %v35
  %v58 = vunpack.c.h.b16 %v35
  %v59 = vunpack.c.l.b16 %v36
  %v60 = vunpack.c.h.b16 %v36
  %v61 = vunpack.c.l.b16 %v37
  %v62 = vunpack.c.h.b16 %v37
  %v63 = vunpack.c.l.b16 %v38
  %v64 = vunpack.c.h.b16 %v38
  %v65 = vunpack.c.l.b16 %v39
  %v66 = vunpack.c.h.b16 %v39
  %v67 = vunpack.c.l.b16 %v40
  %v68 = vunpack.c.h.b16 %v40
  %v69 = vunpack.c.l.b16 %v41
  %v70 = vunpack.c.h.b16 %v41
  %v71 = vunpack.c.l.b16 %v42
  %v72 = vunpack.c.h.b16 %v42
  %v73 = vpack.c.b16 %v59, %v57
  %v74 = vpack.c.b16 %v60, %v58
  %v75 = vpack.c.b16 %v63, %v61
  %v76 = vpack.c.b16 %v64, %v62
  %v77 = vpack.c.b16 %v67, %v65
  %v78 = vpack.c.b16 %v68, %v66
  %v79 = vpack.c.b16 %v71, %v69
  %v80 = vpack.c.b16 %v72, %v70
  %v104 = vunpack.c.l.b16 %v15
  %v105 = vunpack.c.l.b16 %v16
  %v106 = vunpack.c.l.b16 %v17
  %v107 = vunpack.c.l.b16 %v18
  %v108 = vunpack.c.l.b16 %v19
  %v109 = vunpack.c.l.b16 %v20
  %v110 = vunpack.c.l.b16 %v21
  %v111 = vunpack.c.l.b16 %v22
  %v112 = vunpack.c.l.b16 %v23
  %v113 = vunpack.c.l.b16 %v24
  %v114 = vunpack.c.l.b16 %v25
  %v115 = vunpack.c.l.b16 %v26
  %v116 = vunpack.c.l.b16 %v27
  %v117 = vunpack.c.l.b16 %v28
  %v118 = vunpack.c.l.b16 %v29
  %v119 = vunpack.c.l.b16 %v30
  %v120 = vunpack.c.l.b16 %v31
  %v121 = vunpack.c.l.b16 %v32
  %v122 = vunpack.c.l.b16 %v33
  %v123 = vpack.c.b16 %v105, %v104
  %v124 = vpack.c.b16 %v107, %v106
  %v125 = vpack.c.b16 %v109, %v108
  %v126 = vpack.c.b16 %v111, %v110
  %v127 = vpack.c.b16 %v113, %v112
  %v128 = vpack.c.b16 %v115, %v114
  %v129 = vpack.c.b16 %v117, %v116
  %v130 = vpack.c.b16 %v119, %v118
  %v131 = vpack.c.b16 %v121, %v120
  %v132 = vpack.c.b16 %v122, %v122
  %vm142 = vcmask 179200
  %v144 = vsel %vm142, %v74, 0
  %v147 = vsel %vm142, %v76, 0
  %v150 = vsel %vm142, %v78, 0
  %v153 = vsel %vm142, %v80, 0
  %vm155 = vcmask 1042432
  %v157 = vsel %vm155, %v132, 0
  %159 = vmatprep.subr.bf16.mxu0 0
  %160 = vmatpush1.bf16.msra.mxu0 %v123
  %161 = vmatprep.subr.bf16.mxu0 0
  %162 = vmatpush1.bf16.msra.mxu0 %v124
  %163 = vmatprep.subr.bf16.mxu0 0
  %164 = vmatpush1.bf16.msra.mxu0 %v125
  %165 = vmatprep.subr.bf16.mxu0 0
  %166 = vmatpush1.bf16.msra.mxu0 %v126
  %167 = vmatprep.subr.bf16.mxu0 0
  %168 = vmatpush1.bf16.msra.mxu0 %v127
  %169 = vmatprep.subr.bf16.mxu0 0
  %170 = vmatpush1.bf16.msra.mxu0 %v128
  %171 = vmatprep.subr.bf16.mxu0 0
  %172 = vmatpush1.bf16.msra.mxu0 %v129
  %173 = vmatprep.subr.bf16.mxu0 0
  %174 = vmatpush1.bf16.msra.mxu0 %v130
  %175 = vmatprep.subr.bf16.mxu0 0
  %176 = vmatpush1.bf16.msra.mxu0 %v131
  %177 = vmatprep.subr.bf16.mxu0 0
  %178 = vmatpush1.bf16.msra.mxu0 %v157
  %179 = vmatprep.subr.bf16.mxu0 0
  %180 = vmatpush1.bf16.msra.mxu0 0
  %181 = vmatprep.subr.bf16.mxu0 0
  %182 = vmatpush1.bf16.msra.mxu0 0
  %183 = vmatprep.subr.bf16.mxu0 0
  %184 = vmatpush1.bf16.msra.mxu0 0
  %185 = vmatprep.subr.bf16.mxu0 0
  %186 = vmatpush1.bf16.msra.mxu0 0
  %187 = vmatprep.subr.bf16.mxu0 0
  %188 = vmatpush1.bf16.msra.mxu0 0
  %189 = vmatprep.subr.bf16.mxu0 0
  %190 = vmatpush1.bf16.msra.mxu0 0
  %191 = vmatprep.mubr.bf16.mxu0 %v144
  %192 = vmatmul.mubr.bf16.gmra.mrb[0].mxu0 %v73
  %v193 = vpop.f32.mrb[0].mxu0
  %v194 = vadd.f32 %v47, %v193
  %v195 = vpop.f32.mrb[0].mxu0
  %v196 = vpop.f32.mrb[0].mxu0
  %v197 = vadd.f32 %v47, %v196
  %v198 = vpop.f32.mrb[0].mxu0
  %199 = vmatprep.mubr.bf16.mxu0 %v147
  %200 = vmatmul.mubr.bf16.gmra.mrb[0].mxu0 %v75
  %v201 = vpop.f32.mrb[0].mxu0
  %v202 = vadd.f32 %v47, %v201
  %v203 = vpop.f32.mrb[0].mxu0
  %v204 = vpop.f32.mrb[0].mxu0
  %v205 = vadd.f32 %v47, %v204
  %v206 = vpop.f32.mrb[0].mxu0
  %207 = vmatprep.mubr.bf16.mxu0 %v150
  %208 = vmatmul.mubr.bf16.gmra.mrb[0].mxu0 %v77
  %v209 = vpop.f32.mrb[0].mxu0
  %v210 = vadd.f32 %v47, %v209
  %v211 = vpop.f32.mrb[0].mxu0
  %v212 = vpop.f32.mrb[0].mxu0
  %v213 = vadd.f32 %v47, %v212
  %v214 = vpop.f32.mrb[0].mxu0
  %215 = vmatprep.mubr.bf16.mxu0 %v153
  %216 = vmatmul.mubr.bf16.gmra.mrb[0].mxu0 %v79
  %v217 = vpop.f32.mrb[0].mxu0
  %v218 = vadd.f32 %v47, %v217
  %v219 = vpop.f32.mrb[0].mxu0
  %v220 = vpop.f32.mrb[0].mxu0
  %v221 = vadd.f32 %v47, %v220
  %v222 = vpop.f32.mrb[0].mxu0
  %223 = vdwg.mxu0
  %v224 = vmax.f32 %v194, 0.0
  %v225 = vmax.f32 %v197, 0.0
  %v226 = vmax.f32 %v202, 0.0
  %v227 = vmax.f32 %v205, 0.0
  %v228 = vmax.f32 %v210, 0.0
  %v229 = vmax.f32 %v213, 0.0
  %v230 = vmax.f32 %v218, 0.0
  %v231 = vmax.f32 %v221, 0.0
  %s232 = scalar_lea.vmem %s0, 64
  %v233 = vld [vmem:[%s232] sm:$0xff]
  %v234 = vld [vmem:[%s232 + $0x8] sm:$0xff]
  %v235 = vld [vmem:[%s232 + $0x10] sm:$0xff]
  %v236 = vld [vmem:[%s232 + $0x18] sm:$0xff]
  %v237 = vld [vmem:[%s232 + $0x20] sm:$0xff]
  %v238 = vld [vmem:[%s232 + $0x28] sm:$0xff]
  %v239 = vld [vmem:[%s232 + $0x30] sm:$0xff]
  %v240 = vld [vmem:[%s232 + $0x38] sm:$0xff]
  %v249 = vunpack.c.l.b16 %v233
  %v250 = vunpack.c.h.b16 %v233
  %v251 = vunpack.c.l.b16 %v234
  %v252 = vunpack.c.h.b16 %v234
  %v253 = vunpack.c.l.b16 %v235
  %v254 = vunpack.c.h.b16 %v235
  %v255 = vunpack.c.l.b16 %v236
  %v256 = vunpack.c.h.b16 %v236
  %v257 = vunpack.c.l.b16 %v237
  %v258 = vunpack.c.h.b16 %v237
  %v259 = vunpack.c.l.b16 %v238
  %v260 = vunpack.c.h.b16 %v238
  %v261 = vunpack.c.l.b16 %v239
  %v262 = vunpack.c.h.b16 %v239
  %v263 = vunpack.c.l.b16 %v240
  %v264 = vunpack.c.h.b16 %v240
  %v265 = vpack.c.b16 %v251, %v249
  %v266 = vpack.c.b16 %v252, %v250
  %v267 = vpack.c.b16 %v255, %v253
  %v268 = vpack.c.b16 %v256, %v254
  %v269 = vpack.c.b16 %v259, %v257
  %v270 = vpack.c.b16 %v260, %v258
  %v271 = vpack.c.b16 %v263, %v261
  %v272 = vpack.c.b16 %v264, %v262
  %v278 = vsel %vm142, %v266, 0
  %v281 = vsel %vm142, %v268, 0
  %v284 = vsel %vm142, %v270, 0
  %v287 = vsel %vm142, %v272, 0
  %289 = vmatprep.subr.bf16.mxu0 0
  %290 = vmatpush1.bf16.msra.mxu0 %v123
  %291 = vmatprep.subr.bf16.mxu0 0
  %292 = vmatpush1.bf16.msra.mxu0 %v124
  %293 = vmatprep.subr.bf16.mxu0 0
  %294 = vmatpush1.bf16.msra.mxu0 %v125
  %295 = vmatprep.subr.bf16.mxu0 0
  %296 = vmatpush1.bf16.msra.mxu0 %v126
  %297 = vmatprep.subr.bf16.mxu0 0
  %298 = vmatpush1.bf16.msra.mxu0 %v127
  %299 = vmatprep.subr.bf16.mxu0 0
  %300 = vmatpush1.bf16.msra.mxu0 %v128
  %301 = vmatprep.subr.bf16.mxu0 0
  %302 = vmatpush1.bf16.msra.mxu0 %v129
  %303 = vmatprep.subr.bf16.mxu0 0
  %304 = vmatpush1.bf16.msra.mxu0 %v130
  %305 = vmatprep.subr.bf16.mxu0 0
  %306 = vmatpush1.bf16.msra.mxu0 %v131
  %307 = vmatprep.subr.bf16.mxu0 0
  %308 = vmatpush1.bf16.msra.mxu0 %v157
  %309 = vmatprep.subr.bf16.mxu0 0
  %310 = vmatpush1.bf16.msra.mxu0 0
  %311 = vmatprep.subr.bf16.mxu0 0
  %312 = vmatpush1.bf16.msra.mxu0 0
  %313 = vmatprep.subr.bf16.mxu0 0
  %314 = vmatpush1.bf16.msra.mxu0 0
  %315 = vmatprep.subr.bf16.mxu0 0
  %316 = vmatpush1.bf16.msra.mxu0 0
  %317 = vmatprep.subr.bf16.mxu0 0
  %318 = vmatpush1.bf16.msra.mxu0 0
  %319 = vmatprep.subr.bf16.mxu0 0
  %320 = vmatpush1.bf16.msra.mxu0 0
  %321 = vmatprep.mubr.bf16.mxu0 %v278
  %322 = vmatmul.mubr.bf16.gmra.mrb[0].mxu0 %v265
  %v323 = vpop.f32.mrb[0].mxu0
  %v324 = vadd.f32 %v47, %v323
  %v325 = vpop.f32.mrb[0].mxu0
  %v326 = vpop.f32.mrb[0].mxu0
  %v327 = vadd.f32 %v47, %v326
  %v328 = vpop.f32.mrb[0].mxu0
  %329 = vmatprep.mubr.bf16.mxu0 %v281
  %330 = vmatmul.mubr.bf16.gmra.mrb[0].mxu0 %v267
  %v331 = vpop.f32.mrb[0].mxu0
  %v332 = vadd.f32 %v47, %v331
  %v333 = vpop.f32.mrb[0].mxu0
  %v334 = vpop.f32.mrb[0].mxu0
  %v335 = vadd.f32 %v47, %v334
  %v336 = vpop.f32.mrb[0].mxu0
  %337 = vmatprep.mubr.bf16.mxu0 %v284
  %338 = vmatmul.mubr.bf16.gmra.mrb[0].mxu0 %v269
  %v339 = vpop.f32.mrb[0].mxu0
  %v340 = vadd.f32 %v47, %v339
  %v341 = vpop.f32.mrb[0].mxu0
  %v342 = vpop.f32.mrb[0].mxu0
  %v343 = vadd.f32 %v47, %v342
  %v344 = vpop.f32.mrb[0].mxu0
  %345 = vmatprep.mubr.bf16.mxu0 %v287
  %346 = vmatmul.mubr.bf16.gmra.mrb[0].mxu0 %v271
  %v347 = vpop.f32.mrb[0].mxu0
  %v348 = vadd.f32 %v47, %v347
  %v349 = vpop.f32.mrb[0].mxu0
  %v350 = vpop.f32.mrb[0].mxu0
  %v351 = vadd.f32 %v47, %v350
  %v352 = vpop.f32.mrb[0].mxu0
  %353 = vdwg.mxu0
  %v354 = vmax.f32 %v324, 0.0
  %v355 = vmax.f32 %v327, 0.0
  %v356 = vmax.f32 %v332, 0.0
  %v357 = vmax.f32 %v335, 0.0
  %v358 = vmax.f32 %v340, 0.0
  %v359 = vmax.f32 %v343, 0.0
  %v360 = vmax.f32 %v348, 0.0
  %v361 = vmax.f32 %v351, 0.0
  %v362 = vmax.f32 %v224, %v354
  %v363 = vmax.f32 %v225, %v355
  %v364 = vmax.f32 %v226, %v356
  %v365 = vmax.f32 %v227, %v357
  %v366 = vmax.f32 %v228, %v358
  %v367 = vmax.f32 %v229, %v359
  %v368 = vmax.f32 %v230, %v360
  %v369 = vmax.f32 %v231, %v361
  %s370 = scalar_lea.vmem %s0, 128
  %v371 = vld [vmem:[%s370] sm:$0xff]
  %v372 = vld [vmem:[%s370 + $0x8] sm:$0xff]
  %v373 = vld [vmem:[%s370 + $0x10] sm:$0xff]
  %v374 = vld [vmem:[%s370 + $0x18] sm:$0xff]
  %v375 = vld [vmem:[%s370 + $0x20] sm:$0xff]
  %v376 = vld [vmem:[%s370 + $0x28] sm:$0xff]
  %v377 = vld [vmem:[%s370 + $0x30] sm:$0xff]
  %v378 = vld [vmem:[%s370 + $0x38] sm:$0xff]
  %v387 = vunpack.c.l.b16 %v371
  %v388 = vunpack.c.h.b16 %v371
  %v389 = vunpack.c.l.b16 %v372
  %v390 = vunpack.c.h.b16 %v372
  %v391 = vunpack.c.l.b16 %v373
  %v392 = vunpack.c.h.b16 %v373
  %v393 = vunpack.c.l.b16 %v374
  %v394 = vunpack.c.h.b16 %v374
  %v395 = vunpack.c.l.b16 %v375
  %v396 = vunpack.c.h.b16 %v375
  %v397 = vunpack.c.l.b16 %v376
  %v398 = vunpack.c.h.b16 %v376
  %v399 = vunpack.c.l.b16 %v377
  %v400 = vunpack.c.h.b16 %v377
  %v401 = vunpack.c.l.b16 %v378
  %v402 = vunpack.c.h.b16 %v378
  %v403 = vpack.c.b16 %v389, %v387
  %v404 = vpack.c.b16 %v390, %v388
  %v405 = vpack.c.b16 %v393, %v391
  %v406 = vpack.c.b16 %v394, %v392
  %v407 = vpack.c.b16 %v397, %v395
  %v408 = vpack.c.b16 %v398, %v396
  %v409 = vpack.c.b16 %v401, %v399
  %v410 = vpack.c.b16 %v402, %v400
  %v416 = vsel %vm142, %v404, 0
  %v419 = vsel %vm142, %v406, 0
  %v422 = vsel %vm142, %v408, 0
  %v425 = vsel %vm142, %v410, 0
  %427 = vmatprep.subr.bf16.mxu0 0
  %428 = vmatpush1.bf16.msra.mxu0 %v123
  %429 = vmatprep.subr.bf16.mxu0 0
  %430 = vmatpush1.bf16.msra.mxu0 %v124
  %431 = vmatprep.subr.bf16.mxu0 0
  %432 = vmatpush1.bf16.msra.mxu0 %v125
  %433 = vmatprep.subr.bf16.mxu0 0
  %434 = vmatpush1.bf16.msra.mxu0 %v126
  %435 = vmatprep.subr.bf16.mxu0 0
  %436 = vmatpush1.bf16.msra.mxu0 %v127
  %437 = vmatprep.subr.bf16.mxu0 0
  %438 = vmatpush1.bf16.msra.mxu0 %v128
  %439 = vmatprep.subr.bf16.mxu0 0
  %440 = vmatpush1.bf16.msra.mxu0 %v129
  %441 = vmatprep.subr.bf16.mxu0 0
  %442 = vmatpush1.bf16.msra.mxu0 %v130
  %443 = vmatprep.subr.bf16.mxu0 0
  %444 = vmatpush1.bf16.msra.mxu0 %v131
  %445 = vmatprep.subr.bf16.mxu0 0
  %446 = vmatpush1.bf16.msra.mxu0 %v157
  %447 = vmatprep.subr.bf16.mxu0 0
  %448 = vmatpush1.bf16.msra.mxu0 0
  %449 = vmatprep.subr.bf16.mxu0 0
  %450 = vmatpush1.bf16.msra.mxu0 0
  %451 = vmatprep.subr.bf16.mxu0 0
  %452 = vmatpush1.bf16.msra.mxu0 0
  %453 = vmatprep.subr.bf16.mxu0 0
  %454 = vmatpush1.bf16.msra.mxu0 0
  %455 = vmatprep.subr.bf16.mxu0 0
  %456 = vmatpush1.bf16.msra.mxu0 0
  %457 = vmatprep.subr.bf16.mxu0 0
  %458 = vmatpush1.bf16.msra.mxu0 0
  %459 = vmatprep.mubr.bf16.mxu0 %v416
  %460 = vmatmul.mubr.bf16.gmra.mrb[0].mxu0 %v403
  %v461 = vpop.f32.mrb[0].mxu0
  %v462 = vadd.f32 %v47, %v461
  %v463 = vpop.f32.mrb[0].mxu0
  %v464 = vpop.f32.mrb[0].mxu0
  %v465 = vadd.f32 %v47, %v464
  %v466 = vpop.f32.mrb[0].mxu0
  %467 = vmatprep.mubr.bf16.mxu0 %v419
  %468 = vmatmul.mubr.bf16.gmra.mrb[0].mxu0 %v405
  %v469 = vpop.f32.mrb[0].mxu0
  %v470 = vadd.f32 %v47, %v469
  %v471 = vpop.f32.mrb[0].mxu0
  %v472 = vpop.f32.mrb[0].mxu0
  %v473 = vadd.f32 %v47, %v472
  %v474 = vpop.f32.mrb[0].mxu0
  %475 = vmatprep.mubr.bf16.mxu0 %v422
  %476 = vmatmul.mubr.bf16.gmra.mrb[0].mxu0 %v407
  %v477 = vpop.f32.mrb[0].mxu0
  %v478 = vadd.f32 %v47, %v477
  %v479 = vpop.f32.mrb[0].mxu0
  %v480 = vpop.f32.mrb[0].mxu0
  %v481 = vadd.f32 %v47, %v480
  %v482 = vpop.f32.mrb[0].mxu0
  %483 = vmatprep.mubr.bf16.mxu0 %v425
  %484 = vmatmul.mubr.bf16.gmra.mrb[0].mxu0 %v409
  %v485 = vpop.f32.mrb[0].mxu0
  %v486 = vadd.f32 %v47, %v485
  %v487 = vpop.f32.mrb[0].mxu0
  %v488 = vpop.f32.mrb[0].mxu0
  %v489 = vadd.f32 %v47, %v488
  %v490 = vpop.f32.mrb[0].mxu0
  %491 = vdwg.mxu0
  %v492 = vmax.f32 %v462, 0.0
  %v493 = vmax.f32 %v465, 0.0
  %v494 = vmax.f32 %v470, 0.0
  %v495 = vmax.f32 %v473, 0.0
  %v496 = vmax.f32 %v478, 0.0
  %v497 = vmax.f32 %v481, 0.0
  %v498 = vmax.f32 %v486, 0.0
  %v499 = vmax.f32 %v489, 0.0
  %v500 = vmax.f32 %v362, %v492
  %v501 = vmax.f32 %v363, %v493
  %v502 = vmax.f32 %v364, %v494
  %v503 = vmax.f32 %v365, %v495
  %v504 = vmax.f32 %v366, %v496
  %v505 = vmax.f32 %v367, %v497
  %v506 = vmax.f32 %v368, %v498
  %v507 = vmax.f32 %v369, %v499
  %s508 = scalar_lea.vmem %s0, 192
  %v509 = vld [vmem:[%s508] sm:$0xff]
  %v510 = vld [vmem:[%s508 + $0x8] sm:$0xff]
  %v511 = vld [vmem:[%s508 + $0x10] sm:$0xff]
  %v512 = vld [vmem:[%s508 + $0x18] sm:$0xff]
  %v513 = vld [vmem:[%s508 + $0x20] sm:$0xff]
  %v514 = vld [vmem:[%s508 + $0x28] sm:$0xff]
  %v515 = vld [vmem:[%s508 + $0x30] sm:$0xff]
  %v516 = vld [vmem:[%s508 + $0x38] sm:$0xff]
  %v525 = vunpack.c.l.b16 %v509
  %v526 = vunpack.c.h.b16 %v509
  %v527 = vunpack.c.l.b16 %v510
  %v528 = vunpack.c.h.b16 %v510
  %v529 = vunpack.c.l.b16 %v511
  %v530 = vunpack.c.h.b16 %v511
  %v531 = vunpack.c.l.b16 %v512
  %v532 = vunpack.c.h.b16 %v512
  %v533 = vunpack.c.l.b16 %v513
  %v534 = vunpack.c.h.b16 %v513
  %v535 = vunpack.c.l.b16 %v514
  %v536 = vunpack.c.h.b16 %v514
  %v537 = vunpack.c.l.b16 %v515
  %v538 = vunpack.c.h.b16 %v515
  %v539 = vunpack.c.l.b16 %v516
  %v540 = vunpack.c.h.b16 %v516
  %v541 = vpack.c.b16 %v527, %v525
  %v542 = vpack.c.b16 %v528, %v526
  %v543 = vpack.c.b16 %v531, %v529
  %v544 = vpack.c.b16 %v532, %v530
  %v545 = vpack.c.b16 %v535, %v533
  %v546 = vpack.c.b16 %v536, %v534
  %v547 = vpack.c.b16 %v539, %v537
  %v548 = vpack.c.b16 %v540, %v538
  %v554 = vsel %vm142, %v542, 0
  %v557 = vsel %vm142, %v544, 0
  %v560 = vsel %vm142, %v546, 0
  %v563 = vsel %vm142, %v548, 0
  %565 = vmatprep.subr.bf16.mxu0 0
  %566 = vmatpush1.bf16.msra.mxu0 %v123
  %567 = vmatprep.subr.bf16.mxu0 0
  %568 = vmatpush1.bf16.msra.mxu0 %v124
  %569 = vmatprep.subr.bf16.mxu0 0
  %570 = vmatpush1.bf16.msra.mxu0 %v125
  %571 = vmatprep.subr.bf16.mxu0 0
  %572 = vmatpush1.bf16.msra.mxu0 %v126
  %573 = vmatprep.subr.bf16.mxu0 0
  %574 = vmatpush1.bf16.msra.mxu0 %v127
  %575 = vmatprep.subr.bf16.mxu0 0
  %576 = vmatpush1.bf16.msra.mxu0 %v128
  %577 = vmatprep.subr.bf16.mxu0 0
  %578 = vmatpush1.bf16.msra.mxu0 %v129
  %579 = vmatprep.subr.bf16.mxu0 0
  %580 = vmatpush1.bf16.msra.mxu0 %v130
  %581 = vmatprep.subr.bf16.mxu0 0
  %582 = vmatpush1.bf16.msra.mxu0 %v131
  %583 = vmatprep.subr.bf16.mxu0 0
  %584 = vmatpush1.bf16.msra.mxu0 %v157
  %585 = vmatprep.subr.bf16.mxu0 0
  %586 = vmatpush1.bf16.msra.mxu0 0
  %587 = vmatprep.subr.bf16.mxu0 0
  %588 = vmatpush1.bf16.msra.mxu0 0
  %589 = vmatprep.subr.bf16.mxu0 0
  %590 = vmatpush1.bf16.msra.mxu0 0
  %591 = vmatprep.subr.bf16.mxu0 0
  %592 = vmatpush1.bf16.msra.mxu0 0
  %593 = vmatprep.subr.bf16.mxu0 0
  %594 = vmatpush1.bf16.msra.mxu0 0
  %595 = vmatprep.subr.bf16.mxu0 0
  %596 = vmatpush1.bf16.msra.mxu0 0
  %597 = vmatprep.mubr.bf16.mxu0 %v554
  %598 = vmatmul.mubr.bf16.gmra.mrb[0].mxu0 %v541
  %v599 = vpop.f32.mrb[0].mxu0
  %v600 = vadd.f32 %v47, %v599
  %v601 = vpop.f32.mrb[0].mxu0
  %v602 = vpop.f32.mrb[0].mxu0
  %v603 = vadd.f32 %v47, %v602
  %v604 = vpop.f32.mrb[0].mxu0
  %605 = vmatprep.mubr.bf16.mxu0 %v557
  %606 = vmatmul.mubr.bf16.gmra.mrb[0].mxu0 %v543
  %v607 = vpop.f32.mrb[0].mxu0
  %v608 = vadd.f32 %v47, %v607
  %v609 = vpop.f32.mrb[0].mxu0
  %v610 = vpop.f32.mrb[0].mxu0
  %v611 = vadd.f32 %v47, %v610
  %v612 = vpop.f32.mrb[0].mxu0
  %613 = vmatprep.mubr.bf16.mxu0 %v560
  %614 = vmatmul.mubr.bf16.gmra.mrb[0].mxu0 %v545
  %v615 = vpop.f32.mrb[0].mxu0
  %v616 = vadd.f32 %v47, %v615
  %v617 = vpop.f32.mrb[0].mxu0
  %v618 = vpop.f32.mrb[0].mxu0
  %v619 = vadd.f32 %v47, %v618
  %v620 = vpop.f32.mrb[0].mxu0
  %621 = vmatprep.mubr.bf16.mxu0 %v563
  %622 = vmatmul.mubr.bf16.gmra.mrb[0].mxu0 %v547
  %v623 = vpop.f32.mrb[0].mxu0
  %v624 = vadd.f32 %v47, %v623
  %v625 = vpop.f32.mrb[0].mxu0
  %v626 = vpop.f32.mrb[0].mxu0
  %v627 = vadd.f32 %v47, %v626
  %v628 = vpop.f32.mrb[0].mxu0
  %629 = vdwg.mxu0
  %v630 = vmax.f32 %v600, 0.0
  %v631 = vmax.f32 %v603, 0.0
  %v632 = vmax.f32 %v608, 0.0
  %v633 = vmax.f32 %v611, 0.0
  %v634 = vmax.f32 %v616, 0.0
  %v635 = vmax.f32 %v619, 0.0
  %v636 = vmax.f32 %v624, 0.0
  %v637 = vmax.f32 %v627, 0.0
  %v638 = vmax.f32 %v500, %v630
  %v639 = vmax.f32 %v501, %v631
  %v640 = vmax.f32 %v502, %v632
  %v641 = vmax.f32 %v503, %v633
  %v642 = vmax.f32 %v504, %v634
  %v643 = vmax.f32 %v505, %v635
  %v644 = vmax.f32 %v506, %v636
  %v645 = vmax.f32 %v507, %v637
  %v646 = vpack.c.bf16 %v639, %v638
  %v647 = vpack.c.bf16 %v641, %v640
  %v648 = vpack.c.bf16 %v643, %v642
  %v649 = vpack.c.bf16 %v645, %v644
  %v654 = vunpack.c.l.b16 %v646
  %v655 = vunpack.c.h.b16 %v646
  %v656 = vunpack.c.l.b16 %v647
  %v657 = vunpack.c.h.b16 %v647
  %v658 = vunpack.c.l.b16 %v648
  %v659 = vunpack.c.h.b16 %v648
  %v660 = vunpack.c.l.b16 %v649
  %v661 = vunpack.c.h.b16 %v649
  %v662 = vpack.c.b16 %v654, %v654
  %v663 = vpack.c.b16 %v655, %v655
  %v664 = vpack.c.b16 %v656, %v656
  %v665 = vpack.c.b16 %v657, %v657
  %v666 = vpack.c.b16 %v658, %v658
  %v667 = vpack.c.b16 %v659, %v659
  %v668 = vpack.c.b16 %v660, %v660
  %v669 = vpack.c.b16 %v661, %v661
  %678 = vst [vmem:[%s3] sm:$0xf] %v662
  %679 = vst [vmem:[%s3 + $0x4] sm:$0xf] %v663
  %680 = vst [vmem:[%s3 + $0x8] sm:$0xf] %v664
  %681 = vst [vmem:[%s3 + $0xc] sm:$0xf] %v665
  %682 = vst [vmem:[%s3 + $0x10] sm:$0xf] %v666
  %683 = vst [vmem:[%s3 + $0x14] sm:$0xf] %v667
  %684 = vst [vmem:[%s3 + $0x18] sm:$0xf] %v668
  %685 = vst [vmem:[%s3 + $0x1c] sm:$0xf] %v669
  // Predicated region
  $region14: #{cnn_cifar_forward.4} parent=0 // pred_check
    _
  $region15: #{cnn_cifar_forward.4} parent=0 // pred_check_branch
    %687 = sbr.rel (0) target = $region17
  $region16: #{cnn_cifar_forward.4} parent=0 // pred_region
    _
  $region17: #{cnn_cifar_forward.4} parent=0 // pred_fallthru
    _
  // Predicated region
  $region18: #{cnn_cifar_forward.4} parent=0 // pred_check
    _
  $region19: #{cnn_cifar_forward.4} parent=0 // pred_check_branch
    %689 = sbr.rel (0) target = $region21
  $region20: #{cnn_cifar_forward.4} parent=0 // pred_region
    _
  $region21: #{cnn_cifar_forward.4} parent=0 // pred_fallthru
    _

// kernel: cnn_cifar_forward.5
$region0: #{cnn_cifar_forward.5}
  #allocation0 [shape = 'u32[]', space=smem, size = 0x4, offset = 0x4, fixed_abs, tag = 'smem constant byte address 0x4 - core index']
  #allocation1 [shape = 'u32[144,128]{1,0:T(1,128)}', space=vmem, size = 0x12000, scoped, tag = 'internal scratch']
  %s0 = inlined_call_operand.vmem [shape: bf16[16,400], index: 0, kind: input, shape index: {}]
  %s1 = inlined_call_operand.vmem [shape: bf16[400,128], index: 1, kind: input, shape index: {}]
  %s2 = inlined_call_operand.vmem [shape: f32[1,128], index: 2, kind: input, shape index: {}]
  %s3 = inlined_call_operand.vmem [shape: bf16[128,128], index: 3, kind: input, shape index: {}]
  %s4 = inlined_call_operand.vmem [shape: f32[1,128], index: 4, kind: input, shape index: {}]
  %s5 = inlined_call_operand.vmem [shape: bf16[128,128], index: 5, kind: input, shape index: {}]
  %s6 = inlined_call_operand.vmem [shape: f32[1,128], index: 6, kind: input, shape index: {}]
  %s7 = inlined_call_operand.vmem [shape: f32[16,128], index: 7, kind: output, shape index: {}]
  %s8 = sld [smem:[#allocation0]]
  $region38: #{cnn_cifar_forward.5} parent=0
    _
  %s10 = ssub.s32 1, %s8
  %s11 = scalar_select 0, %s10, %s8
  // Predicated region
  $region2: #{cnn_cifar_forward.5} parent=0 // pred_check
    _
  $region3: #{cnn_cifar_forward.5} parent=0 // pred_check_branch
    %13 = sbr.rel (0) target = $region5
  $region4: #{cnn_cifar_forward.5} parent=0 // pred_region
    _
  $region5: #{cnn_cifar_forward.5} parent=0 // pred_fallthru
    _
  // Predicated region
  $region6: #{cnn_cifar_forward.5} parent=0 // pred_check
    _
  $region7: #{cnn_cifar_forward.5} parent=0 // pred_check_branch
    %15 = sbr.rel (0) target = $region9
  $region8: #{cnn_cifar_forward.5} parent=0 // pred_region
    _
  $region9: #{cnn_cifar_forward.5} parent=0 // pred_fallthru
    _
  // Predicated region
  $region10: #{cnn_cifar_forward.5} parent=0 // pred_check
    _
  $region11: #{cnn_cifar_forward.5} parent=0 // pred_check_branch
    %17 = sbr.rel (0) target = $region13
  $region12: #{cnn_cifar_forward.5} parent=0 // pred_region
    _
  $region13: #{cnn_cifar_forward.5} parent=0 // pred_fallthru
    _
  // Predicated region
  $region14: #{cnn_cifar_forward.5} parent=0 // pred_check
    _
  $region15: #{cnn_cifar_forward.5} parent=0 // pred_check_branch
    %19 = sbr.rel (0) target = $region17
  $region16: #{cnn_cifar_forward.5} parent=0 // pred_region
    _
  $region17: #{cnn_cifar_forward.5} parent=0 // pred_fallthru
    _
  // Predicated region
  $region18: #{cnn_cifar_forward.5} parent=0 // pred_check
    _
  $region19: #{cnn_cifar_forward.5} parent=0 // pred_check_branch
    %21 = sbr.rel (0) target = $region21
  $region20: #{cnn_cifar_forward.5} parent=0 // pred_region
    _
  $region21: #{cnn_cifar_forward.5} parent=0 // pred_fallthru
    _
  // Predicated region
  $region22: #{cnn_cifar_forward.5} parent=0 // pred_check
    _
  $region23: #{cnn_cifar_forward.5} parent=0 // pred_check_branch
    %23 = sbr.rel (0) target = $region25
  $region24: #{cnn_cifar_forward.5} parent=0 // pred_region
    _
  $region25: #{cnn_cifar_forward.5} parent=0 // pred_fallthru
    _
  // Predicated region
  $region26: #{cnn_cifar_forward.5} parent=0 // pred_check
    _
  $region27: #{cnn_cifar_forward.5} parent=0 // pred_check_branch
    %25 = sbr.rel (0) target = $region29
  $region28: #{cnn_cifar_forward.5} parent=0 // pred_region
    _
  $region29: #{cnn_cifar_forward.5} parent=0 // pred_fallthru
    _
  %v27 = vld [vmem:[%s0] sm:$0xff]
  %v28 = vld [vmem:[%s0 + $0x8] sm:$0xff]
  %v29 = vld [vmem:[%s0 + $0x10] sm:$0xff]
  %v30 = vld [vmem:[%s0 + $0x18] sm:$0xff]
  %v31 = vld [vmem:[%s1] sm:$0xf]
  %v32 = vld [vmem:[%s1 + $0x4] sm:$0xf]
  %v33 = vld [vmem:[%s1 + $0x8] sm:$0xf]
  %v34 = vld [vmem:[%s1 + $0xc] sm:$0xf]
  %v35 = vld [vmem:[%s1 + $0x10] sm:$0xf]
  %v36 = vld [vmem:[%s1 + $0x14] sm:$0xf]
  %v37 = vld [vmem:[%s1 + $0x18] sm:$0xf]
  %v38 = vld [vmem:[%s1 + $0x1c] sm:$0xf]
  %v39 = vld [vmem:[%s1 + $0x20] sm:$0xf]
  %v40 = vld [vmem:[%s1 + $0x24] sm:$0xf]
  %v41 = vld [vmem:[%s1 + $0x28] sm:$0xf]
  %v42 = vld [vmem:[%s1 + $0x2c] sm:$0xf]
  %v43 = vld [vmem:[%s1 + $0x30] sm:$0xf]
  %v44 = vld [vmem:[%s1 + $0x34] sm:$0xf]
  %v45 = vld [vmem:[%s1 + $0x38] sm:$0xf]
  %v46 = vld [vmem:[%s1 + $0x3c] sm:$0xf]
  %v47 = vld [vmem:[%s1 + $0x40] sm:$0xf]
  %v48 = vld [vmem:[%s1 + $0x44] sm:$0xf]
  %v49 = vld [vmem:[%s1 + $0x48] sm:$0xf]
  %v50 = vld [vmem:[%s1 + $0x4c] sm:$0xf]
  %v51 = vld [vmem:[%s1 + $0x50] sm:$0xf]
  %v52 = vld [vmem:[%s1 + $0x54] sm:$0xf]
  %v53 = vld [vmem:[%s1 + $0x58] sm:$0xf]
  %v54 = vld [vmem:[%s1 + $0x5c] sm:$0xf]
  %v55 = vld [vmem:[%s1 + $0x60] sm:$0xf]
  %v56 = vld [vmem:[%s1 + $0x64] sm:$0xf]
  %v57 = vld [vmem:[%s1 + $0x68] sm:$0xf]
  %v58 = vld [vmem:[%s1 + $0x6c] sm:$0xf]
  %v59 = vld [vmem:[%s1 + $0x70] sm:$0xf]
  %v60 = vld [vmem:[%s1 + $0x74] sm:$0xf]
  %v61 = vld [vmem:[%s1 + $0x78] sm:$0xf]
  %v62 = vld [vmem:[%s1 + $0x7c] sm:$0xf]
  %v63 = vld [vmem:[%s1 + $0x80] sm:$0xf]
  %v64 = vld [vmem:[%s1 + $0x84] sm:$0xf]
  %v65 = vld [vmem:[%s1 + $0x88] sm:$0xf]
  %v66 = vld [vmem:[%s1 + $0x8c] sm:$0xf]
  %v67 = vld [vmem:[%s1 + $0x90] sm:$0xf]
  %v68 = vld [vmem:[%s1 + $0x94] sm:$0xf]
  %v69 = vld [vmem:[%s1 + $0x98] sm:$0xf]
  %v70 = vld [vmem:[%s1 + $0x9c] sm:$0xf]
  %v71 = vld [vmem:[%s1 + $0xa0] sm:$0xf]
  %v72 = vld [vmem:[%s1 + $0xa4] sm:$0xf]
  %v73 = vld [vmem:[%s1 + $0xa8] sm:$0xf]
  %v74 = vld [vmem:[%s1 + $0xac] sm:$0xf]
  %v75 = vld [vmem:[%s1 + $0xb0] sm:$0xf]
  %v76 = vld [vmem:[%s1 + $0xb4] sm:$0xf]
  %v77 = vld [vmem:[%s1 + $0xb8] sm:$0xf]
  %v78 = vld [vmem:[%s1 + $0xbc] sm:$0xf]
  %v79 = vld [vmem:[%s1 + $0xc0] sm:$0xf]
  %v80 = vld [vmem:[%s1 + $0xc4] sm:$0xf]
  %v81 = vld [vmem:[%s2] sm:$0x1]
  %v83 = vlaneseq
  %v84 = vshrl.u32 %v83, 7
  %v85 = vsub.s32 0, %v84
  %v86 = vrot.slane %v81, %v85
  %v92 = vunpack.c.l.b16 %v27
  %v93 = vunpack.c.h.b16 %v27
  %v94 = vunpack.c.l.b16 %v28
  %v95 = vunpack.c.h.b16 %v28
  %v96 = vunpack.c.l.b16 %v29
  %v97 = vunpack.c.h.b16 %v29
  %v98 = vunpack.c.l.b16 %v30
  %v99 = vunpack.c.h.b16 %v30
  %v100 = vpack.c.b16 %v96, %v92
  %v101 = vpack.c.b16 %v97, %v93
  %v102 = vpack.c.b16 %v98, %v94
  %v103 = vpack.c.b16 %v99, %v95
  %v157 = vunpack.c.l.b16 %v31
  %v158 = vunpack.c.l.b16 %v32
  %v159 = vunpack.c.l.b16 %v33
  %v160 = vunpack.c.l.b16 %v34
  %v161 = vunpack.c.l.b16 %v35
  %v162 = vunpack.c.l.b16 %v36
  %v163 = vunpack.c.l.b16 %v37
  %v164 = vunpack.c.l.b16 %v38
  %v165 = vunpack.c.l.b16 %v39
  %v166 = vunpack.c.l.b16 %v40
  %v167 = vunpack.c.l.b16 %v41
  %v168 = vunpack.c.l.b16 %v42
  %v169 = vunpack.c.l.b16 %v43
  %v170 = vunpack.c.l.b16 %v44
  %v171 = vunpack.c.l.b16 %v45
  %v172 = vunpack.c.l.b16 %v46
  %v173 = vunpack.c.l.b16 %v47
  %v174 = vunpack.c.l.b16 %v48
  %v175 = vunpack.c.l.b16 %v49
  %v176 = vunpack.c.l.b16 %v50
  %v177 = vunpack.c.l.b16 %v51
  %v178 = vunpack.c.l.b16 %v52
  %v179 = vunpack.c.l.b16 %v53
  %v180 = vunpack.c.l.b16 %v54
  %v181 = vunpack.c.l.b16 %v55
  %v182 = vunpack.c.l.b16 %v56
  %v183 = vunpack.c.l.b16 %v57
  %v184 = vunpack.c.l.b16 %v58
  %v185 = vunpack.c.l.b16 %v59
  %v186 = vunpack.c.l.b16 %v60
  %v187 = vunpack.c.l.b16 %v61
  %v188 = vunpack.c.l.b16 %v62
  %v189 = vunpack.c.l.b16 %v63
  %v190 = vunpack.c.l.b16 %v64
  %v191 = vunpack.c.l.b16 %v65
  %v192 = vunpack.c.l.b16 %v66
  %v193 = vunpack.c.l.b16 %v67
  %v194 = vunpack.c.l.b16 %v68
  %v195 = vunpack.c.l.b16 %v69
  %v196 = vunpack.c.l.b16 %v70
  %v197 = vunpack.c.l.b16 %v71
  %v198 = vunpack.c.l.b16 %v72
  %v199 = vunpack.c.l.b16 %v73
  %v200 = vunpack.c.l.b16 %v74
  %v201 = vunpack.c.l.b16 %v75
  %v202 = vunpack.c.l.b16 %v76
  %v203 = vunpack.c.l.b16 %v77
  %v204 = vunpack.c.l.b16 %v78
  %v205 = vunpack.c.l.b16 %v79
  %v206 = vunpack.c.l.b16 %v80
  %v207 = vpack.c.b16 %v158, %v157
  %v208 = vpack.c.b16 %v160, %v159
  %v209 = vpack.c.b16 %v162, %v161
  %v210 = vpack.c.b16 %v164, %v163
  %v211 = vpack.c.b16 %v166, %v165
  %v212 = vpack.c.b16 %v168, %v167
  %v213 = vpack.c.b16 %v170, %v169
  %v214 = vpack.c.b16 %v172, %v171
  %v215 = vpack.c.b16 %v174, %v173
  %v216 = vpack.c.b16 %v176, %v175
  %v217 = vpack.c.b16 %v178, %v177
  %v218 = vpack.c.b16 %v180, %v179
  %v219 = vpack.c.b16 %v182, %v181
  %v220 = vpack.c.b16 %v184, %v183
  %v221 = vpack.c.b16 %v186, %v185
  %v222 = vpack.c.b16 %v188, %v187
  %v223 = vpack.c.b16 %v190, %v189
  %v224 = vpack.c.b16 %v192, %v191
  %v225 = vpack.c.b16 %v194, %v193
  %v226 = vpack.c.b16 %v196, %v195
  %v227 = vpack.c.b16 %v198, %v197
  %v228 = vpack.c.b16 %v200, %v199
  %v229 = vpack.c.b16 %v202, %v201
  %v230 = vpack.c.b16 %v204, %v203
  %v231 = vpack.c.b16 %v206, %v205
  %vm257 = vcmask 130048
  %v259 = vsel %vm257, %v103, 0
  %261 = vmatprep.subr.bf16.mxu0 0
  %262 = vmatpush1.bf16.msra.mxu0 %v207
  %263 = vmatprep.subr.bf16.mxu0 0
  %264 = vmatpush1.bf16.msra.mxu0 %v208
  %265 = vmatprep.subr.bf16.mxu0 0
  %266 = vmatpush1.bf16.msra.mxu0 %v209
  %267 = vmatprep.subr.bf16.mxu0 0
  %268 = vmatpush1.bf16.msra.mxu0 %v210
  %269 = vmatprep.subr.bf16.mxu0 0
  %270 = vmatpush1.bf16.msra.mxu0 %v211
  %271 = vmatprep.subr.bf16.mxu0 0
  %272 = vmatpush1.bf16.msra.mxu0 %v212
  %273 = vmatprep.subr.bf16.mxu0 0
  %274 = vmatpush1.bf16.msra.mxu0 %v213
  %275 = vmatprep.subr.bf16.mxu0 0
  %276 = vmatpush1.bf16.msra.mxu0 %v214
  %277 = vmatprep.subr.bf16.mxu0 0
  %278 = vmatpush1.bf16.msra.mxu0 %v215
  %279 = vmatprep.subr.bf16.mxu0 0
  %280 = vmatpush1.bf16.msra.mxu0 %v216
  %281 = vmatprep.subr.bf16.mxu0 0
  %282 = vmatpush1.bf16.msra.mxu0 %v217
  %283 = vmatprep.subr.bf16.mxu0 0
  %284 = vmatpush1.bf16.msra.mxu0 %v218
  %285 = vmatprep.subr.bf16.mxu0 0
  %286 = vmatpush1.bf16.msra.mxu0 %v219
  %287 = vmatprep.subr.bf16.mxu0 0
  %288 = vmatpush1.bf16.msra.mxu0 %v220
  %289 = vmatprep.subr.bf16.mxu0 0
  %290 = vmatpush1.bf16.msra.mxu0 %v221
  %291 = vmatprep.subr.bf16.mxu0 0
  %292 = vmatpush1.bf16.msra.mxu0 %v222
  %293 = vmatprep.mubr.bf16.mxu0 %v101
  %294 = vmatmul.mubr.bf16.gmra.mrb[0].mxu0 %v100
  %v295 = vpop.f32.mrb[0].mxu0
  %v296 = vadd.f32 %v86, %v295
  %v297 = vpop.f32.mrb[0].mxu0
  %v298 = vpop.f32.mrb[0].mxu0
  %v299 = vadd.f32 %v86, %v298
  %v300 = vpop.f32.mrb[0].mxu0
  %301 = vdwg.mxu0
  %302 = vmatprep.subr.bf16.mxu0 0
  %303 = vmatpush1.bf16.msra.mxu0 %v223
  %304 = vmatprep.subr.bf16.mxu0 0
  %305 = vmatpush1.bf16.msra.mxu0 %v224
  %306 = vmatprep.subr.bf16.mxu0 0
  %307 = vmatpush1.bf16.msra.mxu0 %v225
  %308 = vmatprep.subr.bf16.mxu0 0
  %309 = vmatpush1.bf16.msra.mxu0 %v226
  %310 = vmatprep.subr.bf16.mxu0 0
  %311 = vmatpush1.bf16.msra.mxu0 %v227
  %312 = vmatprep.subr.bf16.mxu0 0
  %313 = vmatpush1.bf16.msra.mxu0 %v228
  %314 = vmatprep.subr.bf16.mxu0 0
  %315 = vmatpush1.bf16.msra.mxu0 %v229
  %316 = vmatprep.subr.bf16.mxu0 0
  %317 = vmatpush1.bf16.msra.mxu0 %v230
  %318 = vmatprep.subr.bf16.mxu0 0
  %319 = vmatpush1.bf16.msra.mxu0 %v231
  %320 = vmatprep.subr.bf16.mxu0 0
  %321 = vmatpush1.bf16.msra.mxu0 0
  %322 = vmatprep.subr.bf16.mxu0 0
  %323 = vmatpush1.bf16.msra.mxu0 0
  %324 = vmatprep.subr.bf16.mxu0 0
  %325 = vmatpush1.bf16.msra.mxu0 0
  %326 = vmatprep.subr.bf16.mxu0 0
  %327 = vmatpush1.bf16.msra.mxu0 0
  %328 = vmatprep.subr.bf16.mxu0 0
  %329 = vmatpush1.bf16.msra.mxu0 0
  %330 = vmatprep.subr.bf16.mxu0 0
  %331 = vmatpush1.bf16.msra.mxu0 0
  %332 = vmatprep.subr.bf16.mxu0 0
  %333 = vmatpush1.bf16.msra.mxu0 0
  %334 = vmatprep.mubr.bf16.mxu0 %v259
  %335 = vmatmul.mubr.bf16.gmra.mrb[0].mxu0 %v102
  %v336 = vpop.f32.mrb[0].mxu0
  %v337 = vadd.f32 %v296, %v336
  %v338 = vpop.f32.mrb[0].mxu0
  %v339 = vpop.f32.mrb[0].mxu0
  %v340 = vadd.f32 %v299, %v339
  %v341 = vpop.f32.mrb[0].mxu0
  %342 = vdwg.mxu0
  %v343 = vmax.f32 %v337, 0.0
  %v344 = vmax.f32 %v340, 0.0
  %v345 = vpack.c.bf16 %v344, %v343
  %v346 = vld [vmem:[%s3] sm:$0xf]
  %v347 = vld [vmem:[%s3 + $0x4] sm:$0xf]
  %v348 = vld [vmem:[%s3 + $0x8] sm:$0xf]
  %v349 = vld [vmem:[%s3 + $0xc] sm:$0xf]
  %v350 = vld [vmem:[%s3 + $0x10] sm:$0xf]
  %v351 = vld [vmem:[%s3 + $0x14] sm:$0xf]
  %v352 = vld [vmem:[%s3 + $0x18] sm:$0xf]
  %v353 = vld [vmem:[%s3 + $0x1c] sm:$0xf]
  %v354 = vld [vmem:[%s3 + $0x20] sm:$0xf]
  %v355 = vld [vmem:[%s3 + $0x24] sm:$0xf]
  %v356 = vld [vmem:[%s3 + $0x28] sm:$0xf]
  %v357 = vld [vmem:[%s3 + $0x2c] sm:$0xf]
  %v358 = vld [vmem:[%s3 + $0x30] sm:$0xf]
  %v359 = vld [vmem:[%s3 + $0x34] sm:$0xf]
  %v360 = vld [vmem:[%s3 + $0x38] sm:$0xf]
  %v361 = vld [vmem:[%s3 + $0x3c] sm:$0xf]
  %v362 = vld [vmem:[%s4] sm:$0x1]
  %v364 = vlaneseq
  %v365 = vshrl.u32 %v364, 7
  %v366 = vsub.s32 0, %v365
  %v367 = vrot.slane %v362, %v366
  %v385 = vunpack.c.l.b16 %v346
  %v386 = vunpack.c.l.b16 %v347
  %v387 = vunpack.c.l.b16 %v348
  %v388 = vunpack.c.l.b16 %v349
  %v389 = vunpack.c.l.b16 %v350
  %v390 = vunpack.c.l.b16 %v351
  %v391 = vunpack.c.l.b16 %v352
  %v392 = vunpack.c.l.b16 %v353
  %v393 = vunpack.c.l.b16 %v354
  %v394 = vunpack.c.l.b16 %v355
  %v395 = vunpack.c.l.b16 %v356
  %v396 = vunpack.c.l.b16 %v357
  %v397 = vunpack.c.l.b16 %v358
  %v398 = vunpack.c.l.b16 %v359
  %v399 = vunpack.c.l.b16 %v360
  %v400 = vunpack.c.l.b16 %v361
  %v401 = vpack.c.b16 %v386, %v385
  %v402 = vpack.c.b16 %v388, %v387
  %v403 = vpack.c.b16 %v390, %v389
  %v404 = vpack.c.b16 %v392, %v391
  %v405 = vpack.c.b16 %v394, %v393
  %v406 = vpack.c.b16 %v396, %v395
  %v407 = vpack.c.b16 %v398, %v397
  %v408 = vpack.c.b16 %v400, %v399
  %417 = vmatprep.subr.bf16.mxu0 0
  %418 = vmatpush1.bf16.msra.mxu0 %v401
  %419 = vmatprep.subr.bf16.mxu0 0
  %420 = vmatpush1.bf16.msra.mxu0 %v402
  %421 = vmatprep.subr.bf16.mxu0 0
  %422 = vmatpush1.bf16.msra.mxu0 %v403
  %423 = vmatprep.subr.bf16.mxu0 0
  %424 = vmatpush1.bf16.msra.mxu0 %v404
  %425 = vmatprep.subr.bf16.mxu0 0
  %426 = vmatpush1.bf16.msra.mxu0 %v405
  %427 = vmatprep.subr.bf16.mxu0 0
  %428 = vmatpush1.bf16.msra.mxu0 %v406
  %429 = vmatprep.subr.bf16.mxu0 0
  %430 = vmatpush1.bf16.msra.mxu0 %v407
  %431 = vmatprep.subr.bf16.mxu0 0
  %432 = vmatpush1.bf16.msra.mxu0 %v408
  %433 = vmatprep.subr.bf16.mxu0 0
  %434 = vmatpush1.bf16.msra.mxu0 0
  %435 = vmatprep.subr.bf16.mxu0 0
  %436 = vmatpush1.bf16.msra.mxu0 0
  %437 = vmatprep.subr.bf16.mxu0 0
  %438 = vmatpush1.bf16.msra.mxu0 0
  %439 = vmatprep.subr.bf16.mxu0 0
  %440 = vmatpush1.bf16.msra.mxu0 0
  %441 = vmatprep.subr.bf16.mxu0 0
  %442 = vmatpush1.bf16.msra.mxu0 0
  %443 = vmatprep.subr.bf16.mxu0 0
  %444 = vmatpush1.bf16.msra.mxu0 0
  %445 = vmatprep.subr.bf16.mxu0 0
  %446 = vmatpush1.bf16.msra.mxu0 0
  %447 = vmatprep.subr.bf16.mxu0 0
  %448 = vmatpush1.bf16.msra.mxu0 0
  %449 = vmatprep.mubr.bf16.mxu0 0
  %450 = vmatmul.mubr.bf16.gmra.mrb[0].mxu0 %v345
  %v451 = vpop.f32.mrb[0].mxu0
  %v452 = vadd.f32 %v367, %v451
  %v453 = vpop.f32.mrb[0].mxu0
  %v454 = vpop.f32.mrb[0].mxu0
  %v455 = vadd.f32 %v367, %v454
  %v456 = vpop.f32.mrb[0].mxu0
  %457 = vdwg.mxu0
  %v458 = vmax.f32 %v452, 0.0
  %v459 = vmax.f32 %v455, 0.0
  %v460 = vpack.c.bf16 %v459, %v458
  %v461 = vld [vmem:[%s5] sm:$0xf]
  %v462 = vld [vmem:[%s5 + $0x4] sm:$0xf]
  %v463 = vld [vmem:[%s5 + $0x8] sm:$0xf]
  %v464 = vld [vmem:[%s5 + $0xc] sm:$0xf]
  %v465 = vld [vmem:[%s5 + $0x10] sm:$0xf]
  %v466 = vld [vmem:[%s5 + $0x14] sm:$0xf]
  %v467 = vld [vmem:[%s5 + $0x18] sm:$0xf]
  %v468 = vld [vmem:[%s5 + $0x1c] sm:$0xf]
  %v469 = vld [vmem:[%s5 + $0x20] sm:$0xf]
  %v470 = vld [vmem:[%s5 + $0x24] sm:$0xf]
  %v471 = vld [vmem:[%s5 + $0x28] sm:$0xf]
  %v472 = vld [vmem:[%s5 + $0x2c] sm:$0xf]
  %v473 = vld [vmem:[%s5 + $0x30] sm:$0xf]
  %v474 = vld [vmem:[%s5 + $0x34] sm:$0xf]
  %v475 = vld [vmem:[%s5 + $0x38] sm:$0xf]
  %v476 = vld [vmem:[%s5 + $0x3c] sm:$0xf]
  %v477 = vld [vmem:[%s6] sm:$0x1]
  %v479 = vlaneseq
  %v480 = vshrl.u32 %v479, 7
  %v481 = vsub.s32 0, %v480
  %v482 = vrot.slane %v477, %v481
  %v500 = vunpack.c.l.b16 %v461
  %v501 = vunpack.c.l.b16 %v462
  %v502 = vunpack.c.l.b16 %v463
  %v503 = vunpack.c.l.b16 %v464
  %v504 = vunpack.c.l.b16 %v465
  %v505 = vunpack.c.l.b16 %v466
  %v506 = vunpack.c.l.b16 %v467
  %v507 = vunpack.c.l.b16 %v468
  %v508 = vunpack.c.l.b16 %v469
  %v509 = vunpack.c.l.b16 %v470
  %v510 = vunpack.c.l.b16 %v471
  %v511 = vunpack.c.l.b16 %v472
  %v512 = vunpack.c.l.b16 %v473
  %v513 = vunpack.c.l.b16 %v474
  %v514 = vunpack.c.l.b16 %v475
  %v515 = vunpack.c.l.b16 %v476
  %v516 = vpack.c.b16 %v501, %v500
  %v517 = vpack.c.b16 %v503, %v502
  %v518 = vpack.c.b16 %v505, %v504
  %v519 = vpack.c.b16 %v507, %v506
  %v520 = vpack.c.b16 %v509, %v508
  %v521 = vpack.c.b16 %v511, %v510
  %v522 = vpack.c.b16 %v513, %v512
  %v523 = vpack.c.b16 %v515, %v514
  %532 = vmatprep.subr.bf16.mxu0 0
  %533 = vmatpush1.bf16.msra.mxu0 %v516
  %534 = vmatprep.subr.bf16.mxu0 0
  %535 = vmatpush1.bf16.msra.mxu0 %v517
  %536 = vmatprep.subr.bf16.mxu0 0
  %537 = vmatpush1.bf16.msra.mxu0 %v518
  %538 = vmatprep.subr.bf16.mxu0 0
  %539 = vmatpush1.bf16.msra.mxu0 %v519
  %540 = vmatprep.subr.bf16.mxu0 0
  %541 = vmatpush1.bf16.msra.mxu0 %v520
  %542 = vmatprep.subr.bf16.mxu0 0
  %543 = vmatpush1.bf16.msra.mxu0 %v521
  %544 = vmatprep.subr.bf16.mxu0 0
  %545 = vmatpush1.bf16.msra.mxu0 %v522
  %546 = vmatprep.subr.bf16.mxu0 0
  %547 = vmatpush1.bf16.msra.mxu0 %v523
  %548 = vmatprep.subr.bf16.mxu0 0
  %549 = vmatpush1.bf16.msra.mxu0 0
  %550 = vmatprep.subr.bf16.mxu0 0
  %551 = vmatpush1.bf16.msra.mxu0 0
  %552 = vmatprep.subr.bf16.mxu0 0
  %553 = vmatpush1.bf16.msra.mxu0 0
  %554 = vmatprep.subr.bf16.mxu0 0
  %555 = vmatpush1.bf16.msra.mxu0 0
  %556 = vmatprep.subr.bf16.mxu0 0
  %557 = vmatpush1.bf16.msra.mxu0 0
  %558 = vmatprep.subr.bf16.mxu0 0
  %559 = vmatpush1.bf16.msra.mxu0 0
  %560 = vmatprep.subr.bf16.mxu0 0
  %561 = vmatpush1.bf16.msra.mxu0 0
  %562 = vmatprep.subr.bf16.mxu0 0
  %563 = vmatpush1.bf16.msra.mxu0 0
  %564 = vmatprep.mubr.bf16.mxu0 0
  %565 = vmatmul.mubr.bf16.gmra.mrb[0].mxu0 %v460
  %v566 = vpop.f32.mrb[0].mxu0
  %v567 = vadd.f32 %v482, %v566
  %v568 = vpop.f32.mrb[0].mxu0
  %v569 = vpop.f32.mrb[0].mxu0
  %v570 = vadd.f32 %v482, %v569
  %v571 = vpop.f32.mrb[0].mxu0
  %572 = vdwg.mxu0
  %573 = vst [vmem:[%s7] sm:$0xff] %v567
  %574 = vst [vmem:[%s7 + $0x8] sm:$0xff] %v570
  // Predicated region
  $region30: #{cnn_cifar_forward.5} parent=0 // pred_check
    _
  $region31: #{cnn_cifar_forward.5} parent=0 // pred_check_branch
    %576 = sbr.rel (0) target = $region33
  $region32: #{cnn_cifar_forward.5} parent=0 // pred_region
    _
  $region33: #{cnn_cifar_forward.5} parent=0 // pred_fallthru
    _
  // Predicated region
  $region34: #{cnn_cifar_forward.5} parent=0 // pred_check
    _
  $region35: #{cnn_cifar_forward.5} parent=0 // pred_check_branch
    %578 = sbr.rel (0) target = $region37
  $region36: #{cnn_cifar_forward.5} parent=0 // pred_region
    _
  $region37: #{cnn_cifar_forward.5} parent=0 // pred_fallthru
    _

</llo_original>
